<compile_context>
chip_gen: v7x
topology: tpu7x:2x2x1
jax: 0.10.0
libtpu: 0.0.40
codegen_flags: <defaults>
</compile_context>

<pallas_src>
import functools
import math

import jax
import jax.numpy as jnp
from jax import lax
from jax.experimental import pallas as pl
from jax.experimental.pallas import tpu as pltpu


def _round_up(x, m):
    return (x + m - 1) // m * m


# ----------------------------------------------------------------------------
# Generation-aware hardware constants (queried once, host-side).
# ----------------------------------------------------------------------------
def _query_hw():
    vmem_bytes = 128 * 1024 * 1024
    num_tc = 1
    try:
        info = pltpu.get_tpu_info()
        vmem_bytes = int(getattr(info, "vmem_capacity_bytes", vmem_bytes))
    except Exception:
        pass
    try:
        kind = jax.devices()[0].device_kind.lower()
        if "v7" in kind:
            num_tc = 2          # v7x: 2 TensorCores per chip
    except Exception:
        pass
    return vmem_bytes, num_tc


_VMEM_BYTES, _NUM_TENSORCORES = _query_hw()
# ~3/4 of physical VMEM: ~96 MiB on v5e/v6e (128 MiB), ~48 MiB on v7x (64 MiB),
# leaving headroom for Mosaic internal scratch.
_VMEM_LIMIT = int(_VMEM_BYTES * 3 // 4)

_COMPILER_PARAMS = pltpu.CompilerParams(
    dimension_semantics=("parallel", "arbitrary"),   # time MUST stay sequential
    vmem_limit_bytes=_VMEM_LIMIT,
)


# ----------------------------------------------------------------------------
# Tiling planners.
# ----------------------------------------------------------------------------
def _batch_block(B):
    # Split the batch across the two v7x TensorCores only when it pays off:
    # 2 TCs present, B >= 32, and both halves stay bf16-sublane tileable.
    # On single-TC v5e/v6e a split would run the whole sequential recurrence
    # twice on one core, so keep the batch in a single block there.
    if _NUM_TENSORCORES >= 2 and B >= 32 and B % 32 == 0:
        return B // 2
    return B


def _plan_time_block(T, Bb, in_dim, Hp, with_seq_out):
    """Pick the time-block length Tt from a VMEM budget (not T's divisors)."""
    bf16 = 2
    # Grid-invariant single-buffered weights + f32 bias + f32 carries.
    fixed = (in_dim * 4 * Hp + Hp * 4 * Hp) * bf16 + 4 * Hp * 4 + 2 * Bb * Hp * 4
    # Per-timestep streaming blocks (double-buffered by the pipeline).
    per_t = Bb * in_dim * bf16 * 2
    if with_seq_out:
        per_t += Bb * Hp * bf16 * 2
    budget = _VMEM_LIMIT // 2 - fixed        # keep ~half the limit as headroom
    tt = budget // max(per_t, 1)
    tt = max(8, min(int(tt), 512))           # amortize ~0.35us/grid-step overhead
    return max(1, min(tt, T))


# ----------------------------------------------------------------------------
# LSTM cell math.  Gates are packed [i, f, o, g] (128-lane-aligned spans) so
# one sigmoid covers a contiguous (Bb, 3*Hp) slab and one tanh covers (Bb, Hp).
# ----------------------------------------------------------------------------
def _lstm_gates_to_hc(gates, c):
    """gates: f32 (Bb, 4*Hp) pre-activations; c: f32 (Bb, Hp)."""
    hp = c.shape[-1]
    s = jax.nn.sigmoid(gates[:, : 3 * hp])       # i, f, o in one wide EUP slab
    g = jnp.tanh(gates[:, 3 * hp:])
    i_g = s[:, :hp]
    f_g = s[:, hp: 2 * hp]
    o_g = s[:, 2 * hp: 3 * hp]
    c_new = f_g * c + i_g * g
    h_new = o_g * jnp.tanh(c_new)
    return h_new, c_new


# ----------------------------------------------------------------------------
# Kernel A: one LSTM layer, outputs the full hidden sequence (bf16).
# Grid = (batch_blocks, time_blocks); h/c carries live in VMEM scratch.
# ----------------------------------------------------------------------------
def _lstm_seq_kernel(x_ref, wih_ref, b_ref, whh_ref, out_ref, h_sc, c_sc,
                     *, t_total, tt, needs_mask, unroll):
    tb = pl.program_id(1)

    @pl.when(tb == 0)
    def _():
        h_sc[...] = jnp.zeros_like(h_sc)
        c_sc[...] = jnp.zeros_like(c_sc)

    wih = wih_ref[...]                     # (In, 4*Hp) bf16, grid-invariant
    whh = whh_ref[...]                     # (Hp, 4*Hp) bf16, grid-invariant
    bias = jnp.broadcast_to(b_ref[...], (h_sc.shape[0], whh.shape[1]))  # hoisted

    # TODO(synk): hold whh stationary in the MXU across the time block with
    # pltpu.matmul_push_rhs / matmul_acc_lhs / matmul_pop to avoid re-loading
    # the weight every timestep (latency win at tiny batch).
    def step(i, carry):
        h, c = carry
        # Fused input projection (f32 accumulation, no HBM xp tensor).  The
        # x@wih matmul is independent of the recurrence, so under partial
        # unroll the scheduler can overlap it with the serial h@whh chain.
        gates = (jnp.dot(x_ref[i], wih, preferred_element_type=jnp.float32)
                 + bias
                 + jnp.dot(h.astype(jnp.bfloat16), whh,
                           preferred_element_type=jnp.float32))
        h_new, c_new = _lstm_gates_to_hc(gates, c)
        out_ref[i] = h_new.astype(out_ref.dtype)
        if needs_mask:                     # only emitted when T % Tt != 0
            valid = tb * tt + i < t_total
            h_new = jnp.where(valid, h_new, h)
            c_new = jnp.where(valid, c_new, c)
        return (h_new, c_new)

    h, c = lax.fori_loop(0, tt, step, (h_sc[...], c_sc[...]), unroll=unroll)
    h_sc[...] = h
    c_sc[...] = c


# ----------------------------------------------------------------------------
# Kernel B: last LSTM layer with the final Linear fused in.  Only the
# (B, Op) fc output is written (no HBM round-trip of the hidden sequence).
# ----------------------------------------------------------------------------
def _lstm_seq_fc_kernel(x_ref, wih_ref, b_ref, whh_ref, fcw_ref, fcb_ref,
                        fc_out_ref, h_sc, c_sc,
                        *, t_total, tt, needs_mask, unroll):
    tb = pl.program_id(1)

    @pl.when(tb == 0)
    def _():
        h_sc[...] = jnp.zeros_like(h_sc)
        c_sc[...] = jnp.zeros_like(c_sc)

    wih = wih_ref[...]
    whh = whh_ref[...]
    bias = jnp.broadcast_to(b_ref[...], (h_sc.shape[0], whh.shape[1]))

    def step(i, carry):
        h, c = carry
        gates = (jnp.dot(x_ref[i], wih, preferred_element_type=jnp.float32)
                 + bias
                 + jnp.dot(h.astype(jnp.bfloat16), whh,
                           preferred_element_type=jnp.float32))
        h_new, c_new = _lstm_gates_to_hc(gates, c)
        if needs_mask:
            valid = tb * tt + i < t_total
            h_new = jnp.where(valid, h_new, h)
            c_new = jnp.where(valid, c_new, c)
        return (h_new, c_new)

    h, c = lax.fori_loop(0, tt, step, (h_sc[...], c_sc[...]), unroll=unroll)
    h_sc[...] = h
    c_sc[...] = c

    @pl.when(tb == pl.num_programs(1) - 1)
    def _():
        # Fused final Linear on the last valid timestep's hidden state.
        # Output width is padded to a 128-lane multiple -> dense (unmasked)
        # store; the wrapper slices back to the true output size.
        fc_out_ref[...] = (jnp.dot(h.astype(jnp.bfloat16), fcw_ref[...],
                                   preferred_element_type=jnp.float32)
                           + fcb_ref[...])


# ----------------------------------------------------------------------------
# pallas_call wrappers
# ----------------------------------------------------------------------------
def _resident_spec(shape):
    # Grid-invariant weights: constant index_map + single buffering (no point
    # double-buffering data that never changes across grid steps).
    return pl.BlockSpec(shape, lambda b, t: (0, 0),
                        pipeline_mode=pl.Buffered(1))


def lstm_layer_hidden(x, wih_t, bias, whh_t):
    """x: (T, B, In) bf16.  Returns the hidden sequence (T, B, Hp) bf16."""
    T, B, In = x.shape
    Hp, G = whh_t.shape
    Bb = _batch_block(B)
    Tt = _plan_time_block(T, Bb, In, Hp, with_seq_out=True)
    kern = functools.partial(_lstm_seq_kernel, t_total=T, tt=Tt,
                             needs_mask=(T % Tt != 0), unroll=min(8, Tt))
    return pl.pallas_call(
        kern,
        out_shape=jax.ShapeDtypeStruct((T, B, Hp), jnp.bfloat16),
        grid_spec=pltpu.PrefetchScalarGridSpec(
            num_scalar_prefetch=0,
            grid=(B // Bb, pl.cdiv(T, Tt)),
            in_specs=[
                pl.BlockSpec((Tt, Bb, In), lambda b, t: (t, b, 0)),
                _resident_spec((In, G)),
                _resident_spec((1, G)),
                _resident_spec((Hp, G)),
            ],
            out_specs=pl.BlockSpec((Tt, Bb, Hp), lambda b, t: (t, b, 0)),
            scratch_shapes=[
                pltpu.VMEM((Bb, Hp), jnp.float32),   # h carry (f32)
                pltpu.VMEM((Bb, Hp), jnp.float32),   # c carry (f32)
            ],
        ),
        compiler_params=_COMPILER_PARAMS,
    )(x, wih_t, bias, whh_t)


def lstm_layer_fc(x, wih_t, bias, whh_t, fc_w_t, fc_b):
    """Last layer: recurrence + fused Linear on the final hidden state."""
    T, B, In = x.shape
    Hp, G = whh_t.shape
    Op = fc_w_t.shape[1]
    Bb = _batch_block(B)
    Tt = _plan_time_block(T, Bb, In, Hp, with_seq_out=False)
    kern = functools.partial(_lstm_seq_fc_kernel, t_total=T, tt=Tt,
                             needs_mask=(T % Tt != 0), unroll=min(8, Tt))
    return pl.pallas_call(
        kern,
        out_shape=jax.ShapeDtypeStruct((B, Op), jnp.float32),
        grid_spec=pltpu.PrefetchScalarGridSpec(
            num_scalar_prefetch=0,
            grid=(B // Bb, pl.cdiv(T, Tt)),
            in_specs=[
                pl.BlockSpec((Tt, Bb, In), lambda b, t: (t, b, 0)),
                _resident_spec((In, G)),
                _resident_spec((1, G)),
                _resident_spec((Hp, G)),
                _resident_spec((Hp, Op)),
                _resident_spec((1, Op)),
            ],
            out_specs=pl.BlockSpec((Bb, Op), lambda b, t: (b, 0)),
            scratch_shapes=[
                pltpu.VMEM((Bb, Hp), jnp.float32),
                pltpu.VMEM((Bb, Hp), jnp.float32),
            ],
        ),
        compiler_params=_COMPILER_PARAMS,
    )(x, wih_t, bias, whh_t, fc_w_t, fc_b)


# ----------------------------------------------------------------------------
# Parameter init (PyTorch-style uniform(-1/sqrt(H), 1/sqrt(H))).  Gates are
# repacked from torch order [i,f,g,o] to [i,f,o,g] and padded so each gate
# occupies a 128-lane-aligned span of Hp = round_up(H, 128) lanes.  Padded
# weight/bias entries are zero => padded h/c lanes stay exactly zero.
# ----------------------------------------------------------------------------
def _pack_gates(w_t, H, Hp):
    """(rows, 4*H) torch order -> (rows, 4*Hp) in [i,f,o,g] order, zero-padded."""
    rows = w_t.shape[0]
    w = w_t.reshape(rows, 4, H)
    w = w[:, jnp.array([0, 1, 3, 2]), :]             # i, f, o, g
    w = jnp.pad(w, ((0, 0), (0, 0), (0, Hp - H)))
    return w.reshape(rows, 4 * Hp)


def init_params(key, input_size, hidden_size, output_size, num_layers):
    H = hidden_size
    Hp = _round_up(H, 128)
    Op = _round_up(output_size, 128)
    stdv = 1.0 / math.sqrt(H)
    layers = []
    for layer in range(num_layers):
        in_dim = input_size if layer == 0 else H
        key, k1, k2, k3, k4 = jax.random.split(key, 5)
        w_ih = jax.random.uniform(k1, (4 * H, in_dim), jnp.float32, -stdv, stdv)
        w_hh = jax.random.uniform(k2, (4 * H, H), jnp.float32, -stdv, stdv)
        b_ih = jax.random.uniform(k3, (4 * H,), jnp.float32, -stdv, stdv)
        b_hh = jax.random.uniform(k4, (4 * H,), jnp.float32, -stdv, stdv)

        wih_t = _pack_gates(w_ih.T, H, Hp)                    # (in_dim, 4*Hp)
        if layer > 0:
            wih_t = jnp.pad(wih_t, ((0, Hp - H), (0, 0)))     # (Hp, 4*Hp)
        whh_t = jnp.pad(_pack_gates(w_hh.T, H, Hp), ((0, Hp - H), (0, 0)))
        bias = _pack_gates((b_ih + b_hh)[None, :], H, Hp)     # (1, 4*Hp) f32
        layers.append({
            "wih_t": wih_t.astype(jnp.bfloat16),
            "whh_t": whh_t.astype(jnp.bfloat16),
            "b": bias,                                        # f32
        })

    key, k1, k2 = jax.random.split(key, 3)
    w_fc = jax.random.uniform(k1, (output_size, H), jnp.float32, -stdv, stdv)
    b_fc = jax.random.uniform(k2, (output_size,), jnp.float32, -stdv, stdv)
    fc_w_t = jnp.pad(w_fc.T, ((0, Hp - H), (0, Op - output_size)))  # (Hp, Op)
    fc_b = jnp.pad(b_fc, (0, Op - output_size))[None, :]            # (1, Op) f32
    # NOTE: weights loaded through any other path must preserve this zero
    # padding, or padded h/c lanes will contaminate the next layer.
    return {
        "layers": layers,
        "fc_w_t": fc_w_t.astype(jnp.bfloat16),
        "fc_b": fc_b,
    }


# ----------------------------------------------------------------------------
# Full forward: matches RNNModel.forward(x) for 3-D batch_first input.
# ----------------------------------------------------------------------------
@functools.partial(jax.jit, static_argnames=("output_size",))
def rnn_model_forward(x_btf, params, output_size):
    # TODO(synk): only the 3-D batch_first branch of RNNModel.forward is
    # implemented (the 2-D unbatched branch is not handled here).
    seq = jnp.transpose(x_btf, (1, 0, 2)).astype(jnp.bfloat16)   # (T, B, In)
    layers = params["layers"]
    out = None
    for li, lp in enumerate(layers):
        if li < len(layers) - 1:
            seq = lstm_layer_hidden(seq, lp["wih_t"], lp["b"], lp["whh_t"])
        else:
            out = lstm_layer_fc(seq, lp["wih_t"], lp["b"], lp["whh_t"],
                                params["fc_w_t"], params["fc_b"])
    return out[:, :output_size]


if __name__ == "__main__":
    input_size = 16
    hidden_size = 32
    output_size = 8
    num_layers = 2
    batch = 2
    seq_len = 8

    key = jax.random.PRNGKey(0)
    key, xkey, pkey = jax.random.split(key, 3)
    x = jax.random.normal(xkey, (batch, seq_len, input_size), jnp.float32)
    params = init_params(pkey, input_size, hidden_size, output_size, num_layers)

    y = rnn_model_forward(x, params, output_size)
    jax.block_until_ready(y)
    assert y.shape == (batch, output_size)
    print("KERNEL_OK")
</pallas_src>

<mosaic_0001>
module attributes {stable_mosaic.version = 11 : i64} {
  func.func @_lstm_seq_fc_kernel(%arg0: i32, %arg1: i32, %arg2: memref<8x2x128xbf16, #tpu.memory_space<vmem>>, %arg3: memref<128x512xbf16, #tpu.memory_space<vmem>>, %arg4: memref<1x512xf32, #tpu.memory_space<vmem>>, %arg5: memref<128x512xbf16, #tpu.memory_space<vmem>>, %arg6: memref<128x128xbf16, #tpu.memory_space<vmem>>, %arg7: memref<1x128xf32, #tpu.memory_space<vmem>>, %arg8: memref<2x128xf32, #tpu.memory_space<vmem>>, %arg9: memref<2x128xf32, #tpu.memory_space<vmem>>, %arg10: memref<2x128xf32, #tpu.memory_space<vmem>>) attributes {dimension_semantics = [#tpu.dimension_semantics<parallel>, #tpu.dimension_semantics<arbitrary>], iteration_bounds = array<i64: 1, 1>, scalar_prefetch = 0 : i64, scratch_operands = 2 : i64, tpu.core_type = #tpu.core_type<tc>, window_params = [{transform_indices = @transform_0, window_bounds = array<i64: 8, 2, 128>}, {pipeline_mode = #tpu.pipeline_mode<synchronous>, transform_indices = @transform_1, window_bounds = array<i64: 128, 512>}, {pipeline_mode = #tpu.pipeline_mode<synchronous>, transform_indices = @transform_2, window_bounds = array<i64: 1, 512>}, {pipeline_mode = #tpu.pipeline_mode<synchronous>, transform_indices = @transform_3, window_bounds = array<i64: 128, 512>}, {pipeline_mode = #tpu.pipeline_mode<synchronous>, transform_indices = @transform_4, window_bounds = array<i64: 128, 128>}, {pipeline_mode = #tpu.pipeline_mode<synchronous>, transform_indices = @transform_5, window_bounds = array<i64: 1, 128>}, {transform_indices = @transform_6, window_bounds = array<i64: 2, 128>}]} {
    %c0_i32 = arith.constant 0 : i32
    %0 = arith.cmpi eq, %arg1, %c0_i32 : i32
    %1 = arith.extui %0 : i1 to i32
    %c0_i32_0 = arith.constant 0 : i32
    %2 = arith.cmpi ne, %1, %c0_i32_0 : i32
    scf.if %2 {
      %cst_56 = arith.constant 0.000000e+00 : f32
      %207 = vector.broadcast %cst_56 : f32 to vector<2x128xf32>
      %c0_57 = arith.constant 0 : index
      %c0_58 = arith.constant 0 : index
      %208 = vector.load %arg9[%c0_57, %c0_58] : memref<2x128xf32, #tpu.memory_space<vmem>>, vector<2x128xf32>
      tpu.vector_store %arg9[%c0_57, %c0_58], %207 {strides = array<i32>} : memref<2x128xf32, #tpu.memory_space<vmem>>, vector<2x128xf32>,
      %cst_59 = arith.constant 0.000000e+00 : f32
      %209 = vector.broadcast %cst_59 : f32 to vector<2x128xf32>
      %c0_60 = arith.constant 0 : index
      %c0_61 = arith.constant 0 : index
      %210 = vector.load %arg10[%c0_60, %c0_61] : memref<2x128xf32, #tpu.memory_space<vmem>>, vector<2x128xf32>
      tpu.vector_store %arg10[%c0_60, %c0_61], %209 {strides = array<i32>} : memref<2x128xf32, #tpu.memory_space<vmem>>, vector<2x128xf32>,
    } else {
    }
    %c0 = arith.constant 0 : index
    %c0_1 = arith.constant 0 : index
    %3 = vector.load %arg3[%c0, %c0_1] : memref<128x512xbf16, #tpu.memory_space<vmem>>, vector<128x512xbf16>
    %c0_2 = arith.constant 0 : index
    %c0_3 = arith.constant 0 : index
    %4 = vector.load %arg5[%c0_2, %c0_3] : memref<128x512xbf16, #tpu.memory_space<vmem>>, vector<128x512xbf16>
    %c0_4 = arith.constant 0 : index
    %c0_5 = arith.constant 0 : index
    %5 = vector.load %arg4[%c0_4, %c0_5] : memref<1x512xf32, #tpu.memory_space<vmem>>, vector<1x512xf32>
    %6 = vector.shape_cast %5 : vector<1x512xf32> to vector<1x512xf32>
    %7 = vector.broadcast %6 : vector<1x512xf32> to vector<2x512xf32>
    %c0_6 = arith.constant 0 : index
    %c0_7 = arith.constant 0 : index
    %8 = vector.load %arg9[%c0_6, %c0_7] : memref<2x128xf32, #tpu.memory_space<vmem>>, vector<2x128xf32>
    %c0_8 = arith.constant 0 : index
    %c0_9 = arith.constant 0 : index
    %9 = vector.load %arg10[%c0_8, %c0_9] : memref<2x128xf32, #tpu.memory_space<vmem>>, vector<2x128xf32>
    %c0_i32_10 = arith.constant 0 : i32
    %10 = arith.index_cast %c0_i32_10 : i32 to index
    %c0_11 = arith.constant 0 : index
    %c0_12 = arith.constant 0 : index
    %11 = vector.load %arg2[%10, %c0_11, %c0_12] : memref<8x2x128xbf16, #tpu.memory_space<vmem>>, vector<1x2x128xbf16>
    %12 = vector.shape_cast %11 : vector<1x2x128xbf16> to vector<2x128xbf16>
    %cst = arith.constant dense<0.000000e+00> : vector<2x512xf32>
    %13 = tpu.matmul %12, %3, %cst {dimension_numbers = #tpu.dot_dimension_numbers<[1], [0], [0], [1], [0, 0, 1, 1], [], []>} : vector<2x128xbf16>, vector<128x512xbf16>, vector<2x512xf32> -> vector<2x512xf32>
    %14 = arith.addf %13, %7 : vector<2x512xf32>
    %15 = arith.truncf %8 : vector<2x128xf32> to vector<2x128xbf16>
    %cst_13 = arith.constant dense<0.000000e+00> : vector<2x512xf32>
    %16 = tpu.matmul %15, %4, %cst_13 {dimension_numbers = #tpu.dot_dimension_numbers<[1], [0], [0], [1], [0, 0, 1, 1], [], []>} : vector<2x128xbf16>, vector<128x512xbf16>, vector<2x512xf32> -> vector<2x512xf32>
    %17 = arith.addf %14, %16 : vector<2x512xf32>
    %18 = vector.extract_strided_slice %17 {offsets = [0, 0], sizes = [2, 384], strides = [1, 1]} : vector<2x512xf32> to vector<2x384xf32>
    %19 = arith.negf %18 : vector<2x384xf32>
    %20 = math.exp %19 : vector<2x384xf32>
    %cst_14 = arith.constant 1.000000e+00 : f32
    %21 = vector.broadcast %cst_14 : f32 to vector<2x384xf32>
    %22 = arith.addf %21, %20 : vector<2x384xf32>
    %23 = arith.divf %21, %22 : vector<2x384xf32>
    %24 = vector.extract_strided_slice %17 {offsets = [0, 384], sizes = [2, 128], strides = [1, 1]} : vector<2x512xf32> to vector<2x128xf32>
    %25 = math.tanh %24 : vector<2x128xf32>
    %26 = vector.extract_strided_slice %23 {offsets = [0, 0], sizes = [2, 128], strides = [1, 1]} : vector<2x384xf32> to vector<2x128xf32>
    %27 = vector.extract_strided_slice %23 {offsets = [0, 128], sizes = [2, 128], strides = [1, 1]} : vector<2x384xf32> to vector<2x128xf32>
    %28 = vector.extract_strided_slice %23 {offsets = [0, 256], sizes = [2, 128], strides = [1, 1]} : vector<2x384xf32> to vector<2x128xf32>
    %29 = arith.mulf %27, %9 : vector<2x128xf32>
    %30 = arith.mulf %26, %25 : vector<2x128xf32>
    %31 = arith.addf %29, %30 : vector<2x128xf32>
    %32 = math.tanh %31 : vector<2x128xf32>
    %33 = arith.mulf %28, %32 : vector<2x128xf32>
    %c1_i32 = arith.constant 1 : i32
    %34 = arith.index_cast %c1_i32 : i32 to index
    %c0_15 = arith.constant 0 : index
    %c0_16 = arith.constant 0 : index
    %35 = vector.load %arg2[%34, %c0_15, %c0_16] : memref<8x2x128xbf16, #tpu.memory_space<vmem>>, vector<1x2x128xbf16>
    %36 = vector.shape_cast %35 : vector<1x2x128xbf16> to vector<2x128xbf16>
    %cst_17 = arith.constant dense<0.000000e+00> : vector<2x512xf32>
    %37 = tpu.matmul %36, %3, %cst_17 {dimension_numbers = #tpu.dot_dimension_numbers<[1], [0], [0], [1], [0, 0, 1, 1], [], []>} : vector<2x128xbf16>, vector<128x512xbf16>, vector<2x512xf32> -> vector<2x512xf32>
    %38 = arith.addf %37, %7 : vector<2x512xf32>
    %39 = arith.truncf %33 : vector<2x128xf32> to vector<2x128xbf16>
    %cst_18 = arith.constant dense<0.000000e+00> : vector<2x512xf32>
    %40 = tpu.matmul %39, %4, %cst_18 {dimension_numbers = #tpu.dot_dimension_numbers<[1], [0], [0], [1], [0, 0, 1, 1], [], []>} : vector<2x128xbf16>, vector<128x512xbf16>, vector<2x512xf32> -> vector<2x512xf32>
    %41 = arith.addf %38, %40 : vector<2x512xf32>
    %42 = vector.extract_strided_slice %41 {offsets = [0, 0], sizes = [2, 384], strides = [1, 1]} : vector<2x512xf32> to vector<2x384xf32>
    %43 = arith.negf %42 : vector<2x384xf32>
    %44 = math.exp %43 : vector<2x384xf32>
    %cst_19 = arith.constant 1.000000e+00 : f32
    %45 = vector.broadcast %cst_19 : f32 to vector<2x384xf32>
    %46 = arith.addf %45, %44 : vector<2x384xf32>
    %47 = arith.divf %45, %46 : vector<2x384xf32>
    %48 = vector.extract_strided_slice %41 {offsets = [0, 384], sizes = [2, 128], strides = [1, 1]} : vector<2x512xf32> to vector<2x128xf32>
    %49 = math.tanh %48 : vector<2x128xf32>
    %50 = vector.extract_strided_slice %47 {offsets = [0, 0], sizes = [2, 128], strides = [1, 1]} : vector<2x384xf32> to vector<2x128xf32>
    %51 = vector.extract_strided_slice %47 {offsets = [0, 128], sizes = [2, 128], strides = [1, 1]} : vector<2x384xf32> to vector<2x128xf32>
    %52 = vector.extract_strided_slice %47 {offsets = [0, 256], sizes = [2, 128], strides = [1, 1]} : vector<2x384xf32> to vector<2x128xf32>
    %53 = arith.mulf %51, %31 : vector<2x128xf32>
    %54 = arith.mulf %50, %49 : vector<2x128xf32>
    %55 = arith.addf %53, %54 : vector<2x128xf32>
    %56 = math.tanh %55 : vector<2x128xf32>
    %57 = arith.mulf %52, %56 : vector<2x128xf32>
    %c2_i32 = arith.constant 2 : i32
    %58 = arith.index_cast %c2_i32 : i32 to index
    %c0_20 = arith.constant 0 : index
    %c0_21 = arith.constant 0 : index
    %59 = vector.load %arg2[%58, %c0_20, %c0_21] : memref<8x2x128xbf16, #tpu.memory_space<vmem>>, vector<1x2x128xbf16>
    %60 = vector.shape_cast %59 : vector<1x2x128xbf16> to vector<2x128xbf16>
    %cst_22 = arith.constant dense<0.000000e+00> : vector<2x512xf32>
    %61 = tpu.matmul %60, %3, %cst_22 {dimension_numbers = #tpu.dot_dimension_numbers<[1], [0], [0], [1], [0, 0, 1, 1], [], []>} : vector<2x128xbf16>, vector<128x512xbf16>, vector<2x512xf32> -> vector<2x512xf32>
    %62 = arith.addf %61, %7 : vector<2x512xf32>
    %63 = arith.truncf %57 : vector<2x128xf32> to vector<2x128xbf16>
    %cst_23 = arith.constant dense<0.000000e+00> : vector<2x512xf32>
    %64 = tpu.matmul %63, %4, %cst_23 {dimension_numbers = #tpu.dot_dimension_numbers<[1], [0], [0], [1], [0, 0, 1, 1], [], []>} : vector<2x128xbf16>, vector<128x512xbf16>, vector<2x512xf32> -> vector<2x512xf32>
    %65 = arith.addf %62, %64 : vector<2x512xf32>
    %66 = vector.extract_strided_slice %65 {offsets = [0, 0], sizes = [2, 384], strides = [1, 1]} : vector<2x512xf32> to vector<2x384xf32>
    %67 = arith.negf %66 : vector<2x384xf32>
    %68 = math.exp %67 : vector<2x384xf32>
    %cst_24 = arith.constant 1.000000e+00 : f32
    %69 = vector.broadcast %cst_24 : f32 to vector<2x384xf32>
    %70 = arith.addf %69, %68 : vector<2x384xf32>
    %71 = arith.divf %69, %70 : vector<2x384xf32>
    %72 = vector.extract_strided_slice %65 {offsets = [0, 384], sizes = [2, 128], strides = [1, 1]} : vector<2x512xf32> to vector<2x128xf32>
    %73 = math.tanh %72 : vector<2x128xf32>
    %74 = vector.extract_strided_slice %71 {offsets = [0, 0], sizes = [2, 128], strides = [1, 1]} : vector<2x384xf32> to vector<2x128xf32>
    %75 = vector.extract_strided_slice %71 {offsets = [0, 128], sizes = [2, 128], strides = [1, 1]} : vector<2x384xf32> to vector<2x128xf32>
    %76 = vector.extract_strided_slice %71 {offsets = [0, 256], sizes = [2, 128], strides = [1, 1]} : vector<2x384xf32> to vector<2x128xf32>
    %77 = arith.mulf %75, %55 : vector<2x128xf32>
    %78 = arith.mulf %74, %73 : vector<2x128xf32>
    %79 = arith.addf %77, %78 : vector<2x128xf32>
    %80 = math.tanh %79 : vector<2x128xf32>
    %81 = arith.mulf %76, %80 : vector<2x128xf32>
    %c3_i32 = arith.constant 3 : i32
    %82 = arith.index_cast %c3_i32 : i32 to index
    %c0_25 = arith.constant 0 : index
    %c0_26 = arith.constant 0 : index
    %83 = vector.load %arg2[%82, %c0_25, %c0_26] : memref<8x2x128xbf16, #tpu.memory_space<vmem>>, vector<1x2x128xbf16>
    %84 = vector.shape_cast %83 : vector<1x2x128xbf16> to vector<2x128xbf16>
    %cst_27 = arith.constant dense<0.000000e+00> : vector<2x512xf32>
    %85 = tpu.matmul %84, %3, %cst_27 {dimension_numbers = #tpu.dot_dimension_numbers<[1], [0], [0], [1], [0, 0, 1, 1], [], []>} : vector<2x128xbf16>, vector<128x512xbf16>, vector<2x512xf32> -> vector<2x512xf32>
    %86 = arith.addf %85, %7 : vector<2x512xf32>
    %87 = arith.truncf %81 : vector<2x128xf32> to vector<2x128xbf16>
    %cst_28 = arith.constant dense<0.000000e+00> : vector<2x512xf32>
    %88 = tpu.matmul %87, %4, %cst_28 {dimension_numbers = #tpu.dot_dimension_numbers<[1], [0], [0], [1], [0, 0, 1, 1], [], []>} : vector<2x128xbf16>, vector<128x512xbf16>, vector<2x512xf32> -> vector<2x512xf32>
    %89 = arith.addf %86, %88 : vector<2x512xf32>
    %90 = vector.extract_strided_slice %89 {offsets = [0, 0], sizes = [2, 384], strides = [1, 1]} : vector<2x512xf32> to vector<2x384xf32>
    %91 = arith.negf %90 : vector<2x384xf32>
    %92 = math.exp %91 : vector<2x384xf32>
    %cst_29 = arith.constant 1.000000e+00 : f32
    %93 = vector.broadcast %cst_29 : f32 to vector<2x384xf32>
    %94 = arith.addf %93, %92 : vector<2x384xf32>
    %95 = arith.divf %93, %94 : vector<2x384xf32>
    %96 = vector.extract_strided_slice %89 {offsets = [0, 384], sizes = [2, 128], strides = [1, 1]} : vector<2x512xf32> to vector<2x128xf32>
    %97 = math.tanh %96 : vector<2x128xf32>
    %98 = vector.extract_strided_slice %95 {offsets = [0, 0], sizes = [2, 128], strides = [1, 1]} : vector<2x384xf32> to vector<2x128xf32>
    %99 = vector.extract_strided_slice %95 {offsets = [0, 128], sizes = [2, 128], strides = [1, 1]} : vector<2x384xf32> to vector<2x128xf32>
    %100 = vector.extract_strided_slice %95 {offsets = [0, 256], sizes = [2, 128], strides = [1, 1]} : vector<2x384xf32> to vector<2x128xf32>
    %101 = arith.mulf %99, %79 : vector<2x128xf32>
    %102 = arith.mulf %98, %97 : vector<2x128xf32>
    %103 = arith.addf %101, %102 : vector<2x128xf32>
    %104 = math.tanh %103 : vector<2x128xf32>
    %105 = arith.mulf %100, %104 : vector<2x128xf32>
    %c4_i32 = arith.constant 4 : i32
    %106 = arith.index_cast %c4_i32 : i32 to index
    %c0_30 = arith.constant 0 : index
    %c0_31 = arith.constant 0 : index
    %107 = vector.load %arg2[%106, %c0_30, %c0_31] : memref<8x2x128xbf16, #tpu.memory_space<vmem>>, vector<1x2x128xbf16>
    %108 = vector.shape_cast %107 : vector<1x2x128xbf16> to vector<2x128xbf16>
    %cst_32 = arith.constant dense<0.000000e+00> : vector<2x512xf32>
    %109 = tpu.matmul %108, %3, %cst_32 {dimension_numbers = #tpu.dot_dimension_numbers<[1], [0], [0], [1], [0, 0, 1, 1], [], []>} : vector<2x128xbf16>, vector<128x512xbf16>, vector<2x512xf32> -> vector<2x512xf32>
    %110 = arith.addf %109, %7 : vector<2x512xf32>
    %111 = arith.truncf %105 : vector<2x128xf32> to vector<2x128xbf16>
    %cst_33 = arith.constant dense<0.000000e+00> : vector<2x512xf32>
    %112 = tpu.matmul %111, %4, %cst_33 {dimension_numbers = #tpu.dot_dimension_numbers<[1], [0], [0], [1], [0, 0, 1, 1], [], []>} : vector<2x128xbf16>, vector<128x512xbf16>, vector<2x512xf32> -> vector<2x512xf32>
    %113 = arith.addf %110, %112 : vector<2x512xf32>
    %114 = vector.extract_strided_slice %113 {offsets = [0, 0], sizes = [2, 384], strides = [1, 1]} : vector<2x512xf32> to vector<2x384xf32>
    %115 = arith.negf %114 : vector<2x384xf32>
    %116 = math.exp %115 : vector<2x384xf32>
    %cst_34 = arith.constant 1.000000e+00 : f32
    %117 = vector.broadcast %cst_34 : f32 to vector<2x384xf32>
    %118 = arith.addf %117, %116 : vector<2x384xf32>
    %119 = arith.divf %117, %118 : vector<2x384xf32>
    %120 = vector.extract_strided_slice %113 {offsets = [0, 384], sizes = [2, 128], strides = [1, 1]} : vector<2x512xf32> to vector<2x128xf32>
    %121 = math.tanh %120 : vector<2x128xf32>
    %122 = vector.extract_strided_slice %119 {offsets = [0, 0], sizes = [2, 128], strides = [1, 1]} : vector<2x384xf32> to vector<2x128xf32>
    %123 = vector.extract_strided_slice %119 {offsets = [0, 128], sizes = [2, 128], strides = [1, 1]} : vector<2x384xf32> to vector<2x128xf32>
    %124 = vector.extract_strided_slice %119 {offsets = [0, 256], sizes = [2, 128], strides = [1, 1]} : vector<2x384xf32> to vector<2x128xf32>
    %125 = arith.mulf %123, %103 : vector<2x128xf32>
    %126 = arith.mulf %122, %121 : vector<2x128xf32>
    %127 = arith.addf %125, %126 : vector<2x128xf32>
    %128 = math.tanh %127 : vector<2x128xf32>
    %129 = arith.mulf %124, %128 : vector<2x128xf32>
    %c5_i32 = arith.constant 5 : i32
    %130 = arith.index_cast %c5_i32 : i32 to index
    %c0_35 = arith.constant 0 : index
    %c0_36 = arith.constant 0 : index
    %131 = vector.load %arg2[%130, %c0_35, %c0_36] : memref<8x2x128xbf16, #tpu.memory_space<vmem>>, vector<1x2x128xbf16>
    %132 = vector.shape_cast %131 : vector<1x2x128xbf16> to vector<2x128xbf16>
    %cst_37 = arith.constant dense<0.000000e+00> : vector<2x512xf32>
    %133 = tpu.matmul %132, %3, %cst_37 {dimension_numbers = #tpu.dot_dimension_numbers<[1], [0], [0], [1], [0, 0, 1, 1], [], []>} : vector<2x128xbf16>, vector<128x512xbf16>, vector<2x512xf32> -> vector<2x512xf32>
    %134 = arith.addf %133, %7 : vector<2x512xf32>
    %135 = arith.truncf %129 : vector<2x128xf32> to vector<2x128xbf16>
    %cst_38 = arith.constant dense<0.000000e+00> : vector<2x512xf32>
    %136 = tpu.matmul %135, %4, %cst_38 {dimension_numbers = #tpu.dot_dimension_numbers<[1], [0], [0], [1], [0, 0, 1, 1], [], []>} : vector<2x128xbf16>, vector<128x512xbf16>, vector<2x512xf32> -> vector<2x512xf32>
    %137 = arith.addf %134, %136 : vector<2x512xf32>
    %138 = vector.extract_strided_slice %137 {offsets = [0, 0], sizes = [2, 384], strides = [1, 1]} : vector<2x512xf32> to vector<2x384xf32>
    %139 = arith.negf %138 : vector<2x384xf32>
    %140 = math.exp %139 : vector<2x384xf32>
    %cst_39 = arith.constant 1.000000e+00 : f32
    %141 = vector.broadcast %cst_39 : f32 to vector<2x384xf32>
    %142 = arith.addf %141, %140 : vector<2x384xf32>
    %143 = arith.divf %141, %142 : vector<2x384xf32>
    %144 = vector.extract_strided_slice %137 {offsets = [0, 384], sizes = [2, 128], strides = [1, 1]} : vector<2x512xf32> to vector<2x128xf32>
    %145 = math.tanh %144 : vector<2x128xf32>
    %146 = vector.extract_strided_slice %143 {offsets = [0, 0], sizes = [2, 128], strides = [1, 1]} : vector<2x384xf32> to vector<2x128xf32>
    %147 = vector.extract_strided_slice %143 {offsets = [0, 128], sizes = [2, 128], strides = [1, 1]} : vector<2x384xf32> to vector<2x128xf32>
    %148 = vector.extract_strided_slice %143 {offsets = [0, 256], sizes = [2, 128], strides = [1, 1]} : vector<2x384xf32> to vector<2x128xf32>
    %149 = arith.mulf %147, %127 : vector<2x128xf32>
    %150 = arith.mulf %146, %145 : vector<2x128xf32>
    %151 = arith.addf %149, %150 : vector<2x128xf32>
    %152 = math.tanh %151 : vector<2x128xf32>
    %153 = arith.mulf %148, %152 : vector<2x128xf32>
    %c6_i32 = arith.constant 6 : i32
    %154 = arith.index_cast %c6_i32 : i32 to index
    %c0_40 = arith.constant 0 : index
    %c0_41 = arith.constant 0 : index
    %155 = vector.load %arg2[%154, %c0_40, %c0_41] : memref<8x2x128xbf16, #tpu.memory_space<vmem>>, vector<1x2x128xbf16>
    %156 = vector.shape_cast %155 : vector<1x2x128xbf16> to vector<2x128xbf16>
    %cst_42 = arith.constant dense<0.000000e+00> : vector<2x512xf32>
    %157 = tpu.matmul %156, %3, %cst_42 {dimension_numbers = #tpu.dot_dimension_numbers<[1], [0], [0], [1], [0, 0, 1, 1], [], []>} : vector<2x128xbf16>, vector<128x512xbf16>, vector<2x512xf32> -> vector<2x512xf32>
    %158 = arith.addf %157, %7 : vector<2x512xf32>
    %159 = arith.truncf %153 : vector<2x128xf32> to vector<2x128xbf16>
    %cst_43 = arith.constant dense<0.000000e+00> : vector<2x512xf32>
    %160 = tpu.matmul %159, %4, %cst_43 {dimension_numbers = #tpu.dot_dimension_numbers<[1], [0], [0], [1], [0, 0, 1, 1], [], []>} : vector<2x128xbf16>, vector<128x512xbf16>, vector<2x512xf32> -> vector<2x512xf32>
    %161 = arith.addf %158, %160 : vector<2x512xf32>
    %162 = vector.extract_strided_slice %161 {offsets = [0, 0], sizes = [2, 384], strides = [1, 1]} : vector<2x512xf32> to vector<2x384xf32>
    %163 = arith.negf %162 : vector<2x384xf32>
    %164 = math.exp %163 : vector<2x384xf32>
    %cst_44 = arith.constant 1.000000e+00 : f32
    %165 = vector.broadcast %cst_44 : f32 to vector<2x384xf32>
    %166 = arith.addf %165, %164 : vector<2x384xf32>
    %167 = arith.divf %165, %166 : vector<2x384xf32>
    %168 = vector.extract_strided_slice %161 {offsets = [0, 384], sizes = [2, 128], strides = [1, 1]} : vector<2x512xf32> to vector<2x128xf32>
    %169 = math.tanh %168 : vector<2x128xf32>
    %170 = vector.extract_strided_slice %167 {offsets = [0, 0], sizes = [2, 128], strides = [1, 1]} : vector<2x384xf32> to vector<2x128xf32>
    %171 = vector.extract_strided_slice %167 {offsets = [0, 128], sizes = [2, 128], strides = [1, 1]} : vector<2x384xf32> to vector<2x128xf32>
    %172 = vector.extract_strided_slice %167 {offsets = [0, 256], sizes = [2, 128], strides = [1, 1]} : vector<2x384xf32> to vector<2x128xf32>
    %173 = arith.mulf %171, %151 : vector<2x128xf32>
    %174 = arith.mulf %170, %169 : vector<2x128xf32>
    %175 = arith.addf %173, %174 : vector<2x128xf32>
    %176 = math.tanh %175 : vector<2x128xf32>
    %177 = arith.mulf %172, %176 : vector<2x128xf32>
    %c7_i32 = arith.constant 7 : i32
    %178 = arith.index_cast %c7_i32 : i32 to index
    %c0_45 = arith.constant 0 : index
    %c0_46 = arith.constant 0 : index
    %179 = vector.load %arg2[%178, %c0_45, %c0_46] : memref<8x2x128xbf16, #tpu.memory_space<vmem>>, vector<1x2x128xbf16>
    %180 = vector.shape_cast %179 : vector<1x2x128xbf16> to vector<2x128xbf16>
    %cst_47 = arith.constant dense<0.000000e+00> : vector<2x512xf32>
    %181 = tpu.matmul %180, %3, %cst_47 {dimension_numbers = #tpu.dot_dimension_numbers<[1], [0], [0], [1], [0, 0, 1, 1], [], []>} : vector<2x128xbf16>, vector<128x512xbf16>, vector<2x512xf32> -> vector<2x512xf32>
    %182 = arith.addf %181, %7 : vector<2x512xf32>
    %183 = arith.truncf %177 : vector<2x128xf32> to vector<2x128xbf16>
    %cst_48 = arith.constant dense<0.000000e+00> : vector<2x512xf32>
    %184 = tpu.matmul %183, %4, %cst_48 {dimension_numbers = #tpu.dot_dimension_numbers<[1], [0], [0], [1], [0, 0, 1, 1], [], []>} : vector<2x128xbf16>, vector<128x512xbf16>, vector<2x512xf32> -> vector<2x512xf32>
    %185 = arith.addf %182, %184 : vector<2x512xf32>
    %186 = vector.extract_strided_slice %185 {offsets = [0, 0], sizes = [2, 384], strides = [1, 1]} : vector<2x512xf32> to vector<2x384xf32>
    %187 = arith.negf %186 : vector<2x384xf32>
    %188 = math.exp %187 : vector<2x384xf32>
    %cst_49 = arith.constant 1.000000e+00 : f32
    %189 = vector.broadcast %cst_49 : f32 to vector<2x384xf32>
    %190 = arith.addf %189, %188 : vector<2x384xf32>
    %191 = arith.divf %189, %190 : vector<2x384xf32>
    %192 = vector.extract_strided_slice %185 {offsets = [0, 384], sizes = [2, 128], strides = [1, 1]} : vector<2x512xf32> to vector<2x128xf32>
    %193 = math.tanh %192 : vector<2x128xf32>
    %194 = vector.extract_strided_slice %191 {offsets = [0, 0], sizes = [2, 128], strides = [1, 1]} : vector<2x384xf32> to vector<2x128xf32>
    %195 = vector.extract_strided_slice %191 {offsets = [0, 128], sizes = [2, 128], strides = [1, 1]} : vector<2x384xf32> to vector<2x128xf32>
    %196 = vector.extract_strided_slice %191 {offsets = [0, 256], sizes = [2, 128], strides = [1, 1]} : vector<2x384xf32> to vector<2x128xf32>
    %197 = arith.mulf %195, %175 : vector<2x128xf32>
    %198 = arith.mulf %194, %193 : vector<2x128xf32>
    %199 = arith.addf %197, %198 : vector<2x128xf32>
    %200 = math.tanh %199 : vector<2x128xf32>
    %201 = arith.mulf %196, %200 : vector<2x128xf32>
    %c8_i32 = arith.constant 8 : i32
    %c0_50 = arith.constant 0 : index
    %c0_51 = arith.constant 0 : index
    %202 = vector.load %arg9[%c0_50, %c0_51] : memref<2x128xf32, #tpu.memory_space<vmem>>, vector<2x128xf32>
    tpu.vector_store %arg9[%c0_50, %c0_51], %201 {strides = array<i32>} : memref<2x128xf32, #tpu.memory_space<vmem>>, vector<2x128xf32>,
    %c0_52 = arith.constant 0 : index
    %c0_53 = arith.constant 0 : index
    %203 = vector.load %arg10[%c0_52, %c0_53] : memref<2x128xf32, #tpu.memory_space<vmem>>, vector<2x128xf32>
    tpu.vector_store %arg10[%c0_52, %c0_53], %199 {strides = array<i32>} : memref<2x128xf32, #tpu.memory_space<vmem>>, vector<2x128xf32>,
    %c0_i32_54 = arith.constant 0 : i32
    %204 = arith.cmpi eq, %arg1, %c0_i32_54 : i32
    %205 = arith.extui %204 : i1 to i32
    %c0_i32_55 = arith.constant 0 : i32
    %206 = arith.cmpi ne, %205, %c0_i32_55 : i32
    scf.if %206 {
      %207 = arith.truncf %201 : vector<2x128xf32> to vector<2x128xbf16>
      %c0_56 = arith.constant 0 : index
      %c0_57 = arith.constant 0 : index
      %208 = vector.load %arg6[%c0_56, %c0_57] : memref<128x128xbf16, #tpu.memory_space<vmem>>, vector<128x128xbf16>
      %cst_58 = arith.constant dense<0.000000e+00> : vector<2x128xf32>
      %209 = tpu.matmul %207, %208, %cst_58 {dimension_numbers = #tpu.dot_dimension_numbers<[1], [0], [0], [1], [0, 0, 1, 1], [], []>} : vector<2x128xbf16>, vector<128x128xbf16>, vector<2x128xf32> -> vector<2x128xf32>
      %c0_59 = arith.constant 0 : index
      %c0_60 = arith.constant 0 : index
      %210 = vector.load %arg7[%c0_59, %c0_60] : memref<1x128xf32, #tpu.memory_space<vmem>>, vector<1x128xf32>
      %211 = vector.broadcast %210 : vector<1x128xf32> to vector<2x128xf32>
      %212 = arith.addf %209, %211 : vector<2x128xf32>
      %c0_61 = arith.constant 0 : index
      %c0_62 = arith.constant 0 : index
      %213 = vector.load %arg8[%c0_61, %c0_62] : memref<2x128xf32, #tpu.memory_space<vmem>>, vector<2x128xf32>
      tpu.vector_store %arg8[%c0_61, %c0_62], %212 {strides = array<i32>} : memref<2x128xf32, #tpu.memory_space<vmem>>, vector<2x128xf32>,
    } else {
    }
    return
  }
  func.func @transform_0(%arg0: i32, %arg1: i32) -> (i32, i32, i32) {
    %c0_i32 = arith.constant 0 : i32
    %c0_i32_0 = arith.constant 0 : i32
    return %arg1, %arg0, %c0_i32 : i32, i32, i32
  }
  func.func @transform_1(%arg0: i32, %arg1: i32) -> (i32, i32) {
    %c0_i32 = arith.constant 0 : i32
    %c0_i32_0 = arith.constant 0 : i32
    %c0_i32_1 = arith.constant 0 : i32
    return %c0_i32, %c0_i32_0 : i32, i32
  }
  func.func @transform_2(%arg0: i32, %arg1: i32) -> (i32, i32) {
    %c0_i32 = arith.constant 0 : i32
    %c0_i32_0 = arith.constant 0 : i32
    %c0_i32_1 = arith.constant 0 : i32
    return %c0_i32, %c0_i32_0 : i32, i32
  }
  func.func @transform_3(%arg0: i32, %arg1: i32) -> (i32, i32) {
    %c0_i32 = arith.constant 0 : i32
    %c0_i32_0 = arith.constant 0 : i32
    %c0_i32_1 = arith.constant 0 : i32
    return %c0_i32, %c0_i32_0 : i32, i32
  }
  func.func @transform_4(%arg0: i32, %arg1: i32) -> (i32, i32) {
    %c0_i32 = arith.constant 0 : i32
    %c0_i32_0 = arith.constant 0 : i32
    %c0_i32_1 = arith.constant 0 : i32
    return %c0_i32, %c0_i32_0 : i32, i32
  }
  func.func @transform_5(%arg0: i32, %arg1: i32) -> (i32, i32) {
    %c0_i32 = arith.constant 0 : i32
    %c0_i32_0 = arith.constant 0 : i32
    %c0_i32_1 = arith.constant 0 : i32
    return %c0_i32, %c0_i32_0 : i32, i32
  }
  func.func @transform_6(%arg0: i32, %arg1: i32) -> (i32, i32) {
    %c0_i32 = arith.constant 0 : i32
    %c0_i32_0 = arith.constant 0 : i32
    return %arg0, %c0_i32 : i32, i32
  }
}

module attributes {stable_mosaic.version = 11 : i64} {
  func.func @_lstm_seq_kernel(%arg0: i32, %arg1: i32, %arg2: memref<8x2x16xbf16, #tpu.memory_space<vmem>>, %arg3: memref<16x512xbf16, #tpu.memory_space<vmem>>, %arg4: memref<1x512xf32, #tpu.memory_space<vmem>>, %arg5: memref<128x512xbf16, #tpu.memory_space<vmem>>, %arg6: memref<8x2x128xbf16, #tpu.memory_space<vmem>>, %arg7: memref<2x128xf32, #tpu.memory_space<vmem>>, %arg8: memref<2x128xf32, #tpu.memory_space<vmem>>) attributes {dimension_semantics = [#tpu.dimension_semantics<parallel>, #tpu.dimension_semantics<arbitrary>], iteration_bounds = array<i64: 1, 1>, scalar_prefetch = 0 : i64, scratch_operands = 2 : i64, tpu.core_type = #tpu.core_type<tc>, window_params = [{transform_indices = @transform_0, window_bounds = array<i64: 8, 2, 16>}, {pipeline_mode = #tpu.pipeline_mode<synchronous>, transform_indices = @transform_1, window_bounds = array<i64: 16, 512>}, {pipeline_mode = #tpu.pipeline_mode<synchronous>, transform_indices = @transform_2, window_bounds = array<i64: 1, 512>}, {pipeline_mode = #tpu.pipeline_mode<synchronous>, transform_indices = @transform_3, window_bounds = array<i64: 128, 512>}, {transform_indices = @transform_4, window_bounds = array<i64: 8, 2, 128>}]} {
    %c0_i32 = arith.constant 0 : i32
    %0 = arith.cmpi eq, %arg1, %c0_i32 : i32
    %1 = arith.extui %0 : i1 to i32
    %c0_i32_0 = arith.constant 0 : i32
    %2 = arith.cmpi ne, %1, %c0_i32_0 : i32
    scf.if %2 {
      %cst_70 = arith.constant 0.000000e+00 : f32
      %244 = vector.broadcast %cst_70 : f32 to vector<2x128xf32>
      %c0_71 = arith.constant 0 : index
      %c0_72 = arith.constant 0 : index
      %245 = vector.load %arg7[%c0_71, %c0_72] : memref<2x128xf32, #tpu.memory_space<vmem>>, vector<2x128xf32>
      tpu.vector_store %arg7[%c0_71, %c0_72], %244 {strides = array<i32>} : memref<2x128xf32, #tpu.memory_space<vmem>>, vector<2x128xf32>,
      %cst_73 = arith.constant 0.000000e+00 : f32
      %246 = vector.broadcast %cst_73 : f32 to vector<2x128xf32>
      %c0_74 = arith.constant 0 : index
      %c0_75 = arith.constant 0 : index
      %247 = vector.load %arg8[%c0_74, %c0_75] : memref<2x128xf32, #tpu.memory_space<vmem>>, vector<2x128xf32>
      tpu.vector_store %arg8[%c0_74, %c0_75], %246 {strides = array<i32>} : memref<2x128xf32, #tpu.memory_space<vmem>>, vector<2x128xf32>,
    } else {
    }
    %c0 = arith.constant 0 : index
    %c0_1 = arith.constant 0 : index
    %3 = vector.load %arg3[%c0, %c0_1] : memref<16x512xbf16, #tpu.memory_space<vmem>>, vector<16x512xbf16>
    %c0_2 = arith.constant 0 : index
    %c0_3 = arith.constant 0 : index
    %4 = vector.load %arg5[%c0_2, %c0_3] : memref<128x512xbf16, #tpu.memory_space<vmem>>, vector<128x512xbf16>
    %c0_4 = arith.constant 0 : index
    %c0_5 = arith.constant 0 : index
    %5 = vector.load %arg4[%c0_4, %c0_5] : memref<1x512xf32, #tpu.memory_space<vmem>>, vector<1x512xf32>
    %6 = vector.shape_cast %5 : vector<1x512xf32> to vector<1x512xf32>
    %7 = vector.broadcast %6 : vector<1x512xf32> to vector<2x512xf32>
    %c0_6 = arith.constant 0 : index
    %c0_7 = arith.constant 0 : index
    %8 = vector.load %arg7[%c0_6, %c0_7] : memref<2x128xf32, #tpu.memory_space<vmem>>, vector<2x128xf32>
    %c0_8 = arith.constant 0 : index
    %c0_9 = arith.constant 0 : index
    %9 = vector.load %arg8[%c0_8, %c0_9] : memref<2x128xf32, #tpu.memory_space<vmem>>, vector<2x128xf32>
    %c0_i32_10 = arith.constant 0 : i32
    %10 = arith.index_cast %c0_i32_10 : i32 to index
    %c0_11 = arith.constant 0 : index
    %c0_12 = arith.constant 0 : index
    %11 = vector.load %arg2[%10, %c0_11, %c0_12] : memref<8x2x16xbf16, #tpu.memory_space<vmem>>, vector<1x2x16xbf16>
    %12 = vector.shape_cast %11 : vector<1x2x16xbf16> to vector<2x16xbf16>
    %cst = arith.constant dense<0.000000e+00> : vector<2x512xf32>
    %13 = tpu.matmul %12, %3, %cst {dimension_numbers = #tpu.dot_dimension_numbers<[1], [0], [0], [1], [0, 0, 1, 1], [], []>} : vector<2x16xbf16>, vector<16x512xbf16>, vector<2x512xf32> -> vector<2x512xf32>
    %14 = arith.addf %13, %7 : vector<2x512xf32>
    %15 = arith.truncf %8 : vector<2x128xf32> to vector<2x128xbf16>
    %cst_13 = arith.constant dense<0.000000e+00> : vector<2x512xf32>
    %16 = tpu.matmul %15, %4, %cst_13 {dimension_numbers = #tpu.dot_dimension_numbers<[1], [0], [0], [1], [0, 0, 1, 1], [], []>} : vector<2x128xbf16>, vector<128x512xbf16>, vector<2x512xf32> -> vector<2x512xf32>
    %17 = arith.addf %14, %16 : vector<2x512xf32>
    %18 = vector.extract_strided_slice %17 {offsets = [0, 0], sizes = [2, 384], strides = [1, 1]} : vector<2x512xf32> to vector<2x384xf32>
    %19 = arith.negf %18 : vector<2x384xf32>
    %20 = math.exp %19 : vector<2x384xf32>
    %cst_14 = arith.constant 1.000000e+00 : f32
    %21 = vector.broadcast %cst_14 : f32 to vector<2x384xf32>
    %22 = arith.addf %21, %20 : vector<2x384xf32>
    %23 = arith.divf %21, %22 : vector<2x384xf32>
    %24 = vector.extract_strided_slice %17 {offsets = [0, 384], sizes = [2, 128], strides = [1, 1]} : vector<2x512xf32> to vector<2x128xf32>
    %25 = math.tanh %24 : vector<2x128xf32>
    %26 = vector.extract_strided_slice %23 {offsets = [0, 0], sizes = [2, 128], strides = [1, 1]} : vector<2x384xf32> to vector<2x128xf32>
    %27 = vector.extract_strided_slice %23 {offsets = [0, 128], sizes = [2, 128], strides = [1, 1]} : vector<2x384xf32> to vector<2x128xf32>
    %28 = vector.extract_strided_slice %23 {offsets = [0, 256], sizes = [2, 128], strides = [1, 1]} : vector<2x384xf32> to vector<2x128xf32>
    %29 = arith.mulf %27, %9 : vector<2x128xf32>
    %30 = arith.mulf %26, %25 : vector<2x128xf32>
    %31 = arith.addf %29, %30 : vector<2x128xf32>
    %32 = math.tanh %31 : vector<2x128xf32>
    %33 = arith.mulf %28, %32 : vector<2x128xf32>
    %34 = arith.truncf %33 : vector<2x128xf32> to vector<2x128xbf16>
    %35 = arith.index_cast %c0_i32_10 : i32 to index
    %c0_15 = arith.constant 0 : index
    %c0_16 = arith.constant 0 : index
    %36 = vector.load %arg6[%35, %c0_15, %c0_16] : memref<8x2x128xbf16, #tpu.memory_space<vmem>>, vector<1x2x128xbf16>
    %37 = vector.shape_cast %36 : vector<1x2x128xbf16> to vector<2x128xbf16>
    %38 = vector.shape_cast %34 : vector<2x128xbf16> to vector<1x2x128xbf16>
    tpu.vector_store %arg6[%35, %c0_15, %c0_16], %38 {strides = array<i32>} : memref<8x2x128xbf16, #tpu.memory_space<vmem>>, vector<1x2x128xbf16>,
    %c1_i32 = arith.constant 1 : i32
    %39 = arith.index_cast %c1_i32 : i32 to index
    %c0_17 = arith.constant 0 : index
    %c0_18 = arith.constant 0 : index
    %40 = vector.load %arg2[%39, %c0_17, %c0_18] : memref<8x2x16xbf16, #tpu.memory_space<vmem>>, vector<1x2x16xbf16>
    %41 = vector.shape_cast %40 : vector<1x2x16xbf16> to vector<2x16xbf16>
    %cst_19 = arith.constant dense<0.000000e+00> : vector<2x512xf32>
    %42 = tpu.matmul %41, %3, %cst_19 {dimension_numbers = #tpu.dot_dimension_numbers<[1], [0], [0], [1], [0, 0, 1, 1], [], []>} : vector<2x16xbf16>, vector<16x512xbf16>, vector<2x512xf32> -> vector<2x512xf32>
    %43 = arith.addf %42, %7 : vector<2x512xf32>
    %44 = arith.truncf %33 : vector<2x128xf32> to vector<2x128xbf16>
    %cst_20 = arith.constant dense<0.000000e+00> : vector<2x512xf32>
    %45 = tpu.matmul %44, %4, %cst_20 {dimension_numbers = #tpu.dot_dimension_numbers<[1], [0], [0], [1], [0, 0, 1, 1], [], []>} : vector<2x128xbf16>, vector<128x512xbf16>, vector<2x512xf32> -> vector<2x512xf32>
    %46 = arith.addf %43, %45 : vector<2x512xf32>
    %47 = vector.extract_strided_slice %46 {offsets = [0, 0], sizes = [2, 384], strides = [1, 1]} : vector<2x512xf32> to vector<2x384xf32>
    %48 = arith.negf %47 : vector<2x384xf32>
    %49 = math.exp %48 : vector<2x384xf32>
    %cst_21 = arith.constant 1.000000e+00 : f32
    %50 = vector.broadcast %cst_21 : f32 to vector<2x384xf32>
    %51 = arith.addf %50, %49 : vector<2x384xf32>
    %52 = arith.divf %50, %51 : vector<2x384xf32>
    %53 = vector.extract_strided_slice %46 {offsets = [0, 384], sizes = [2, 128], strides = [1, 1]} : vector<2x512xf32> to vector<2x128xf32>
    %54 = math.tanh %53 : vector<2x128xf32>
    %55 = vector.extract_strided_slice %52 {offsets = [0, 0], sizes = [2, 128], strides = [1, 1]} : vector<2x384xf32> to vector<2x128xf32>
    %56 = vector.extract_strided_slice %52 {offsets = [0, 128], sizes = [2, 128], strides = [1, 1]} : vector<2x384xf32> to vector<2x128xf32>
    %57 = vector.extract_strided_slice %52 {offsets = [0, 256], sizes = [2, 128], strides = [1, 1]} : vector<2x384xf32> to vector<2x128xf32>
    %58 = arith.mulf %56, %31 : vector<2x128xf32>
    %59 = arith.mulf %55, %54 : vector<2x128xf32>
    %60 = arith.addf %58, %59 : vector<2x128xf32>
    %61 = math.tanh %60 : vector<2x128xf32>
    %62 = arith.mulf %57, %61 : vector<2x128xf32>
    %63 = arith.truncf %62 : vector<2x128xf32> to vector<2x128xbf16>
    %64 = arith.index_cast %c1_i32 : i32 to index
    %c0_22 = arith.constant 0 : index
    %c0_23 = arith.constant 0 : index
    %65 = vector.load %arg6[%64, %c0_22, %c0_23] : memref<8x2x128xbf16, #tpu.memory_space<vmem>>, vector<1x2x128xbf16>
    %66 = vector.shape_cast %65 : vector<1x2x128xbf16> to vector<2x128xbf16>
    %67 = vector.shape_cast %63 : vector<2x128xbf16> to vector<1x2x128xbf16>
    tpu.vector_store %arg6[%64, %c0_22, %c0_23], %67 {strides = array<i32>} : memref<8x2x128xbf16, #tpu.memory_space<vmem>>, vector<1x2x128xbf16>,
    %c2_i32 = arith.constant 2 : i32
    %68 = arith.index_cast %c2_i32 : i32 to index
    %c0_24 = arith.constant 0 : index
    %c0_25 = arith.constant 0 : index
    %69 = vector.load %arg2[%68, %c0_24, %c0_25] : memref<8x2x16xbf16, #tpu.memory_space<vmem>>, vector<1x2x16xbf16>
    %70 = vector.shape_cast %69 : vector<1x2x16xbf16> to vector<2x16xbf16>
    %cst_26 = arith.constant dense<0.000000e+00> : vector<2x512xf32>
    %71 = tpu.matmul %70, %3, %cst_26 {dimension_numbers = #tpu.dot_dimension_numbers<[1], [0], [0], [1], [0, 0, 1, 1], [], []>} : vector<2x16xbf16>, vector<16x512xbf16>, vector<2x512xf32> -> vector<2x512xf32>
    %72 = arith.addf %71, %7 : vector<2x512xf32>
    %73 = arith.truncf %62 : vector<2x128xf32> to vector<2x128xbf16>
    %cst_27 = arith.constant dense<0.000000e+00> : vector<2x512xf32>
    %74 = tpu.matmul %73, %4, %cst_27 {dimension_numbers = #tpu.dot_dimension_numbers<[1], [0], [0], [1], [0, 0, 1, 1], [], []>} : vector<2x128xbf16>, vector<128x512xbf16>, vector<2x512xf32> -> vector<2x512xf32>
    %75 = arith.addf %72, %74 : vector<2x512xf32>
    %76 = vector.extract_strided_slice %75 {offsets = [0, 0], sizes = [2, 384], strides = [1, 1]} : vector<2x512xf32> to vector<2x384xf32>
    %77 = arith.negf %76 : vector<2x384xf32>
    %78 = math.exp %77 : vector<2x384xf32>
    %cst_28 = arith.constant 1.000000e+00 : f32
    %79 = vector.broadcast %cst_28 : f32 to vector<2x384xf32>
    %80 = arith.addf %79, %78 : vector<2x384xf32>
    %81 = arith.divf %79, %80 : vector<2x384xf32>
    %82 = vector.extract_strided_slice %75 {offsets = [0, 384], sizes = [2, 128], strides = [1, 1]} : vector<2x512xf32> to vector<2x128xf32>
    %83 = math.tanh %82 : vector<2x128xf32>
    %84 = vector.extract_strided_slice %81 {offsets = [0, 0], sizes = [2, 128], strides = [1, 1]} : vector<2x384xf32> to vector<2x128xf32>
    %85 = vector.extract_strided_slice %81 {offsets = [0, 128], sizes = [2, 128], strides = [1, 1]} : vector<2x384xf32> to vector<2x128xf32>
    %86 = vector.extract_strided_slice %81 {offsets = [0, 256], sizes = [2, 128], strides = [1, 1]} : vector<2x384xf32> to vector<2x128xf32>
    %87 = arith.mulf %85, %60 : vector<2x128xf32>
    %88 = arith.mulf %84, %83 : vector<2x128xf32>
    %89 = arith.addf %87, %88 : vector<2x128xf32>
    %90 = math.tanh %89 : vector<2x128xf32>
    %91 = arith.mulf %86, %90 : vector<2x128xf32>
    %92 = arith.truncf %91 : vector<2x128xf32> to vector<2x128xbf16>
    %93 = arith.index_cast %c2_i32 : i32 to index
    %c0_29 = arith.constant 0 : index
    %c0_30 = arith.constant 0 : index
    %94 = vector.load %arg6[%93, %c0_29, %c0_30] : memref<8x2x128xbf16, #tpu.memory_space<vmem>>, vector<1x2x128xbf16>
    %95 = vector.shape_cast %94 : vector<1x2x128xbf16> to vector<2x128xbf16>
    %96 = vector.shape_cast %92 : vector<2x128xbf16> to vector<1x2x128xbf16>
    tpu.vector_store %arg6[%93, %c0_29, %c0_30], %96 {strides = array<i32>} : memref<8x2x128xbf16, #tpu.memory_space<vmem>>, vector<1x2x128xbf16>,
    %c3_i32 = arith.constant 3 : i32
    %97 = arith.index_cast %c3_i32 : i32 to index
    %c0_31 = arith.constant 0 : index
    %c0_32 = arith.constant 0 : index
    %98 = vector.load %arg2[%97, %c0_31, %c0_32] : memref<8x2x16xbf16, #tpu.memory_space<vmem>>, vector<1x2x16xbf16>
    %99 = vector.shape_cast %98 : vector<1x2x16xbf16> to vector<2x16xbf16>
    %cst_33 = arith.constant dense<0.000000e+00> : vector<2x512xf32>
    %100 = tpu.matmul %99, %3, %cst_33 {dimension_numbers = #tpu.dot_dimension_numbers<[1], [0], [0], [1], [0, 0, 1, 1], [], []>} : vector<2x16xbf16>, vector<16x512xbf16>, vector<2x512xf32> -> vector<2x512xf32>
    %101 = arith.addf %100, %7 : vector<2x512xf32>
    %102 = arith.truncf %91 : vector<2x128xf32> to vector<2x128xbf16>
    %cst_34 = arith.constant dense<0.000000e+00> : vector<2x512xf32>
    %103 = tpu.matmul %102, %4, %cst_34 {dimension_numbers = #tpu.dot_dimension_numbers<[1], [0], [0], [1], [0, 0, 1, 1], [], []>} : vector<2x128xbf16>, vector<128x512xbf16>, vector<2x512xf32> -> vector<2x512xf32>
    %104 = arith.addf %101, %103 : vector<2x512xf32>
    %105 = vector.extract_strided_slice %104 {offsets = [0, 0], sizes = [2, 384], strides = [1, 1]} : vector<2x512xf32> to vector<2x384xf32>
    %106 = arith.negf %105 : vector<2x384xf32>
    %107 = math.exp %106 : vector<2x384xf32>
    %cst_35 = arith.constant 1.000000e+00 : f32
    %108 = vector.broadcast %cst_35 : f32 to vector<2x384xf32>
    %109 = arith.addf %108, %107 : vector<2x384xf32>
    %110 = arith.divf %108, %109 : vector<2x384xf32>
    %111 = vector.extract_strided_slice %104 {offsets = [0, 384], sizes = [2, 128], strides = [1, 1]} : vector<2x512xf32> to vector<2x128xf32>
    %112 = math.tanh %111 : vector<2x128xf32>
    %113 = vector.extract_strided_slice %110 {offsets = [0, 0], sizes = [2, 128], strides = [1, 1]} : vector<2x384xf32> to vector<2x128xf32>
    %114 = vector.extract_strided_slice %110 {offsets = [0, 128], sizes = [2, 128], strides = [1, 1]} : vector<2x384xf32> to vector<2x128xf32>
    %115 = vector.extract_strided_slice %110 {offsets = [0, 256], sizes = [2, 128], strides = [1, 1]} : vector<2x384xf32> to vector<2x128xf32>
    %116 = arith.mulf %114, %89 : vector<2x128xf32>
    %117 = arith.mulf %113, %112 : vector<2x128xf32>
    %118 = arith.addf %116, %117 : vector<2x128xf32>
    %119 = math.tanh %118 : vector<2x128xf32>
    %120 = arith.mulf %115, %119 : vector<2x128xf32>
    %121 = arith.truncf %120 : vector<2x128xf32> to vector<2x128xbf16>
    %122 = arith.index_cast %c3_i32 : i32 to index
    %c0_36 = arith.constant 0 : index
    %c0_37 = arith.constant 0 : index
    %123 = vector.load %arg6[%122, %c0_36, %c0_37] : memref<8x2x128xbf16, #tpu.memory_space<vmem>>, vector<1x2x128xbf16>
    %124 = vector.shape_cast %123 : vector<1x2x128xbf16> to vector<2x128xbf16>
    %125 = vector.shape_cast %121 : vector<2x128xbf16> to vector<1x2x128xbf16>
    tpu.vector_store %arg6[%122, %c0_36, %c0_37], %125 {strides = array<i32>} : memref<8x2x128xbf16, #tpu.memory_space<vmem>>, vector<1x2x128xbf16>,
    %c4_i32 = arith.constant 4 : i32
    %126 = arith.index_cast %c4_i32 : i32 to index
    %c0_38 = arith.constant 0 : index
    %c0_39 = arith.constant 0 : index
    %127 = vector.load %arg2[%126, %c0_38, %c0_39] : memref<8x2x16xbf16, #tpu.memory_space<vmem>>, vector<1x2x16xbf16>
    %128 = vector.shape_cast %127 : vector<1x2x16xbf16> to vector<2x16xbf16>
    %cst_40 = arith.constant dense<0.000000e+00> : vector<2x512xf32>
    %129 = tpu.matmul %128, %3, %cst_40 {dimension_numbers = #tpu.dot_dimension_numbers<[1], [0], [0], [1], [0, 0, 1, 1], [], []>} : vector<2x16xbf16>, vector<16x512xbf16>, vector<2x512xf32> -> vector<2x512xf32>
    %130 = arith.addf %129, %7 : vector<2x512xf32>
    %131 = arith.truncf %120 : vector<2x128xf32> to vector<2x128xbf16>
    %cst_41 = arith.constant dense<0.000000e+00> : vector<2x512xf32>
    %132 = tpu.matmul %131, %4, %cst_41 {dimension_numbers = #tpu.dot_dimension_numbers<[1], [0], [0], [1], [0, 0, 1, 1], [], []>} : vector<2x128xbf16>, vector<128x512xbf16>, vector<2x512xf32> -> vector<2x512xf32>
    %133 = arith.addf %130, %132 : vector<2x512xf32>
    %134 = vector.extract_strided_slice %133 {offsets = [0, 0], sizes = [2, 384], strides = [1, 1]} : vector<2x512xf32> to vector<2x384xf32>
    %135 = arith.negf %134 : vector<2x384xf32>
    %136 = math.exp %135 : vector<2x384xf32>
    %cst_42 = arith.constant 1.000000e+00 : f32
    %137 = vector.broadcast %cst_42 : f32 to vector<2x384xf32>
    %138 = arith.addf %137, %136 : vector<2x384xf32>
    %139 = arith.divf %137, %138 : vector<2x384xf32>
    %140 = vector.extract_strided_slice %133 {offsets = [0, 384], sizes = [2, 128], strides = [1, 1]} : vector<2x512xf32> to vector<2x128xf32>
    %141 = math.tanh %140 : vector<2x128xf32>
    %142 = vector.extract_strided_slice %139 {offsets = [0, 0], sizes = [2, 128], strides = [1, 1]} : vector<2x384xf32> to vector<2x128xf32>
    %143 = vector.extract_strided_slice %139 {offsets = [0, 128], sizes = [2, 128], strides = [1, 1]} : vector<2x384xf32> to vector<2x128xf32>
    %144 = vector.extract_strided_slice %139 {offsets = [0, 256], sizes = [2, 128], strides = [1, 1]} : vector<2x384xf32> to vector<2x128xf32>
    %145 = arith.mulf %143, %118 : vector<2x128xf32>
    %146 = arith.mulf %142, %141 : vector<2x128xf32>
    %147 = arith.addf %145, %146 : vector<2x128xf32>
    %148 = math.tanh %147 : vector<2x128xf32>
    %149 = arith.mulf %144, %148 : vector<2x128xf32>
    %150 = arith.truncf %149 : vector<2x128xf32> to vector<2x128xbf16>
    %151 = arith.index_cast %c4_i32 : i32 to index
    %c0_43 = arith.constant 0 : index
    %c0_44 = arith.constant 0 : index
    %152 = vector.load %arg6[%151, %c0_43, %c0_44] : memref<8x2x128xbf16, #tpu.memory_space<vmem>>, vector<1x2x128xbf16>
    %153 = vector.shape_cast %152 : vector<1x2x128xbf16> to vector<2x128xbf16>
    %154 = vector.shape_cast %150 : vector<2x128xbf16> to vector<1x2x128xbf16>
    tpu.vector_store %arg6[%151, %c0_43, %c0_44], %154 {strides = array<i32>} : memref<8x2x128xbf16, #tpu.memory_space<vmem>>, vector<1x2x128xbf16>,
    %c5_i32 = arith.constant 5 : i32
    %155 = arith.index_cast %c5_i32 : i32 to index
    %c0_45 = arith.constant 0 : index
    %c0_46 = arith.constant 0 : index
    %156 = vector.load %arg2[%155, %c0_45, %c0_46] : memref<8x2x16xbf16, #tpu.memory_space<vmem>>, vector<1x2x16xbf16>
    %157 = vector.shape_cast %156 : vector<1x2x16xbf16> to vector<2x16xbf16>
    %cst_47 = arith.constant dense<0.000000e+00> : vector<2x512xf32>
    %158 = tpu.matmul %157, %3, %cst_47 {dimension_numbers = #tpu.dot_dimension_numbers<[1], [0], [0], [1], [0, 0, 1, 1], [], []>} : vector<2x16xbf16>, vector<16x512xbf16>, vector<2x512xf32> -> vector<2x512xf32>
    %159 = arith.addf %158, %7 : vector<2x512xf32>
    %160 = arith.truncf %149 : vector<2x128xf32> to vector<2x128xbf16>
    %cst_48 = arith.constant dense<0.000000e+00> : vector<2x512xf32>
    %161 = tpu.matmul %160, %4, %cst_48 {dimension_numbers = #tpu.dot_dimension_numbers<[1], [0], [0], [1], [0, 0, 1, 1], [], []>} : vector<2x128xbf16>, vector<128x512xbf16>, vector<2x512xf32> -> vector<2x512xf32>
    %162 = arith.addf %159, %161 : vector<2x512xf32>
    %163 = vector.extract_strided_slice %162 {offsets = [0, 0], sizes = [2, 384], strides = [1, 1]} : vector<2x512xf32> to vector<2x384xf32>
    %164 = arith.negf %163 : vector<2x384xf32>
    %165 = math.exp %164 : vector<2x384xf32>
    %cst_49 = arith.constant 1.000000e+00 : f32
    %166 = vector.broadcast %cst_49 : f32 to vector<2x384xf32>
    %167 = arith.addf %166, %165 : vector<2x384xf32>
    %168 = arith.divf %166, %167 : vector<2x384xf32>
    %169 = vector.extract_strided_slice %162 {offsets = [0, 384], sizes = [2, 128], strides = [1, 1]} : vector<2x512xf32> to vector<2x128xf32>
    %170 = math.tanh %169 : vector<2x128xf32>
    %171 = vector.extract_strided_slice %168 {offsets = [0, 0], sizes = [2, 128], strides = [1, 1]} : vector<2x384xf32> to vector<2x128xf32>
    %172 = vector.extract_strided_slice %168 {offsets = [0, 128], sizes = [2, 128], strides = [1, 1]} : vector<2x384xf32> to vector<2x128xf32>
    %173 = vector.extract_strided_slice %168 {offsets = [0, 256], sizes = [2, 128], strides = [1, 1]} : vector<2x384xf32> to vector<2x128xf32>
    %174 = arith.mulf %172, %147 : vector<2x128xf32>
    %175 = arith.mulf %171, %170 : vector<2x128xf32>
    %176 = arith.addf %174, %175 : vector<2x128xf32>
    %177 = math.tanh %176 : vector<2x128xf32>
    %178 = arith.mulf %173, %177 : vector<2x128xf32>
    %179 = arith.truncf %178 : vector<2x128xf32> to vector<2x128xbf16>
    %180 = arith.index_cast %c5_i32 : i32 to index
    %c0_50 = arith.constant 0 : index
    %c0_51 = arith.constant 0 : index
    %181 = vector.load %arg6[%180, %c0_50, %c0_51] : memref<8x2x128xbf16, #tpu.memory_space<vmem>>, vector<1x2x128xbf16>
    %182 = vector.shape_cast %181 : vector<1x2x128xbf16> to vector<2x128xbf16>
    %183 = vector.shape_cast %179 : vector<2x128xbf16> to vector<1x2x128xbf16>
    tpu.vector_store %arg6[%180, %c0_50, %c0_51], %183 {strides = array<i32>} : memref<8x2x128xbf16, #tpu.memory_space<vmem>>, vector<1x2x128xbf16>,
    %c6_i32 = arith.constant 6 : i32
    %184 = arith.index_cast %c6_i32 : i32 to index
    %c0_52 = arith.constant 0 : index
    %c0_53 = arith.constant 0 : index
    %185 = vector.load %arg2[%184, %c0_52, %c0_53] : memref<8x2x16xbf16, #tpu.memory_space<vmem>>, vector<1x2x16xbf16>
    %186 = vector.shape_cast %185 : vector<1x2x16xbf16> to vector<2x16xbf16>
    %cst_54 = arith.constant dense<0.000000e+00> : vector<2x512xf32>
    %187 = tpu.matmul %186, %3, %cst_54 {dimension_numbers = #tpu.dot_dimension_numbers<[1], [0], [0], [1], [0, 0, 1, 1], [], []>} : vector<2x16xbf16>, vector<16x512xbf16>, vector<2x512xf32> -> vector<2x512xf32>
    %188 = arith.addf %187, %7 : vector<2x512xf32>
    %189 = arith.truncf %178 : vector<2x128xf32> to vector<2x128xbf16>
    %cst_55 = arith.constant dense<0.000000e+00> : vector<2x512xf32>
    %190 = tpu.matmul %189, %4, %cst_55 {dimension_numbers = #tpu.dot_dimension_numbers<[1], [0], [0], [1], [0, 0, 1, 1], [], []>} : vector<2x128xbf16>, vector<128x512xbf16>, vector<2x512xf32> -> vector<2x512xf32>
    %191 = arith.addf %188, %190 : vector<2x512xf32>
    %192 = vector.extract_strided_slice %191 {offsets = [0, 0], sizes = [2, 384], strides = [1, 1]} : vector<2x512xf32> to vector<2x384xf32>
    %193 = arith.negf %192 : vector<2x384xf32>
    %194 = math.exp %193 : vector<2x384xf32>
    %cst_56 = arith.constant 1.000000e+00 : f32
    %195 = vector.broadcast %cst_56 : f32 to vector<2x384xf32>
    %196 = arith.addf %195, %194 : vector<2x384xf32>
    %197 = arith.divf %195, %196 : vector<2x384xf32>
    %198 = vector.extract_strided_slice %191 {offsets = [0, 384], sizes = [2, 128], strides = [1, 1]} : vector<2x512xf32> to vector<2x128xf32>
    %199 = math.tanh %198 : vector<2x128xf32>
    %200 = vector.extract_strided_slice %197 {offsets = [0, 0], sizes = [2, 128], strides = [1, 1]} : vector<2x384xf32> to vector<2x128xf32>
    %201 = vector.extract_strided_slice %197 {offsets = [0, 128], sizes = [2, 128], strides = [1, 1]} : vector<2x384xf32> to vector<2x128xf32>
    %202 = vector.extract_strided_slice %197 {offsets = [0, 256], sizes = [2, 128], strides = [1, 1]} : vector<2x384xf32> to vector<2x128xf32>
    %203 = arith.mulf %201, %176 : vector<2x128xf32>
    %204 = arith.mulf %200, %199 : vector<2x128xf32>
    %205 = arith.addf %203, %204 : vector<2x128xf32>
    %206 = math.tanh %205 : vector<2x128xf32>
    %207 = arith.mulf %202, %206 : vector<2x128xf32>
    %208 = arith.truncf %207 : vector<2x128xf32> to vector<2x128xbf16>
    %209 = arith.index_cast %c6_i32 : i32 to index
    %c0_57 = arith.constant 0 : index
    %c0_58 = arith.constant 0 : index
    %210 = vector.load %arg6[%209, %c0_57, %c0_58] : memref<8x2x128xbf16, #tpu.memory_space<vmem>>, vector<1x2x128xbf16>
    %211 = vector.shape_cast %210 : vector<1x2x128xbf16> to vector<2x128xbf16>
    %212 = vector.shape_cast %208 : vector<2x128xbf16> to vector<1x2x128xbf16>
    tpu.vector_store %arg6[%209, %c0_57, %c0_58], %212 {strides = array<i32>} : memref<8x2x128xbf16, #tpu.memory_space<vmem>>, vector<1x2x128xbf16>,
    %c7_i32 = arith.constant 7 : i32
    %213 = arith.index_cast %c7_i32 : i32 to index
    %c0_59 = arith.constant 0 : index
    %c0_60 = arith.constant 0 : index
    %214 = vector.load %arg2[%213, %c0_59, %c0_60] : memref<8x2x16xbf16, #tpu.memory_space<vmem>>, vector<1x2x16xbf16>
    %215 = vector.shape_cast %214 : vector<1x2x16xbf16> to vector<2x16xbf16>
    %cst_61 = arith.constant dense<0.000000e+00> : vector<2x512xf32>
    %216 = tpu.matmul %215, %3, %cst_61 {dimension_numbers = #tpu.dot_dimension_numbers<[1], [0], [0], [1], [0, 0, 1, 1], [], []>} : vector<2x16xbf16>, vector<16x512xbf16>, vector<2x512xf32> -> vector<2x512xf32>
    %217 = arith.addf %216, %7 : vector<2x512xf32>
    %218 = arith.truncf %207 : vector<2x128xf32> to vector<2x128xbf16>
    %cst_62 = arith.constant dense<0.000000e+00> : vector<2x512xf32>
    %219 = tpu.matmul %218, %4, %cst_62 {dimension_numbers = #tpu.dot_dimension_numbers<[1], [0], [0], [1], [0, 0, 1, 1], [], []>} : vector<2x128xbf16>, vector<128x512xbf16>, vector<2x512xf32> -> vector<2x512xf32>
    %220 = arith.addf %217, %219 : vector<2x512xf32>
    %221 = vector.extract_strided_slice %220 {offsets = [0, 0], sizes = [2, 384], strides = [1, 1]} : vector<2x512xf32> to vector<2x384xf32>
    %222 = arith.negf %221 : vector<2x384xf32>
    %223 = math.exp %222 : vector<2x384xf32>
    %cst_63 = arith.constant 1.000000e+00 : f32
    %224 = vector.broadcast %cst_63 : f32 to vector<2x384xf32>
    %225 = arith.addf %224, %223 : vector<2x384xf32>
    %226 = arith.divf %224, %225 : vector<2x384xf32>
    %227 = vector.extract_strided_slice %220 {offsets = [0, 384], sizes = [2, 128], strides = [1, 1]} : vector<2x512xf32> to vector<2x128xf32>
    %228 = math.tanh %227 : vector<2x128xf32>
    %229 = vector.extract_strided_slice %226 {offsets = [0, 0], sizes = [2, 128], strides = [1, 1]} : vector<2x384xf32> to vector<2x128xf32>
    %230 = vector.extract_strided_slice %226 {offsets = [0, 128], sizes = [2, 128], strides = [1, 1]} : vector<2x384xf32> to vector<2x128xf32>
    %231 = vector.extract_strided_slice %226 {offsets = [0, 256], sizes = [2, 128], strides = [1, 1]} : vector<2x384xf32> to vector<2x128xf32>
    %232 = arith.mulf %230, %205 : vector<2x128xf32>
    %233 = arith.mulf %229, %228 : vector<2x128xf32>
    %234 = arith.addf %232, %233 : vector<2x128xf32>
    %235 = math.tanh %234 : vector<2x128xf32>
    %236 = arith.mulf %231, %235 : vector<2x128xf32>
    %237 = arith.truncf %236 : vector<2x128xf32> to vector<2x128xbf16>
    %238 = arith.index_cast %c7_i32 : i32 to index
    %c0_64 = arith.constant 0 : index
    %c0_65 = arith.constant 0 : index
    %239 = vector.load %arg6[%238, %c0_64, %c0_65] : memref<8x2x128xbf16, #tpu.memory_space<vmem>>, vector<1x2x128xbf16>
    %240 = vector.shape_cast %239 : vector<1x2x128xbf16> to vector<2x128xbf16>
    %241 = vector.shape_cast %237 : vector<2x128xbf16> to vector<1x2x128xbf16>
    tpu.vector_store %arg6[%238, %c0_64, %c0_65], %241 {strides = array<i32>} : memref<8x2x128xbf16, #tpu.memory_space<vmem>>, vector<1x2x128xbf16>,
    %c8_i32 = arith.constant 8 : i32
    %c0_66 = arith.constant 0 : index
    %c0_67 = arith.constant 0 : index
    %242 = vector.load %arg7[%c0_66, %c0_67] : memref<2x128xf32, #tpu.memory_space<vmem>>, vector<2x128xf32>
    tpu.vector_store %arg7[%c0_66, %c0_67], %236 {strides = array<i32>} : memref<2x128xf32, #tpu.memory_space<vmem>>, vector<2x128xf32>,
    %c0_68 = arith.constant 0 : index
    %c0_69 = arith.constant 0 : index
    %243 = vector.load %arg8[%c0_68, %c0_69] : memref<2x128xf32, #tpu.memory_space<vmem>>, vector<2x128xf32>
    tpu.vector_store %arg8[%c0_68, %c0_69], %234 {strides = array<i32>} : memref<2x128xf32, #tpu.memory_space<vmem>>, vector<2x128xf32>,
    return
  }
  func.func @transform_0(%arg0: i32, %arg1: i32) -> (i32, i32, i32) {
    %c0_i32 = arith.constant 0 : i32
    %c0_i32_0 = arith.constant 0 : i32
    return %arg1, %arg0, %c0_i32 : i32, i32, i32
  }
  func.func @transform_1(%arg0: i32, %arg1: i32) -> (i32, i32) {
    %c0_i32 = arith.constant 0 : i32
    %c0_i32_0 = arith.constant 0 : i32
    %c0_i32_1 = arith.constant 0 : i32
    return %c0_i32, %c0_i32_0 : i32, i32
  }
  func.func @transform_2(%arg0: i32, %arg1: i32) -> (i32, i32) {
    %c0_i32 = arith.constant 0 : i32
    %c0_i32_0 = arith.constant 0 : i32
    %c0_i32_1 = arith.constant 0 : i32
    return %c0_i32, %c0_i32_0 : i32, i32
  }
  func.func @transform_3(%arg0: i32, %arg1: i32) -> (i32, i32) {
    %c0_i32 = arith.constant 0 : i32
    %c0_i32_0 = arith.constant 0 : i32
    %c0_i32_1 = arith.constant 0 : i32
    return %c0_i32, %c0_i32_0 : i32, i32
  }
  func.func @transform_4(%arg0: i32, %arg1: i32) -> (i32, i32, i32) {
    %c0_i32 = arith.constant 0 : i32
    %c0_i32_0 = arith.constant 0 : i32
    return %arg1, %arg0, %c0_i32 : i32, i32, i32
  }
}

</mosaic_0001>

<llo_original>
// kernel: rnn_model_forward.2
$region0: #{rnn_model_forward.2}
  #allocation0 [shape = 'u32[]', space=smem, size = 0x4, offset = 0x4, fixed_abs, tag = 'smem constant byte address 0x4 - core index']
  #allocation1 [shape = 'u32[144,128]{1,0:T(1,128)}', space=vmem, size = 0x12000, scoped, tag = 'internal scratch']
  #allocation2 [shape = 'f32[2,128]{1,0:T(2,128)}', space=vmem, size = 0x400, scoped, tag = 'scratch operand']
  #allocation3 [shape = 'f32[2,128]{1,0:T(2,128)}', space=vmem, size = 0x400, scoped, tag = 'scratch operand']
  %s0 = inlined_call_operand.hbm [shape: bf16[8,2,16], index: 0, kind: input, shape index: {}]
  %s1 = inlined_call_operand.hbm [shape: bf16[16,512], index: 1, kind: input, shape index: {}]
  %s2 = inlined_call_operand.hbm [shape: f32[1,512], index: 2, kind: input, shape index: {}]
  %s3 = inlined_call_operand.hbm [shape: bf16[128,512], index: 3, kind: input, shape index: {}]
  %s4 = inlined_call_operand.hbm [shape: bf16[8,2,128], index: 4, kind: output, shape index: {}]
  %s5 = sld [smem:[#allocation0]]
  $region46: #{rnn_model_forward.2} parent=0
    _
  %s7 = ssub.s32 1, %s5
  %s8 = scalar_select 0, %s7, %s5
  $region1: #{rnn_model_forward.2} parent=0
    #allocation4 [shape = 'u8[4096]{0}', space=vmem, size = 0x1000, scoped, tag = 'input window, operand 0, single buffered']
    #allocation5 [shape = 's32[1]{0}', space=sflag, size = 0x4, scoped, tag = 'scoped memory for rnn_model_forward.2']
    #allocation6 [shape = 's32[1]{0}', space=sflag, size = 0x4, scoped, tag = 'scoped memory for rnn_model_forward.2']
    #allocation7 [shape = 'u8[16384]{0}', space=vmem, size = 0x4000, scoped, tag = 'input window, operand 1, single buffered']
    #allocation8 [shape = 's32[1]{0}', space=sflag, size = 0x4, scoped, tag = 'scoped memory for rnn_model_forward.2']
    #allocation9 [shape = 'u8[2048]{0}', space=vmem, size = 0x800, scoped, tag = 'input window, operand 2, single buffered']
    #allocation10 [shape = 'u8[131072]{0}', space=vmem, size = 0x20000, scoped, tag = 'input window, operand 3, single buffered']
    #allocation11 [shape = 's32[1]{0}', space=sflag, size = 0x4, scoped, tag = 'scoped memory for rnn_model_forward.2']
    #allocation12 [shape = 'u8[4096]{0}', space=vmem, size = 0x1000, scoped, tag = 'output window, operand 0, single buffered']
    %9 = vsyncpa [#allocation5], 0
    %10 = vsyncpa [#allocation8], 0
    %11 = vsyncpa [#allocation11], 0
    %12 = vsyncpa [#allocation6], 0
    // Predicated region
    $region2: #{rnn_model_forward.2} parent=1 // pred_check
      _
    $region3: #{rnn_model_forward.2} parent=1 // pred_check_branch
      %14 = sbr.rel (0) target = $region5
    $region4: #{rnn_model_forward.2} parent=1 // pred_region
      %s16 = ssub.s32 128, 128
      %17 = vsyncadd [#allocation5], %s16
      %s18 = sshll.u32 [#allocation4], 4
      %s19 = int_to_ptr.vmem [resolvable:$true] %s18
      %24 = dma.hbm_to_vmem [thread:$0]  %s0, 128, %s19, [#allocation5], 16, 16, 1
    $region5: #{rnn_model_forward.2} parent=1 // pred_fallthru
      _
    // Predicated region
    $region6: #{rnn_model_forward.2} parent=1 // pred_check
      _
    $region7: #{rnn_model_forward.2} parent=1 // pred_check_branch
      %26 = sbr.rel (0) target = $region9
    $region8: #{rnn_model_forward.2} parent=1 // pred_region
      %s28 = ssub.s32 512, 512
      %29 = vsyncadd [#allocation8], %s28
      %s30 = sshll.u32 [#allocation7], 4
      %s31 = int_to_ptr.vmem [resolvable:$true] %s30
      %36 = dma.hbm_to_vmem [thread:$0]  %s1, 512, %s31, [#allocation8], 256, 256, 16
    $region9: #{rnn_model_forward.2} parent=1 // pred_fallthru
      _
    // Predicated region
    $region10: #{rnn_model_forward.2} parent=1 // pred_check
      _
    $region11: #{rnn_model_forward.2} parent=1 // pred_check_branch
      %38 = sbr.rel (0) target = $region13
    $region12: #{rnn_model_forward.2} parent=1 // pred_region
      %s40 = ssub.s32 64, 64
      %41 = vsyncadd [#allocation8], %s40
      %s43 = sshll.u32 [#allocation9], 4
      %s44 = int_to_ptr.vmem [resolvable:$true] %s43
      %46 = dma.hbm_to_vmem [thread:$0]  %s2, 64, %s44, [#allocation8]
    $region13: #{rnn_model_forward.2} parent=1 // pred_fallthru
      _
    // Predicated region
    $region14: #{rnn_model_forward.2} parent=1 // pred_check
      _
    $region15: #{rnn_model_forward.2} parent=1 // pred_check_branch
      %48 = sbr.rel (0) target = $region17
    $region16: #{rnn_model_forward.2} parent=1 // pred_region
      %s50 = ssub.s32 4096, 4096
      %51 = vsyncadd [#allocation11], %s50
      %s52 = sshll.u32 [#allocation10], 4
      %s53 = int_to_ptr.vmem [resolvable:$true] %s52
      %58 = dma.hbm_to_vmem [thread:$0]  %s3, 4096, %s53, [#allocation11], 256, 256, 16
    $region17: #{rnn_model_forward.2} parent=1 // pred_fallthru
      _
    // Predicated region
    $region18: #{rnn_model_forward.2} parent=1 // pred_check
      _
    $region19: #{rnn_model_forward.2} parent=1 // pred_check_branch
      %60 = sbr.rel (0) target = $region21
    $region20: #{rnn_model_forward.2} parent=1 // pred_region
      %61 = dma.done [#allocation5], 128
    $region21: #{rnn_model_forward.2} parent=1 // pred_fallthru
      _
    // Predicated region
    $region22: #{rnn_model_forward.2} parent=1 // pred_check
      _
    $region23: #{rnn_model_forward.2} parent=1 // pred_check_branch
      %63 = sbr.rel (0) target = $region25
    $region24: #{rnn_model_forward.2} parent=1 // pred_region
      %64 = dma.done [#allocation8], 512
    $region25: #{rnn_model_forward.2} parent=1 // pred_fallthru
      _
    // Predicated region
    $region26: #{rnn_model_forward.2} parent=1 // pred_check
      _
    $region27: #{rnn_model_forward.2} parent=1 // pred_check_branch
      %66 = sbr.rel (0) target = $region29
    $region28: #{rnn_model_forward.2} parent=1 // pred_region
      %67 = dma.done [#allocation8], 64
    $region29: #{rnn_model_forward.2} parent=1 // pred_fallthru
      _
    // Predicated region
    $region30: #{rnn_model_forward.2} parent=1 // pred_check
      _
    $region31: #{rnn_model_forward.2} parent=1 // pred_check_branch
      %69 = sbr.rel (0) target = $region33
    $region32: #{rnn_model_forward.2} parent=1 // pred_region
      %70 = dma.done [#allocation11], 4096
    $region33: #{rnn_model_forward.2} parent=1 // pred_fallthru
      _
    %p72 = scmp.eq.s32.totalorder 0, 0
    // Predicated region
    $region34: #{rnn_model_forward.2} parent=1 // pred_check
      %p73 = pneg %p72
    $region35: #{rnn_model_forward.2} parent=1 // pred_check_branch
      %75 = sbr.rel (%p73) target = $region37
    $region36: #{rnn_model_forward.2} parent=1 // pred_region
      %76 = vst [vmem:[#allocation2] sm:$0x3] 0.0
      %77 = vst [vmem:[#allocation3] sm:$0x3] 0.0
    $region37: #{rnn_model_forward.2} parent=1 // pred_fallthru
      _
    %v78 = vld [vmem:[#allocation7] sm:$0xff]
    %v79 = vld [vmem:[#allocation7 + $0x8] sm:$0xff]
    %v80 = vld [vmem:[#allocation7 + $0x10] sm:$0xff]
    %v81 = vld [vmem:[#allocation7 + $0x18] sm:$0xff]
    %v82 = vld [vmem:[#allocation10] sm:$0xff]
    %v83 = vld [vmem:[#allocation10 + $0x8] sm:$0xff]
    %v84 = vld [vmem:[#allocation10 + $0x10] sm:$0xff]
    %v85 = vld [vmem:[#allocation10 + $0x18] sm:$0xff]
    %v86 = vld [vmem:[#allocation10 + $0x20] sm:$0xff]
    %v87 = vld [vmem:[#allocation10 + $0x28] sm:$0xff]
    %v88 = vld [vmem:[#allocation10 + $0x30] sm:$0xff]
    %v89 = vld [vmem:[#allocation10 + $0x38] sm:$0xff]
    %v90 = vld [vmem:[#allocation10 + $0x40] sm:$0xff]
    %v91 = vld [vmem:[#allocation10 + $0x48] sm:$0xff]
    %v92 = vld [vmem:[#allocation10 + $0x50] sm:$0xff]
    %v93 = vld [vmem:[#allocation10 + $0x58] sm:$0xff]
    %v94 = vld [vmem:[#allocation10 + $0x60] sm:$0xff]
    %v95 = vld [vmem:[#allocation10 + $0x68] sm:$0xff]
    %v96 = vld [vmem:[#allocation10 + $0x70] sm:$0xff]
    %v97 = vld [vmem:[#allocation10 + $0x78] sm:$0xff]
    %v98 = vld [vmem:[#allocation10 + $0x80] sm:$0xff]
    %v99 = vld [vmem:[#allocation10 + $0x88] sm:$0xff]
    %v100 = vld [vmem:[#allocation10 + $0x90] sm:$0xff]
    %v101 = vld [vmem:[#allocation10 + $0x98] sm:$0xff]
    %v102 = vld [vmem:[#allocation10 + $0xa0] sm:$0xff]
    %v103 = vld [vmem:[#allocation10 + $0xa8] sm:$0xff]
    %v104 = vld [vmem:[#allocation10 + $0xb0] sm:$0xff]
    %v105 = vld [vmem:[#allocation10 + $0xb8] sm:$0xff]
    %v106 = vld [vmem:[#allocation10 + $0xc0] sm:$0xff]
    %v107 = vld [vmem:[#allocation10 + $0xc8] sm:$0xff]
    %v108 = vld [vmem:[#allocation10 + $0xd0] sm:$0xff]
    %v109 = vld [vmem:[#allocation10 + $0xd8] sm:$0xff]
    %v110 = vld [vmem:[#allocation10 + $0xe0] sm:$0xff]
    %v111 = vld [vmem:[#allocation10 + $0xe8] sm:$0xff]
    %v112 = vld [vmem:[#allocation10 + $0xf0] sm:$0xff]
    %v113 = vld [vmem:[#allocation10 + $0xf8] sm:$0xff]
    %v114 = vld [vmem:[#allocation9] sm:$0xf]
    %v116 = vlaneseq
    %v117 = vshrl.u32 %v116, 7
    %v118 = vsub.s32 0, %v117
    %v119 = vrot.slane %v114, %v118
    %v120 = vlaneseq
    %v121 = vshrl.u32 %v120, 7
    %v122 = vsub.s32 1, %v121
    %v123 = vrot.slane %v114, %v122
    %v124 = vlaneseq
    %v125 = vshrl.u32 %v124, 7
    %v126 = vsub.s32 2, %v125
    %v127 = vrot.slane %v114, %v126
    %v128 = vlaneseq
    %v129 = vshrl.u32 %v128, 7
    %v130 = vsub.s32 3, %v129
    %v131 = vrot.slane %v114, %v130
    %v136 = vld [vmem:[#allocation2] sm:$0x3]
    %v137 = vld [vmem:[#allocation3] sm:$0x3]
    %v138 = vld [vmem:[#allocation4] sm:$0x1]
    %v143 = vunpack.c.l.b16 %v78
    %v144 = vunpack.c.h.b16 %v78
    %v145 = vunpack.c.l.b16 %v79
    %v146 = vunpack.c.h.b16 %v79
    %v147 = vunpack.c.l.b16 %v80
    %v148 = vunpack.c.h.b16 %v80
    %v149 = vunpack.c.l.b16 %v81
    %v150 = vunpack.c.h.b16 %v81
    %v151 = vpack.c.b16 %v147, %v143
    %v152 = vpack.c.b16 %v148, %v144
    %v153 = vpack.c.b16 %v149, %v145
    %v154 = vpack.c.b16 %v150, %v146
    %vm159 = vcmask 130048
    %v161 = vsel %vm159, %v138, 0
    %163 = vmatprep.subr.bf16.mxu0 %v152
    %164 = vmatpush1.bf16.msra.mxu0 %v151
    %165 = vmatprep.subr.bf16.mxu0 0
    %166 = vmatpush1.bf16.msra.mxu0 0
    %167 = vmatprep.subr.bf16.mxu0 0
    %168 = vmatpush1.bf16.msra.mxu0 0
    %169 = vmatprep.subr.bf16.mxu0 0
    %170 = vmatpush1.bf16.msra.mxu0 0
    %171 = vmatprep.subr.bf16.mxu0 0
    %172 = vmatpush1.bf16.msra.mxu0 0
    %173 = vmatprep.subr.bf16.mxu0 0
    %174 = vmatpush1.bf16.msra.mxu0 0
    %175 = vmatprep.subr.bf16.mxu0 0
    %176 = vmatpush1.bf16.msra.mxu0 0
    %177 = vmatprep.subr.bf16.mxu0 0
    %178 = vmatpush1.bf16.msra.mxu0 0
    %179 = vmatprep.subr.bf16.mxu0 0
    %180 = vmatpush1.bf16.msra.mxu0 0
    %181 = vmatprep.subr.bf16.mxu0 0
    %182 = vmatpush1.bf16.msra.mxu0 0
    %183 = vmatprep.subr.bf16.mxu0 0
    %184 = vmatpush1.bf16.msra.mxu0 0
    %185 = vmatprep.subr.bf16.mxu0 0
    %186 = vmatpush1.bf16.msra.mxu0 0
    %187 = vmatprep.subr.bf16.mxu0 0
    %188 = vmatpush1.bf16.msra.mxu0 0
    %189 = vmatprep.subr.bf16.mxu0 0
    %190 = vmatpush1.bf16.msra.mxu0 0
    %191 = vmatprep.subr.bf16.mxu0 0
    %192 = vmatpush1.bf16.msra.mxu0 0
    %193 = vmatprep.subr.bf16.mxu0 0
    %194 = vmatpush1.bf16.msra.mxu0 0
    %195 = vmatprep.mubr.bf16.mxu0 0
    %196 = vmatmul.mubr.bf16.gmra.mrb[0].mxu0 %v161
    %v197 = vpop.f32.mrb[0].mxu0
    %v198 = vadd.f32 %v119, %v197
    %v199 = vpop.f32.mrb[0].mxu0
    %v200 = vadd.f32 %v123, %v199
    %v201 = vpop.f32.mrb[0].mxu0
    %v202 = vpop.f32.mrb[0].mxu0
    %203 = vdwg.mxu0
    %204 = vmatprep.subr.bf16.mxu0 %v154
    %205 = vmatpush1.bf16.msra.mxu0 %v153
    %206 = vmatprep.subr.bf16.mxu0 0
    %207 = vmatpush1.bf16.msra.mxu0 0
    %208 = vmatprep.subr.bf16.mxu0 0
    %209 = vmatpush1.bf16.msra.mxu0 0
    %210 = vmatprep.subr.bf16.mxu0 0
    %211 = vmatpush1.bf16.msra.mxu0 0
    %212 = vmatprep.subr.bf16.mxu0 0
    %213 = vmatpush1.bf16.msra.mxu0 0
    %214 = vmatprep.subr.bf16.mxu0 0
    %215 = vmatpush1.bf16.msra.mxu0 0
    %216 = vmatprep.subr.bf16.mxu0 0
    %217 = vmatpush1.bf16.msra.mxu0 0
    %218 = vmatprep.subr.bf16.mxu0 0
    %219 = vmatpush1.bf16.msra.mxu0 0
    %220 = vmatprep.subr.bf16.mxu0 0
    %221 = vmatpush1.bf16.msra.mxu0 0
    %222 = vmatprep.subr.bf16.mxu0 0
    %223 = vmatpush1.bf16.msra.mxu0 0
    %224 = vmatprep.subr.bf16.mxu0 0
    %225 = vmatpush1.bf16.msra.mxu0 0
    %226 = vmatprep.subr.bf16.mxu0 0
    %227 = vmatpush1.bf16.msra.mxu0 0
    %228 = vmatprep.subr.bf16.mxu0 0
    %229 = vmatpush1.bf16.msra.mxu0 0
    %230 = vmatprep.subr.bf16.mxu0 0
    %231 = vmatpush1.bf16.msra.mxu0 0
    %232 = vmatprep.subr.bf16.mxu0 0
    %233 = vmatpush1.bf16.msra.mxu0 0
    %234 = vmatprep.subr.bf16.mxu0 0
    %235 = vmatpush1.bf16.msra.mxu0 0
    %236 = vmatprep.mubr.bf16.mxu0 0
    %237 = vmatmul.mubr.bf16.gmra.mrb[0].mxu0 %v161
    %v238 = vpop.f32.mrb[0].mxu0
    %v239 = vadd.f32 %v127, %v238
    %v240 = vpop.f32.mrb[0].mxu0
    %v241 = vadd.f32 %v131, %v240
    %v242 = vpop.f32.mrb[0].mxu0
    %v243 = vpop.f32.mrb[0].mxu0
    %244 = vdwg.mxu0
    %v245 = vpack.c.bf16 %v136, %v136
    %v278 = vunpack.c.l.b16 %v82
    %v279 = vunpack.c.h.b16 %v82
    %v280 = vunpack.c.l.b16 %v83
    %v281 = vunpack.c.h.b16 %v83
    %v282 = vunpack.c.l.b16 %v84
    %v283 = vunpack.c.h.b16 %v84
    %v284 = vunpack.c.l.b16 %v85
    %v285 = vunpack.c.h.b16 %v85
    %v286 = vunpack.c.l.b16 %v86
    %v287 = vunpack.c.h.b16 %v86
    %v288 = vunpack.c.l.b16 %v87
    %v289 = vunpack.c.h.b16 %v87
    %v290 = vunpack.c.l.b16 %v88
    %v291 = vunpack.c.h.b16 %v88
    %v292 = vunpack.c.l.b16 %v89
    %v293 = vunpack.c.h.b16 %v89
    %v294 = vunpack.c.l.b16 %v90
    %v295 = vunpack.c.h.b16 %v90
    %v296 = vunpack.c.l.b16 %v91
    %v297 = vunpack.c.h.b16 %v91
    %v298 = vunpack.c.l.b16 %v92
    %v299 = vunpack.c.h.b16 %v92
    %v300 = vunpack.c.l.b16 %v93
    %v301 = vunpack.c.h.b16 %v93
    %v302 = vunpack.c.l.b16 %v94
    %v303 = vunpack.c.h.b16 %v94
    %v304 = vunpack.c.l.b16 %v95
    %v305 = vunpack.c.h.b16 %v95
    %v306 = vunpack.c.l.b16 %v96
    %v307 = vunpack.c.h.b16 %v96
    %v308 = vunpack.c.l.b16 %v97
    %v309 = vunpack.c.h.b16 %v97
    %v310 = vunpack.c.l.b16 %v98
    %v311 = vunpack.c.h.b16 %v98
    %v312 = vunpack.c.l.b16 %v99
    %v313 = vunpack.c.h.b16 %v99
    %v314 = vunpack.c.l.b16 %v100
    %v315 = vunpack.c.h.b16 %v100
    %v316 = vunpack.c.l.b16 %v101
    %v317 = vunpack.c.h.b16 %v101
    %v318 = vunpack.c.l.b16 %v102
    %v319 = vunpack.c.h.b16 %v102
    %v320 = vunpack.c.l.b16 %v103
    %v321 = vunpack.c.h.b16 %v103
    %v322 = vunpack.c.l.b16 %v104
    %v323 = vunpack.c.h.b16 %v104
    %v324 = vunpack.c.l.b16 %v105
    %v325 = vunpack.c.h.b16 %v105
    %v326 = vunpack.c.l.b16 %v106
    %v327 = vunpack.c.h.b16 %v106
    %v328 = vunpack.c.l.b16 %v107
    %v329 = vunpack.c.h.b16 %v107
    %v330 = vunpack.c.l.b16 %v108
    %v331 = vunpack.c.h.b16 %v108
    %v332 = vunpack.c.l.b16 %v109
    %v333 = vunpack.c.h.b16 %v109
    %v334 = vunpack.c.l.b16 %v110
    %v335 = vunpack.c.h.b16 %v110
    %v336 = vunpack.c.l.b16 %v111
    %v337 = vunpack.c.h.b16 %v111
    %v338 = vunpack.c.l.b16 %v112
    %v339 = vunpack.c.h.b16 %v112
    %v340 = vunpack.c.l.b16 %v113
    %v341 = vunpack.c.h.b16 %v113
    %v342 = vpack.c.b16 %v282, %v278
    %v343 = vpack.c.b16 %v283, %v279
    %v344 = vpack.c.b16 %v284, %v280
    %v345 = vpack.c.b16 %v285, %v281
    %v346 = vpack.c.b16 %v290, %v286
    %v347 = vpack.c.b16 %v291, %v287
    %v348 = vpack.c.b16 %v292, %v288
    %v349 = vpack.c.b16 %v293, %v289
    %v350 = vpack.c.b16 %v298, %v294
    %v351 = vpack.c.b16 %v299, %v295
    %v352 = vpack.c.b16 %v300, %v296
    %v353 = vpack.c.b16 %v301, %v297
    %v354 = vpack.c.b16 %v306, %v302
    %v355 = vpack.c.b16 %v307, %v303
    %v356 = vpack.c.b16 %v308, %v304
    %v357 = vpack.c.b16 %v309, %v305
    %v358 = vpack.c.b16 %v314, %v310
    %v359 = vpack.c.b16 %v315, %v311
    %v360 = vpack.c.b16 %v316, %v312
    %v361 = vpack.c.b16 %v317, %v313
    %v362 = vpack.c.b16 %v322, %v318
    %v363 = vpack.c.b16 %v323, %v319
    %v364 = vpack.c.b16 %v324, %v320
    %v365 = vpack.c.b16 %v325, %v321
    %v366 = vpack.c.b16 %v330, %v326
    %v367 = vpack.c.b16 %v331, %v327
    %v368 = vpack.c.b16 %v332, %v328
    %v369 = vpack.c.b16 %v333, %v329
    %v370 = vpack.c.b16 %v338, %v334
    %v371 = vpack.c.b16 %v339, %v335
    %v372 = vpack.c.b16 %v340, %v336
    %v373 = vpack.c.b16 %v341, %v337
    %406 = vmatprep.subr.bf16.mxu0 %v343
    %407 = vmatpush1.bf16.msra.mxu0 %v342
    %408 = vmatprep.subr.bf16.mxu0 %v347
    %409 = vmatpush1.bf16.msra.mxu0 %v346
    %410 = vmatprep.subr.bf16.mxu0 %v351
    %411 = vmatpush1.bf16.msra.mxu0 %v350
    %412 = vmatprep.subr.bf16.mxu0 %v355
    %413 = vmatpush1.bf16.msra.mxu0 %v354
    %414 = vmatprep.subr.bf16.mxu0 %v359
    %415 = vmatpush1.bf16.msra.mxu0 %v358
    %416 = vmatprep.subr.bf16.mxu0 %v363
    %417 = vmatpush1.bf16.msra.mxu0 %v362
    %418 = vmatprep.subr.bf16.mxu0 %v367
    %419 = vmatpush1.bf16.msra.mxu0 %v366
    %420 = vmatprep.subr.bf16.mxu0 %v371
    %421 = vmatpush1.bf16.msra.mxu0 %v370
    %422 = vmatprep.subr.bf16.mxu0 0
    %423 = vmatpush1.bf16.msra.mxu0 0
    %424 = vmatprep.subr.bf16.mxu0 0
    %425 = vmatpush1.bf16.msra.mxu0 0
    %426 = vmatprep.subr.bf16.mxu0 0
    %427 = vmatpush1.bf16.msra.mxu0 0
    %428 = vmatprep.subr.bf16.mxu0 0
    %429 = vmatpush1.bf16.msra.mxu0 0
    %430 = vmatprep.subr.bf16.mxu0 0
    %431 = vmatpush1.bf16.msra.mxu0 0
    %432 = vmatprep.subr.bf16.mxu0 0
    %433 = vmatpush1.bf16.msra.mxu0 0
    %434 = vmatprep.subr.bf16.mxu0 0
    %435 = vmatpush1.bf16.msra.mxu0 0
    %436 = vmatprep.subr.bf16.mxu0 0
    %437 = vmatpush1.bf16.msra.mxu0 0
    %438 = vmatprep.mubr.bf16.mxu0 0
    %439 = vmatmul.mubr.bf16.gmra.mrb[0].mxu0 %v245
    %v440 = vpop.f32.mrb[0].mxu0
    %v441 = vadd.f32 0.0, %v440
    %v442 = vpop.f32.mrb[0].mxu0
    %v443 = vadd.f32 0.0, %v442
    %v444 = vpop.f32.mrb[0].mxu0
    %v445 = vpop.f32.mrb[0].mxu0
    %446 = vdwg.mxu0
    %447 = vmatprep.subr.bf16.mxu0 %v345
    %448 = vmatpush1.bf16.msra.mxu0 %v344
    %449 = vmatprep.subr.bf16.mxu0 %v349
    %450 = vmatpush1.bf16.msra.mxu0 %v348
    %451 = vmatprep.subr.bf16.mxu0 %v353
    %452 = vmatpush1.bf16.msra.mxu0 %v352
    %453 = vmatprep.subr.bf16.mxu0 %v357
    %454 = vmatpush1.bf16.msra.mxu0 %v356
    %455 = vmatprep.subr.bf16.mxu0 %v361
    %456 = vmatpush1.bf16.msra.mxu0 %v360
    %457 = vmatprep.subr.bf16.mxu0 %v365
    %458 = vmatpush1.bf16.msra.mxu0 %v364
    %459 = vmatprep.subr.bf16.mxu0 %v369
    %460 = vmatpush1.bf16.msra.mxu0 %v368
    %461 = vmatprep.subr.bf16.mxu0 %v373
    %462 = vmatpush1.bf16.msra.mxu0 %v372
    %463 = vmatprep.subr.bf16.mxu0 0
    %464 = vmatpush1.bf16.msra.mxu0 0
    %465 = vmatprep.subr.bf16.mxu0 0
    %466 = vmatpush1.bf16.msra.mxu0 0
    %467 = vmatprep.subr.bf16.mxu0 0
    %468 = vmatpush1.bf16.msra.mxu0 0
    %469 = vmatprep.subr.bf16.mxu0 0
    %470 = vmatpush1.bf16.msra.mxu0 0
    %471 = vmatprep.subr.bf16.mxu0 0
    %472 = vmatpush1.bf16.msra.mxu0 0
    %473 = vmatprep.subr.bf16.mxu0 0
    %474 = vmatpush1.bf16.msra.mxu0 0
    %475 = vmatprep.subr.bf16.mxu0 0
    %476 = vmatpush1.bf16.msra.mxu0 0
    %477 = vmatprep.subr.bf16.mxu0 0
    %478 = vmatpush1.bf16.msra.mxu0 0
    %479 = vmatprep.mubr.bf16.mxu0 0
    %480 = vmatmul.mubr.bf16.gmra.mrb[0].mxu0 %v245
    %v481 = vpop.f32.mrb[0].mxu0
    %v482 = vadd.f32 0.0, %v481
    %v483 = vpop.f32.mrb[0].mxu0
    %v484 = vadd.f32 0.0, %v483
    %v485 = vpop.f32.mrb[0].mxu0
    %v486 = vpop.f32.mrb[0].mxu0
    %487 = vdwg.mxu0
    %v488 = vadd.f32 %v198, %v441
    %v489 = vadd.f32 %v200, %v443
    %v490 = vadd.f32 %v239, %v482
    %v491 = vadd.f32 %v241, %v484
    %v492 = vxor.u32 %v488, 2147483648
    %v493 = vxor.u32 %v489, 2147483648
    %v494 = vxor.u32 %v490, 2147483648
    %v495 = vmul.f32 %v492, 1.442695
    %v496 = vpow.pop %v495
    %v497 = vmul.f32 %v493, 1.442695
    %v498 = vpow.pop %v497
    %v499 = vmul.f32 %v494, 1.442695
    %v500 = vpow.pop %v499
    %v501 = vadd.f32 %v496, 1.0
    %v502 = vadd.f32 %v498, 1.0
    %v503 = vadd.f32 %v500, 1.0
    %v504 = vrcp.pop %v501
    %v505 = vmul.f32 1.0, %v504
    %v506 = vrcp.pop %v502
    %v507 = vmul.f32 1.0, %v506
    %v508 = vrcp.pop %v503
    %v509 = vmul.f32 1.0, %v508
    %v510 = vtanh.pop %v491
    %v511 = vmul.f32 %v507, %v137
    %v512 = vmul.f32 %v505, %v510
    %v513 = vadd.f32 %v511, %v512
    %v514 = vtanh.pop %v513
    %v515 = vmul.f32 %v509, %v514
    %v516 = vpack.c.bf16 %v515, %v515
    %517 = vst [vmem:[#allocation12] sm:$0x1] %v516
    %s518 = scalar_lea.vmem [#allocation4], 1
    %v519 = vld [vmem:[%s518] sm:$0x1]
    %v521 = vsel %vm159, %v519, 0
    %523 = vmatprep.subr.bf16.mxu0 %v152
    %524 = vmatpush1.bf16.msra.mxu0 %v151
    %525 = vmatprep.subr.bf16.mxu0 0
    %526 = vmatpush1.bf16.msra.mxu0 0
    %527 = vmatprep.subr.bf16.mxu0 0
    %528 = vmatpush1.bf16.msra.mxu0 0
    %529 = vmatprep.subr.bf16.mxu0 0
    %530 = vmatpush1.bf16.msra.mxu0 0
    %531 = vmatprep.subr.bf16.mxu0 0
    %532 = vmatpush1.bf16.msra.mxu0 0
    %533 = vmatprep.subr.bf16.mxu0 0
    %534 = vmatpush1.bf16.msra.mxu0 0
    %535 = vmatprep.subr.bf16.mxu0 0
    %536 = vmatpush1.bf16.msra.mxu0 0
    %537 = vmatprep.subr.bf16.mxu0 0
    %538 = vmatpush1.bf16.msra.mxu0 0
    %539 = vmatprep.subr.bf16.mxu0 0
    %540 = vmatpush1.bf16.msra.mxu0 0
    %541 = vmatprep.subr.bf16.mxu0 0
    %542 = vmatpush1.bf16.msra.mxu0 0
    %543 = vmatprep.subr.bf16.mxu0 0
    %544 = vmatpush1.bf16.msra.mxu0 0
    %545 = vmatprep.subr.bf16.mxu0 0
    %546 = vmatpush1.bf16.msra.mxu0 0
    %547 = vmatprep.subr.bf16.mxu0 0
    %548 = vmatpush1.bf16.msra.mxu0 0
    %549 = vmatprep.subr.bf16.mxu0 0
    %550 = vmatpush1.bf16.msra.mxu0 0
    %551 = vmatprep.subr.bf16.mxu0 0
    %552 = vmatpush1.bf16.msra.mxu0 0
    %553 = vmatprep.subr.bf16.mxu0 0
    %554 = vmatpush1.bf16.msra.mxu0 0
    %555 = vmatprep.mubr.bf16.mxu0 0
    %556 = vmatmul.mubr.bf16.gmra.mrb[0].mxu0 %v521
    %v557 = vpop.f32.mrb[0].mxu0
    %v558 = vadd.f32 %v119, %v557
    %v559 = vpop.f32.mrb[0].mxu0
    %v560 = vadd.f32 %v123, %v559
    %v561 = vpop.f32.mrb[0].mxu0
    %v562 = vpop.f32.mrb[0].mxu0
    %563 = vdwg.mxu0
    %564 = vmatprep.subr.bf16.mxu0 %v154
    %565 = vmatpush1.bf16.msra.mxu0 %v153
    %566 = vmatprep.subr.bf16.mxu0 0
    %567 = vmatpush1.bf16.msra.mxu0 0
    %568 = vmatprep.subr.bf16.mxu0 0
    %569 = vmatpush1.bf16.msra.mxu0 0
    %570 = vmatprep.subr.bf16.mxu0 0
    %571 = vmatpush1.bf16.msra.mxu0 0
    %572 = vmatprep.subr.bf16.mxu0 0
    %573 = vmatpush1.bf16.msra.mxu0 0
    %574 = vmatprep.subr.bf16.mxu0 0
    %575 = vmatpush1.bf16.msra.mxu0 0
    %576 = vmatprep.subr.bf16.mxu0 0
    %577 = vmatpush1.bf16.msra.mxu0 0
    %578 = vmatprep.subr.bf16.mxu0 0
    %579 = vmatpush1.bf16.msra.mxu0 0
    %580 = vmatprep.subr.bf16.mxu0 0
    %581 = vmatpush1.bf16.msra.mxu0 0
    %582 = vmatprep.subr.bf16.mxu0 0
    %583 = vmatpush1.bf16.msra.mxu0 0
    %584 = vmatprep.subr.bf16.mxu0 0
    %585 = vmatpush1.bf16.msra.mxu0 0
    %586 = vmatprep.subr.bf16.mxu0 0
    %587 = vmatpush1.bf16.msra.mxu0 0
    %588 = vmatprep.subr.bf16.mxu0 0
    %589 = vmatpush1.bf16.msra.mxu0 0
    %590 = vmatprep.subr.bf16.mxu0 0
    %591 = vmatpush1.bf16.msra.mxu0 0
    %592 = vmatprep.subr.bf16.mxu0 0
    %593 = vmatpush1.bf16.msra.mxu0 0
    %594 = vmatprep.subr.bf16.mxu0 0
    %595 = vmatpush1.bf16.msra.mxu0 0
    %596 = vmatprep.mubr.bf16.mxu0 0
    %597 = vmatmul.mubr.bf16.gmra.mrb[0].mxu0 %v521
    %v598 = vpop.f32.mrb[0].mxu0
    %v599 = vadd.f32 %v127, %v598
    %v600 = vpop.f32.mrb[0].mxu0
    %v601 = vadd.f32 %v131, %v600
    %v602 = vpop.f32.mrb[0].mxu0
    %v603 = vpop.f32.mrb[0].mxu0
    %604 = vdwg.mxu0
    %605 = vmatprep.subr.bf16.mxu0 %v343
    %606 = vmatpush1.bf16.msra.mxu0 %v342
    %607 = vmatprep.subr.bf16.mxu0 %v347
    %608 = vmatpush1.bf16.msra.mxu0 %v346
    %609 = vmatprep.subr.bf16.mxu0 %v351
    %610 = vmatpush1.bf16.msra.mxu0 %v350
    %611 = vmatprep.subr.bf16.mxu0 %v355
    %612 = vmatpush1.bf16.msra.mxu0 %v354
    %613 = vmatprep.subr.bf16.mxu0 %v359
    %614 = vmatpush1.bf16.msra.mxu0 %v358
    %615 = vmatprep.subr.bf16.mxu0 %v363
    %616 = vmatpush1.bf16.msra.mxu0 %v362
    %617 = vmatprep.subr.bf16.mxu0 %v367
    %618 = vmatpush1.bf16.msra.mxu0 %v366
    %619 = vmatprep.subr.bf16.mxu0 %v371
    %620 = vmatpush1.bf16.msra.mxu0 %v370
    %621 = vmatprep.subr.bf16.mxu0 0
    %622 = vmatpush1.bf16.msra.mxu0 0
    %623 = vmatprep.subr.bf16.mxu0 0
    %624 = vmatpush1.bf16.msra.mxu0 0
    %625 = vmatprep.subr.bf16.mxu0 0
    %626 = vmatpush1.bf16.msra.mxu0 0
    %627 = vmatprep.subr.bf16.mxu0 0
    %628 = vmatpush1.bf16.msra.mxu0 0
    %629 = vmatprep.subr.bf16.mxu0 0
    %630 = vmatpush1.bf16.msra.mxu0 0
    %631 = vmatprep.subr.bf16.mxu0 0
    %632 = vmatpush1.bf16.msra.mxu0 0
    %633 = vmatprep.subr.bf16.mxu0 0
    %634 = vmatpush1.bf16.msra.mxu0 0
    %635 = vmatprep.subr.bf16.mxu0 0
    %636 = vmatpush1.bf16.msra.mxu0 0
    %637 = vmatprep.mubr.bf16.mxu0 0
    %638 = vmatmul.mubr.bf16.gmra.mrb[0].mxu0 %v516
    %v639 = vpop.f32.mrb[0].mxu0
    %v640 = vadd.f32 0.0, %v639
    %v641 = vpop.f32.mrb[0].mxu0
    %v642 = vadd.f32 0.0, %v641
    %v643 = vpop.f32.mrb[0].mxu0
    %v644 = vpop.f32.mrb[0].mxu0
    %645 = vdwg.mxu0
    %646 = vmatprep.subr.bf16.mxu0 %v345
    %647 = vmatpush1.bf16.msra.mxu0 %v344
    %648 = vmatprep.subr.bf16.mxu0 %v349
    %649 = vmatpush1.bf16.msra.mxu0 %v348
    %650 = vmatprep.subr.bf16.mxu0 %v353
    %651 = vmatpush1.bf16.msra.mxu0 %v352
    %652 = vmatprep.subr.bf16.mxu0 %v357
    %653 = vmatpush1.bf16.msra.mxu0 %v356
    %654 = vmatprep.subr.bf16.mxu0 %v361
    %655 = vmatpush1.bf16.msra.mxu0 %v360
    %656 = vmatprep.subr.bf16.mxu0 %v365
    %657 = vmatpush1.bf16.msra.mxu0 %v364
    %658 = vmatprep.subr.bf16.mxu0 %v369
    %659 = vmatpush1.bf16.msra.mxu0 %v368
    %660 = vmatprep.subr.bf16.mxu0 %v373
    %661 = vmatpush1.bf16.msra.mxu0 %v372
    %662 = vmatprep.subr.bf16.mxu0 0
    %663 = vmatpush1.bf16.msra.mxu0 0
    %664 = vmatprep.subr.bf16.mxu0 0
    %665 = vmatpush1.bf16.msra.mxu0 0
    %666 = vmatprep.subr.bf16.mxu0 0
    %667 = vmatpush1.bf16.msra.mxu0 0
    %668 = vmatprep.subr.bf16.mxu0 0
    %669 = vmatpush1.bf16.msra.mxu0 0
    %670 = vmatprep.subr.bf16.mxu0 0
    %671 = vmatpush1.bf16.msra.mxu0 0
    %672 = vmatprep.subr.bf16.mxu0 0
    %673 = vmatpush1.bf16.msra.mxu0 0
    %674 = vmatprep.subr.bf16.mxu0 0
    %675 = vmatpush1.bf16.msra.mxu0 0
    %676 = vmatprep.subr.bf16.mxu0 0
    %677 = vmatpush1.bf16.msra.mxu0 0
    %678 = vmatprep.mubr.bf16.mxu0 0
    %679 = vmatmul.mubr.bf16.gmra.mrb[0].mxu0 %v516
    %v680 = vpop.f32.mrb[0].mxu0
    %v681 = vadd.f32 0.0, %v680
    %v682 = vpop.f32.mrb[0].mxu0
    %v683 = vadd.f32 0.0, %v682
    %v684 = vpop.f32.mrb[0].mxu0
    %v685 = vpop.f32.mrb[0].mxu0
    %686 = vdwg.mxu0
    %v687 = vadd.f32 %v558, %v640
    %v688 = vadd.f32 %v560, %v642
    %v689 = vadd.f32 %v599, %v681
    %v690 = vadd.f32 %v601, %v683
    %v691 = vxor.u32 %v687, 2147483648
    %v692 = vxor.u32 %v688, 2147483648
    %v693 = vxor.u32 %v689, 2147483648
    %v694 = vmul.f32 %v691, 1.442695
    %v695 = vpow.pop %v694
    %v696 = vmul.f32 %v692, 1.442695
    %v697 = vpow.pop %v696
    %v698 = vmul.f32 %v693, 1.442695
    %v699 = vpow.pop %v698
    %v700 = vadd.f32 %v695, 1.0
    %v701 = vadd.f32 %v697, 1.0
    %v702 = vadd.f32 %v699, 1.0
    %v703 = vrcp.pop %v700
    %v704 = vmul.f32 1.0, %v703
    %v705 = vrcp.pop %v701
    %v706 = vmul.f32 1.0, %v705
    %v707 = vrcp.pop %v702
    %v708 = vmul.f32 1.0, %v707
    %v709 = vtanh.pop %v690
    %v710 = vmul.f32 %v706, %v513
    %v711 = vmul.f32 %v704, %v709
    %v712 = vadd.f32 %v710, %v711
    %v713 = vtanh.pop %v712
    %v714 = vmul.f32 %v708, %v713
    %v715 = vpack.c.bf16 %v714, %v714
    %s716 = scalar_lea.vmem [#allocation12], 1
    %717 = vst [vmem:[%s716] sm:$0x1] %v715
    %s718 = scalar_lea.vmem [#allocation4], 2
    %v719 = vld [vmem:[%s718] sm:$0x1]
    %v721 = vsel %vm159, %v719, 0
    %723 = vmatprep.subr.bf16.mxu0 %v152
    %724 = vmatpush1.bf16.msra.mxu0 %v151
    %725 = vmatprep.subr.bf16.mxu0 0
    %726 = vmatpush1.bf16.msra.mxu0 0
    %727 = vmatprep.subr.bf16.mxu0 0
    %728 = vmatpush1.bf16.msra.mxu0 0
    %729 = vmatprep.subr.bf16.mxu0 0
    %730 = vmatpush1.bf16.msra.mxu0 0
    %731 = vmatprep.subr.bf16.mxu0 0
    %732 = vmatpush1.bf16.msra.mxu0 0
    %733 = vmatprep.subr.bf16.mxu0 0
    %734 = vmatpush1.bf16.msra.mxu0 0
    %735 = vmatprep.subr.bf16.mxu0 0
    %736 = vmatpush1.bf16.msra.mxu0 0
    %737 = vmatprep.subr.bf16.mxu0 0
    %738 = vmatpush1.bf16.msra.mxu0 0
    %739 = vmatprep.subr.bf16.mxu0 0
    %740 = vmatpush1.bf16.msra.mxu0 0
    %741 = vmatprep.subr.bf16.mxu0 0
    %742 = vmatpush1.bf16.msra.mxu0 0
    %743 = vmatprep.subr.bf16.mxu0 0
    %744 = vmatpush1.bf16.msra.mxu0 0
    %745 = vmatprep.subr.bf16.mxu0 0
    %746 = vmatpush1.bf16.msra.mxu0 0
    %747 = vmatprep.subr.bf16.mxu0 0
    %748 = vmatpush1.bf16.msra.mxu0 0
    %749 = vmatprep.subr.bf16.mxu0 0
    %750 = vmatpush1.bf16.msra.mxu0 0
    %751 = vmatprep.subr.bf16.mxu0 0
    %752 = vmatpush1.bf16.msra.mxu0 0
    %753 = vmatprep.subr.bf16.mxu0 0
    %754 = vmatpush1.bf16.msra.mxu0 0
    %755 = vmatprep.mubr.bf16.mxu0 0
    %756 = vmatmul.mubr.bf16.gmra.mrb[0].mxu0 %v721
    %v757 = vpop.f32.mrb[0].mxu0
    %v758 = vadd.f32 %v119, %v757
    %v759 = vpop.f32.mrb[0].mxu0
    %v760 = vadd.f32 %v123, %v759
    %v761 = vpop.f32.mrb[0].mxu0
    %v762 = vpop.f32.mrb[0].mxu0
    %763 = vdwg.mxu0
    %764 = vmatprep.subr.bf16.mxu0 %v154
    %765 = vmatpush1.bf16.msra.mxu0 %v153
    %766 = vmatprep.subr.bf16.mxu0 0
    %767 = vmatpush1.bf16.msra.mxu0 0
    %768 = vmatprep.subr.bf16.mxu0 0
    %769 = vmatpush1.bf16.msra.mxu0 0
    %770 = vmatprep.subr.bf16.mxu0 0
    %771 = vmatpush1.bf16.msra.mxu0 0
    %772 = vmatprep.subr.bf16.mxu0 0
    %773 = vmatpush1.bf16.msra.mxu0 0
    %774 = vmatprep.subr.bf16.mxu0 0
    %775 = vmatpush1.bf16.msra.mxu0 0
    %776 = vmatprep.subr.bf16.mxu0 0
    %777 = vmatpush1.bf16.msra.mxu0 0
    %778 = vmatprep.subr.bf16.mxu0 0
    %779 = vmatpush1.bf16.msra.mxu0 0
    %780 = vmatprep.subr.bf16.mxu0 0
    %781 = vmatpush1.bf16.msra.mxu0 0
    %782 = vmatprep.subr.bf16.mxu0 0
    %783 = vmatpush1.bf16.msra.mxu0 0
    %784 = vmatprep.subr.bf16.mxu0 0
    %785 = vmatpush1.bf16.msra.mxu0 0
    %786 = vmatprep.subr.bf16.mxu0 0
    %787 = vmatpush1.bf16.msra.mxu0 0
    %788 = vmatprep.subr.bf16.mxu0 0
    %789 = vmatpush1.bf16.msra.mxu0 0
    %790 = vmatprep.subr.bf16.mxu0 0
    %791 = vmatpush1.bf16.msra.mxu0 0
    %792 = vmatprep.subr.bf16.mxu0 0
    %793 = vmatpush1.bf16.msra.mxu0 0
    %794 = vmatprep.subr.bf16.mxu0 0
    %795 = vmatpush1.bf16.msra.mxu0 0
    %796 = vmatprep.mubr.bf16.mxu0 0
    %797 = vmatmul.mubr.bf16.gmra.mrb[0].mxu0 %v721
    %v798 = vpop.f32.mrb[0].mxu0
    %v799 = vadd.f32 %v127, %v798
    %v800 = vpop.f32.mrb[0].mxu0
    %v801 = vadd.f32 %v131, %v800
    %v802 = vpop.f32.mrb[0].mxu0
    %v803 = vpop.f32.mrb[0].mxu0
    %804 = vdwg.mxu0
    %805 = vmatprep.subr.bf16.mxu0 %v343
    %806 = vmatpush1.bf16.msra.mxu0 %v342
    %807 = vmatprep.subr.bf16.mxu0 %v347
    %808 = vmatpush1.bf16.msra.mxu0 %v346
    %809 = vmatprep.subr.bf16.mxu0 %v351
    %810 = vmatpush1.bf16.msra.mxu0 %v350
    %811 = vmatprep.subr.bf16.mxu0 %v355
    %812 = vmatpush1.bf16.msra.mxu0 %v354
    %813 = vmatprep.subr.bf16.mxu0 %v359
    %814 = vmatpush1.bf16.msra.mxu0 %v358
    %815 = vmatprep.subr.bf16.mxu0 %v363
    %816 = vmatpush1.bf16.msra.mxu0 %v362
    %817 = vmatprep.subr.bf16.mxu0 %v367
    %818 = vmatpush1.bf16.msra.mxu0 %v366
    %819 = vmatprep.subr.bf16.mxu0 %v371
    %820 = vmatpush1.bf16.msra.mxu0 %v370
    %821 = vmatprep.subr.bf16.mxu0 0
    %822 = vmatpush1.bf16.msra.mxu0 0
    %823 = vmatprep.subr.bf16.mxu0 0
    %824 = vmatpush1.bf16.msra.mxu0 0
    %825 = vmatprep.subr.bf16.mxu0 0
    %826 = vmatpush1.bf16.msra.mxu0 0
    %827 = vmatprep.subr.bf16.mxu0 0
    %828 = vmatpush1.bf16.msra.mxu0 0
    %829 = vmatprep.subr.bf16.mxu0 0
    %830 = vmatpush1.bf16.msra.mxu0 0
    %831 = vmatprep.subr.bf16.mxu0 0
    %832 = vmatpush1.bf16.msra.mxu0 0
    %833 = vmatprep.subr.bf16.mxu0 0
    %834 = vmatpush1.bf16.msra.mxu0 0
    %835 = vmatprep.subr.bf16.mxu0 0
    %836 = vmatpush1.bf16.msra.mxu0 0
    %837 = vmatprep.mubr.bf16.mxu0 0
    %838 = vmatmul.mubr.bf16.gmra.mrb[0].mxu0 %v715
    %v839 = vpop.f32.mrb[0].mxu0
    %v840 = vadd.f32 0.0, %v839
    %v841 = vpop.f32.mrb[0].mxu0
    %v842 = vadd.f32 0.0, %v841
    %v843 = vpop.f32.mrb[0].mxu0
    %v844 = vpop.f32.mrb[0].mxu0
    %845 = vdwg.mxu0
    %846 = vmatprep.subr.bf16.mxu0 %v345
    %847 = vmatpush1.bf16.msra.mxu0 %v344
    %848 = vmatprep.subr.bf16.mxu0 %v349
    %849 = vmatpush1.bf16.msra.mxu0 %v348
    %850 = vmatprep.subr.bf16.mxu0 %v353
    %851 = vmatpush1.bf16.msra.mxu0 %v352
    %852 = vmatprep.subr.bf16.mxu0 %v357
    %853 = vmatpush1.bf16.msra.mxu0 %v356
    %854 = vmatprep.subr.bf16.mxu0 %v361
    %855 = vmatpush1.bf16.msra.mxu0 %v360
    %856 = vmatprep.subr.bf16.mxu0 %v365
    %857 = vmatpush1.bf16.msra.mxu0 %v364
    %858 = vmatprep.subr.bf16.mxu0 %v369
    %859 = vmatpush1.bf16.msra.mxu0 %v368
    %860 = vmatprep.subr.bf16.mxu0 %v373
    %861 = vmatpush1.bf16.msra.mxu0 %v372
    %862 = vmatprep.subr.bf16.mxu0 0
    %863 = vmatpush1.bf16.msra.mxu0 0
    %864 = vmatprep.subr.bf16.mxu0 0
    %865 = vmatpush1.bf16.msra.mxu0 0
    %866 = vmatprep.subr.bf16.mxu0 0
    %867 = vmatpush1.bf16.msra.mxu0 0
    %868 = vmatprep.subr.bf16.mxu0 0
    %869 = vmatpush1.bf16.msra.mxu0 0
    %870 = vmatprep.subr.bf16.mxu0 0
    %871 = vmatpush1.bf16.msra.mxu0 0
    %872 = vmatprep.subr.bf16.mxu0 0
    %873 = vmatpush1.bf16.msra.mxu0 0
    %874 = vmatprep.subr.bf16.mxu0 0
    %875 = vmatpush1.bf16.msra.mxu0 0
    %876 = vmatprep.subr.bf16.mxu0 0
    %877 = vmatpush1.bf16.msra.mxu0 0
    %878 = vmatprep.mubr.bf16.mxu0 0
    %879 = vmatmul.mubr.bf16.gmra.mrb[0].mxu0 %v715
    %v880 = vpop.f32.mrb[0].mxu0
    %v881 = vadd.f32 0.0, %v880
    %v882 = vpop.f32.mrb[0].mxu0
    %v883 = vadd.f32 0.0, %v882
    %v884 = vpop.f32.mrb[0].mxu0
    %v885 = vpop.f32.mrb[0].mxu0
    %886 = vdwg.mxu0
    %v887 = vadd.f32 %v758, %v840
    %v888 = vadd.f32 %v760, %v842
    %v889 = vadd.f32 %v799, %v881
    %v890 = vadd.f32 %v801, %v883
    %v891 = vxor.u32 %v887, 2147483648
    %v892 = vxor.u32 %v888, 2147483648
    %v893 = vxor.u32 %v889, 2147483648
    %v894 = vmul.f32 %v891, 1.442695
    %v895 = vpow.pop %v894
    %v896 = vmul.f32 %v892, 1.442695
    %v897 = vpow.pop %v896
    %v898 = vmul.f32 %v893, 1.442695
    %v899 = vpow.pop %v898
    %v900 = vadd.f32 %v895, 1.0
    %v901 = vadd.f32 %v897, 1.0
    %v902 = vadd.f32 %v899, 1.0
    %v903 = vrcp.pop %v900
    %v904 = vmul.f32 1.0, %v903
    %v905 = vrcp.pop %v901
    %v906 = vmul.f32 1.0, %v905
    %v907 = vrcp.pop %v902
    %v908 = vmul.f32 1.0, %v907
    %v909 = vtanh.pop %v890
    %v910 = vmul.f32 %v906, %v712
    %v911 = vmul.f32 %v904, %v909
    %v912 = vadd.f32 %v910, %v911
    %v913 = vtanh.pop %v912
    %v914 = vmul.f32 %v908, %v913
    %v915 = vpack.c.bf16 %v914, %v914
    %s916 = scalar_lea.vmem [#allocation12], 2
    %917 = vst [vmem:[%s916] sm:$0x1] %v915
    %s918 = scalar_lea.vmem [#allocation4], 3
    %v919 = vld [vmem:[%s918] sm:$0x1]
    %v921 = vsel %vm159, %v919, 0
    %923 = vmatprep.subr.bf16.mxu0 %v152
    %924 = vmatpush1.bf16.msra.mxu0 %v151
    %925 = vmatprep.subr.bf16.mxu0 0
    %926 = vmatpush1.bf16.msra.mxu0 0
    %927 = vmatprep.subr.bf16.mxu0 0
    %928 = vmatpush1.bf16.msra.mxu0 0
    %929 = vmatprep.subr.bf16.mxu0 0
    %930 = vmatpush1.bf16.msra.mxu0 0
    %931 = vmatprep.subr.bf16.mxu0 0
    %932 = vmatpush1.bf16.msra.mxu0 0
    %933 = vmatprep.subr.bf16.mxu0 0
    %934 = vmatpush1.bf16.msra.mxu0 0
    %935 = vmatprep.subr.bf16.mxu0 0
    %936 = vmatpush1.bf16.msra.mxu0 0
    %937 = vmatprep.subr.bf16.mxu0 0
    %938 = vmatpush1.bf16.msra.mxu0 0
    %939 = vmatprep.subr.bf16.mxu0 0
    %940 = vmatpush1.bf16.msra.mxu0 0
    %941 = vmatprep.subr.bf16.mxu0 0
    %942 = vmatpush1.bf16.msra.mxu0 0
    %943 = vmatprep.subr.bf16.mxu0 0
    %944 = vmatpush1.bf16.msra.mxu0 0
    %945 = vmatprep.subr.bf16.mxu0 0
    %946 = vmatpush1.bf16.msra.mxu0 0
    %947 = vmatprep.subr.bf16.mxu0 0
    %948 = vmatpush1.bf16.msra.mxu0 0
    %949 = vmatprep.subr.bf16.mxu0 0
    %950 = vmatpush1.bf16.msra.mxu0 0
    %951 = vmatprep.subr.bf16.mxu0 0
    %952 = vmatpush1.bf16.msra.mxu0 0
    %953 = vmatprep.subr.bf16.mxu0 0
    %954 = vmatpush1.bf16.msra.mxu0 0
    %955 = vmatprep.mubr.bf16.mxu0 0
    %956 = vmatmul.mubr.bf16.gmra.mrb[0].mxu0 %v921
    %v957 = vpop.f32.mrb[0].mxu0
    %v958 = vadd.f32 %v119, %v957
    %v959 = vpop.f32.mrb[0].mxu0
    %v960 = vadd.f32 %v123, %v959
    %v961 = vpop.f32.mrb[0].mxu0
    %v962 = vpop.f32.mrb[0].mxu0
    %963 = vdwg.mxu0
    %964 = vmatprep.subr.bf16.mxu0 %v154
    %965 = vmatpush1.bf16.msra.mxu0 %v153
    %966 = vmatprep.subr.bf16.mxu0 0
    %967 = vmatpush1.bf16.msra.mxu0 0
    %968 = vmatprep.subr.bf16.mxu0 0
    %969 = vmatpush1.bf16.msra.mxu0 0
    %970 = vmatprep.subr.bf16.mxu0 0
    %971 = vmatpush1.bf16.msra.mxu0 0
    %972 = vmatprep.subr.bf16.mxu0 0
    %973 = vmatpush1.bf16.msra.mxu0 0
    %974 = vmatprep.subr.bf16.mxu0 0
    %975 = vmatpush1.bf16.msra.mxu0 0
    %976 = vmatprep.subr.bf16.mxu0 0
    %977 = vmatpush1.bf16.msra.mxu0 0
    %978 = vmatprep.subr.bf16.mxu0 0
    %979 = vmatpush1.bf16.msra.mxu0 0
    %980 = vmatprep.subr.bf16.mxu0 0
    %981 = vmatpush1.bf16.msra.mxu0 0
    %982 = vmatprep.subr.bf16.mxu0 0
    %983 = vmatpush1.bf16.msra.mxu0 0
    %984 = vmatprep.subr.bf16.mxu0 0
    %985 = vmatpush1.bf16.msra.mxu0 0
    %986 = vmatprep.subr.bf16.mxu0 0
    %987 = vmatpush1.bf16.msra.mxu0 0
    %988 = vmatprep.subr.bf16.mxu0 0
    %989 = vmatpush1.bf16.msra.mxu0 0
    %990 = vmatprep.subr.bf16.mxu0 0
    %991 = vmatpush1.bf16.msra.mxu0 0
    %992 = vmatprep.subr.bf16.mxu0 0
    %993 = vmatpush1.bf16.msra.mxu0 0
    %994 = vmatprep.subr.bf16.mxu0 0
    %995 = vmatpush1.bf16.msra.mxu0 0
    %996 = vmatprep.mubr.bf16.mxu0 0
    %997 = vmatmul.mubr.bf16.gmra.mrb[0].mxu0 %v921
    %v998 = vpop.f32.mrb[0].mxu0
    %v999 = vadd.f32 %v127, %v998
    %v1000 = vpop.f32.mrb[0].mxu0
    %v1001 = vadd.f32 %v131, %v1000
    %v1002 = vpop.f32.mrb[0].mxu0
    %v1003 = vpop.f32.mrb[0].mxu0
    %1004 = vdwg.mxu0
    %1005 = vmatprep.subr.bf16.mxu0 %v343
    %1006 = vmatpush1.bf16.msra.mxu0 %v342
    %1007 = vmatprep.subr.bf16.mxu0 %v347
    %1008 = vmatpush1.bf16.msra.mxu0 %v346
    %1009 = vmatprep.subr.bf16.mxu0 %v351
    %1010 = vmatpush1.bf16.msra.mxu0 %v350
    %1011 = vmatprep.subr.bf16.mxu0 %v355
    %1012 = vmatpush1.bf16.msra.mxu0 %v354
    %1013 = vmatprep.subr.bf16.mxu0 %v359
    %1014 = vmatpush1.bf16.msra.mxu0 %v358
    %1015 = vmatprep.subr.bf16.mxu0 %v363
    %1016 = vmatpush1.bf16.msra.mxu0 %v362
    %1017 = vmatprep.subr.bf16.mxu0 %v367
    %1018 = vmatpush1.bf16.msra.mxu0 %v366
    %1019 = vmatprep.subr.bf16.mxu0 %v371
    %1020 = vmatpush1.bf16.msra.mxu0 %v370
    %1021 = vmatprep.subr.bf16.mxu0 0
    %1022 = vmatpush1.bf16.msra.mxu0 0
    %1023 = vmatprep.subr.bf16.mxu0 0
    %1024 = vmatpush1.bf16.msra.mxu0 0
    %1025 = vmatprep.subr.bf16.mxu0 0
    %1026 = vmatpush1.bf16.msra.mxu0 0
    %1027 = vmatprep.subr.bf16.mxu0 0
    %1028 = vmatpush1.bf16.msra.mxu0 0
    %1029 = vmatprep.subr.bf16.mxu0 0
    %1030 = vmatpush1.bf16.msra.mxu0 0
    %1031 = vmatprep.subr.bf16.mxu0 0
    %1032 = vmatpush1.bf16.msra.mxu0 0
    %1033 = vmatprep.subr.bf16.mxu0 0
    %1034 = vmatpush1.bf16.msra.mxu0 0
    %1035 = vmatprep.subr.bf16.mxu0 0
    %1036 = vmatpush1.bf16.msra.mxu0 0
    %1037 = vmatprep.mubr.bf16.mxu0 0
    %1038 = vmatmul.mubr.bf16.gmra.mrb[0].mxu0 %v915
    %v1039 = vpop.f32.mrb[0].mxu0
    %v1040 = vadd.f32 0.0, %v1039
    %v1041 = vpop.f32.mrb[0].mxu0
    %v1042 = vadd.f32 0.0, %v1041
    %v1043 = vpop.f32.mrb[0].mxu0
    %v1044 = vpop.f32.mrb[0].mxu0
    %1045 = vdwg.mxu0
    %1046 = vmatprep.subr.bf16.mxu0 %v345
    %1047 = vmatpush1.bf16.msra.mxu0 %v344
    %1048 = vmatprep.subr.bf16.mxu0 %v349
    %1049 = vmatpush1.bf16.msra.mxu0 %v348
    %1050 = vmatprep.subr.bf16.mxu0 %v353
    %1051 = vmatpush1.bf16.msra.mxu0 %v352
    %1052 = vmatprep.subr.bf16.mxu0 %v357
    %1053 = vmatpush1.bf16.msra.mxu0 %v356
    %1054 = vmatprep.subr.bf16.mxu0 %v361
    %1055 = vmatpush1.bf16.msra.mxu0 %v360
    %1056 = vmatprep.subr.bf16.mxu0 %v365
    %1057 = vmatpush1.bf16.msra.mxu0 %v364
    %1058 = vmatprep.subr.bf16.mxu0 %v369
    %1059 = vmatpush1.bf16.msra.mxu0 %v368
    %1060 = vmatprep.subr.bf16.mxu0 %v373
    %1061 = vmatpush1.bf16.msra.mxu0 %v372
    %1062 = vmatprep.subr.bf16.mxu0 0
    %1063 = vmatpush1.bf16.msra.mxu0 0
    %1064 = vmatprep.subr.bf16.mxu0 0
    %1065 = vmatpush1.bf16.msra.mxu0 0
    %1066 = vmatprep.subr.bf16.mxu0 0
    %1067 = vmatpush1.bf16.msra.mxu0 0
    %1068 = vmatprep.subr.bf16.mxu0 0
    %1069 = vmatpush1.bf16.msra.mxu0 0
    %1070 = vmatprep.subr.bf16.mxu0 0
    %1071 = vmatpush1.bf16.msra.mxu0 0
    %1072 = vmatprep.subr.bf16.mxu0 0
    %1073 = vmatpush1.bf16.msra.mxu0 0
    %1074 = vmatprep.subr.bf16.mxu0 0
    %1075 = vmatpush1.bf16.msra.mxu0 0
    %1076 = vmatprep.subr.bf16.mxu0 0
    %1077 = vmatpush1.bf16.msra.mxu0 0
    %1078 = vmatprep.mubr.bf16.mxu0 0
    %1079 = vmatmul.mubr.bf16.gmra.mrb[0].mxu0 %v915
    %v1080 = vpop.f32.mrb[0].mxu0
    %v1081 = vadd.f32 0.0, %v1080
    %v1082 = vpop.f32.mrb[0].mxu0
    %v1083 = vadd.f32 0.0, %v1082
    %v1084 = vpop.f32.mrb[0].mxu0
    %v1085 = vpop.f32.mrb[0].mxu0
    %1086 = vdwg.mxu0
    %v1087 = vadd.f32 %v958, %v1040
    %v1088 = vadd.f32 %v960, %v1042
    %v1089 = vadd.f32 %v999, %v1081
    %v1090 = vadd.f32 %v1001, %v1083
    %v1091 = vxor.u32 %v1087, 2147483648
    %v1092 = vxor.u32 %v1088, 2147483648
    %v1093 = vxor.u32 %v1089, 2147483648
    %v1094 = vmul.f32 %v1091, 1.442695
    %v1095 = vpow.pop %v1094
    %v1096 = vmul.f32 %v1092, 1.442695
    %v1097 = vpow.pop %v1096
    %v1098 = vmul.f32 %v1093, 1.442695
    %v1099 = vpow.pop %v1098
    %v1100 = vadd.f32 %v1095, 1.0
    %v1101 = vadd.f32 %v1097, 1.0
    %v1102 = vadd.f32 %v1099, 1.0
    %v1103 = vrcp.pop %v1100
    %v1104 = vmul.f32 1.0, %v1103
    %v1105 = vrcp.pop %v1101
    %v1106 = vmul.f32 1.0, %v1105
    %v1107 = vrcp.pop %v1102
    %v1108 = vmul.f32 1.0, %v1107
    %v1109 = vtanh.pop %v1090
    %v1110 = vmul.f32 %v1106, %v912
    %v1111 = vmul.f32 %v1104, %v1109
    %v1112 = vadd.f32 %v1110, %v1111
    %v1113 = vtanh.pop %v1112
    %v1114 = vmul.f32 %v1108, %v1113
    %v1115 = vpack.c.bf16 %v1114, %v1114
    %s1116 = scalar_lea.vmem [#allocation12], 3
    %1117 = vst [vmem:[%s1116] sm:$0x1] %v1115
    %s1118 = scalar_lea.vmem [#allocation4], 4
    %v1119 = vld [vmem:[%s1118] sm:$0x1]
    %v1121 = vsel %vm159, %v1119, 0
    %1123 = vmatprep.subr.bf16.mxu0 %v152
    %1124 = vmatpush1.bf16.msra.mxu0 %v151
    %1125 = vmatprep.subr.bf16.mxu0 0
    %1126 = vmatpush1.bf16.msra.mxu0 0
    %1127 = vmatprep.subr.bf16.mxu0 0
    %1128 = vmatpush1.bf16.msra.mxu0 0
    %1129 = vmatprep.subr.bf16.mxu0 0
    %1130 = vmatpush1.bf16.msra.mxu0 0
    %1131 = vmatprep.subr.bf16.mxu0 0
    %1132 = vmatpush1.bf16.msra.mxu0 0
    %1133 = vmatprep.subr.bf16.mxu0 0
    %1134 = vmatpush1.bf16.msra.mxu0 0
    %1135 = vmatprep.subr.bf16.mxu0 0
    %1136 = vmatpush1.bf16.msra.mxu0 0
    %1137 = vmatprep.subr.bf16.mxu0 0
    %1138 = vmatpush1.bf16.msra.mxu0 0
    %1139 = vmatprep.subr.bf16.mxu0 0
    %1140 = vmatpush1.bf16.msra.mxu0 0
    %1141 = vmatprep.subr.bf16.mxu0 0
    %1142 = vmatpush1.bf16.msra.mxu0 0
    %1143 = vmatprep.subr.bf16.mxu0 0
    %1144 = vmatpush1.bf16.msra.mxu0 0
    %1145 = vmatprep.subr.bf16.mxu0 0
    %1146 = vmatpush1.bf16.msra.mxu0 0
    %1147 = vmatprep.subr.bf16.mxu0 0
    %1148 = vmatpush1.bf16.msra.mxu0 0
    %1149 = vmatprep.subr.bf16.mxu0 0
    %1150 = vmatpush1.bf16.msra.mxu0 0
    %1151 = vmatprep.subr.bf16.mxu0 0
    %1152 = vmatpush1.bf16.msra.mxu0 0
    %1153 = vmatprep.subr.bf16.mxu0 0
    %1154 = vmatpush1.bf16.msra.mxu0 0
    %1155 = vmatprep.mubr.bf16.mxu0 0
    %1156 = vmatmul.mubr.bf16.gmra.mrb[0].mxu0 %v1121
    %v1157 = vpop.f32.mrb[0].mxu0
    %v1158 = vadd.f32 %v119, %v1157
    %v1159 = vpop.f32.mrb[0].mxu0
    %v1160 = vadd.f32 %v123, %v1159
    %v1161 = vpop.f32.mrb[0].mxu0
    %v1162 = vpop.f32.mrb[0].mxu0
    %1163 = vdwg.mxu0
    %1164 = vmatprep.subr.bf16.mxu0 %v154
    %1165 = vmatpush1.bf16.msra.mxu0 %v153
    %1166 = vmatprep.subr.bf16.mxu0 0
    %1167 = vmatpush1.bf16.msra.mxu0 0
    %1168 = vmatprep.subr.bf16.mxu0 0
    %1169 = vmatpush1.bf16.msra.mxu0 0
    %1170 = vmatprep.subr.bf16.mxu0 0
    %1171 = vmatpush1.bf16.msra.mxu0 0
    %1172 = vmatprep.subr.bf16.mxu0 0
    %1173 = vmatpush1.bf16.msra.mxu0 0
    %1174 = vmatprep.subr.bf16.mxu0 0
    %1175 = vmatpush1.bf16.msra.mxu0 0
    %1176 = vmatprep.subr.bf16.mxu0 0
    %1177 = vmatpush1.bf16.msra.mxu0 0
    %1178 = vmatprep.subr.bf16.mxu0 0
    %1179 = vmatpush1.bf16.msra.mxu0 0
    %1180 = vmatprep.subr.bf16.mxu0 0
    %1181 = vmatpush1.bf16.msra.mxu0 0
    %1182 = vmatprep.subr.bf16.mxu0 0
    %1183 = vmatpush1.bf16.msra.mxu0 0
    %1184 = vmatprep.subr.bf16.mxu0 0
    %1185 = vmatpush1.bf16.msra.mxu0 0
    %1186 = vmatprep.subr.bf16.mxu0 0
    %1187 = vmatpush1.bf16.msra.mxu0 0
    %1188 = vmatprep.subr.bf16.mxu0 0
    %1189 = vmatpush1.bf16.msra.mxu0 0
    %1190 = vmatprep.subr.bf16.mxu0 0
    %1191 = vmatpush1.bf16.msra.mxu0 0
    %1192 = vmatprep.subr.bf16.mxu0 0
    %1193 = vmatpush1.bf16.msra.mxu0 0
    %1194 = vmatprep.subr.bf16.mxu0 0
    %1195 = vmatpush1.bf16.msra.mxu0 0
    %1196 = vmatprep.mubr.bf16.mxu0 0
    %1197 = vmatmul.mubr.bf16.gmra.mrb[0].mxu0 %v1121
    %v1198 = vpop.f32.mrb[0].mxu0
    %v1199 = vadd.f32 %v127, %v1198
    %v1200 = vpop.f32.mrb[0].mxu0
    %v1201 = vadd.f32 %v131, %v1200
    %v1202 = vpop.f32.mrb[0].mxu0
    %v1203 = vpop.f32.mrb[0].mxu0
    %1204 = vdwg.mxu0
    %1205 = vmatprep.subr.bf16.mxu0 %v343
    %1206 = vmatpush1.bf16.msra.mxu0 %v342
    %1207 = vmatprep.subr.bf16.mxu0 %v347
    %1208 = vmatpush1.bf16.msra.mxu0 %v346
    %1209 = vmatprep.subr.bf16.mxu0 %v351
    %1210 = vmatpush1.bf16.msra.mxu0 %v350
    %1211 = vmatprep.subr.bf16.mxu0 %v355
    %1212 = vmatpush1.bf16.msra.mxu0 %v354
    %1213 = vmatprep.subr.bf16.mxu0 %v359
    %1214 = vmatpush1.bf16.msra.mxu0 %v358
    %1215 = vmatprep.subr.bf16.mxu0 %v363
    %1216 = vmatpush1.bf16.msra.mxu0 %v362
    %1217 = vmatprep.subr.bf16.mxu0 %v367
    %1218 = vmatpush1.bf16.msra.mxu0 %v366
    %1219 = vmatprep.subr.bf16.mxu0 %v371
    %1220 = vmatpush1.bf16.msra.mxu0 %v370
    %1221 = vmatprep.subr.bf16.mxu0 0
    %1222 = vmatpush1.bf16.msra.mxu0 0
    %1223 = vmatprep.subr.bf16.mxu0 0
    %1224 = vmatpush1.bf16.msra.mxu0 0
    %1225 = vmatprep.subr.bf16.mxu0 0
    %1226 = vmatpush1.bf16.msra.mxu0 0
    %1227 = vmatprep.subr.bf16.mxu0 0
    %1228 = vmatpush1.bf16.msra.mxu0 0
    %1229 = vmatprep.subr.bf16.mxu0 0
    %1230 = vmatpush1.bf16.msra.mxu0 0
    %1231 = vmatprep.subr.bf16.mxu0 0
    %1232 = vmatpush1.bf16.msra.mxu0 0
    %1233 = vmatprep.subr.bf16.mxu0 0
    %1234 = vmatpush1.bf16.msra.mxu0 0
    %1235 = vmatprep.subr.bf16.mxu0 0
    %1236 = vmatpush1.bf16.msra.mxu0 0
    %1237 = vmatprep.mubr.bf16.mxu0 0
    %1238 = vmatmul.mubr.bf16.gmra.mrb[0].mxu0 %v1115
    %v1239 = vpop.f32.mrb[0].mxu0
    %v1240 = vadd.f32 0.0, %v1239
    %v1241 = vpop.f32.mrb[0].mxu0
    %v1242 = vadd.f32 0.0, %v1241
    %v1243 = vpop.f32.mrb[0].mxu0
    %v1244 = vpop.f32.mrb[0].mxu0
    %1245 = vdwg.mxu0
    %1246 = vmatprep.subr.bf16.mxu0 %v345
    %1247 = vmatpush1.bf16.msra.mxu0 %v344
    %1248 = vmatprep.subr.bf16.mxu0 %v349
    %1249 = vmatpush1.bf16.msra.mxu0 %v348
    %1250 = vmatprep.subr.bf16.mxu0 %v353
    %1251 = vmatpush1.bf16.msra.mxu0 %v352
    %1252 = vmatprep.subr.bf16.mxu0 %v357
    %1253 = vmatpush1.bf16.msra.mxu0 %v356
    %1254 = vmatprep.subr.bf16.mxu0 %v361
    %1255 = vmatpush1.bf16.msra.mxu0 %v360
    %1256 = vmatprep.subr.bf16.mxu0 %v365
    %1257 = vmatpush1.bf16.msra.mxu0 %v364
    %1258 = vmatprep.subr.bf16.mxu0 %v369
    %1259 = vmatpush1.bf16.msra.mxu0 %v368
    %1260 = vmatprep.subr.bf16.mxu0 %v373
    %1261 = vmatpush1.bf16.msra.mxu0 %v372
    %1262 = vmatprep.subr.bf16.mxu0 0
    %1263 = vmatpush1.bf16.msra.mxu0 0
    %1264 = vmatprep.subr.bf16.mxu0 0
    %1265 = vmatpush1.bf16.msra.mxu0 0
    %1266 = vmatprep.subr.bf16.mxu0 0
    %1267 = vmatpush1.bf16.msra.mxu0 0
    %1268 = vmatprep.subr.bf16.mxu0 0
    %1269 = vmatpush1.bf16.msra.mxu0 0
    %1270 = vmatprep.subr.bf16.mxu0 0
    %1271 = vmatpush1.bf16.msra.mxu0 0
    %1272 = vmatprep.subr.bf16.mxu0 0
    %1273 = vmatpush1.bf16.msra.mxu0 0
    %1274 = vmatprep.subr.bf16.mxu0 0
    %1275 = vmatpush1.bf16.msra.mxu0 0
    %1276 = vmatprep.subr.bf16.mxu0 0
    %1277 = vmatpush1.bf16.msra.mxu0 0
    %1278 = vmatprep.mubr.bf16.mxu0 0
    %1279 = vmatmul.mubr.bf16.gmra.mrb[0].mxu0 %v1115
    %v1280 = vpop.f32.mrb[0].mxu0
    %v1281 = vadd.f32 0.0, %v1280
    %v1282 = vpop.f32.mrb[0].mxu0
    %v1283 = vadd.f32 0.0, %v1282
    %v1284 = vpop.f32.mrb[0].mxu0
    %v1285 = vpop.f32.mrb[0].mxu0
    %1286 = vdwg.mxu0
    %v1287 = vadd.f32 %v1158, %v1240
    %v1288 = vadd.f32 %v1160, %v1242
    %v1289 = vadd.f32 %v1199, %v1281
    %v1290 = vadd.f32 %v1201, %v1283
    %v1291 = vxor.u32 %v1287, 2147483648
    %v1292 = vxor.u32 %v1288, 2147483648
    %v1293 = vxor.u32 %v1289, 2147483648
    %v1294 = vmul.f32 %v1291, 1.442695
    %v1295 = vpow.pop %v1294
    %v1296 = vmul.f32 %v1292, 1.442695
    %v1297 = vpow.pop %v1296
    %v1298 = vmul.f32 %v1293, 1.442695
    %v1299 = vpow.pop %v1298
    %v1300 = vadd.f32 %v1295, 1.0
    %v1301 = vadd.f32 %v1297, 1.0
    %v1302 = vadd.f32 %v1299, 1.0
    %v1303 = vrcp.pop %v1300
    %v1304 = vmul.f32 1.0, %v1303
    %v1305 = vrcp.pop %v1301
    %v1306 = vmul.f32 1.0, %v1305
    %v1307 = vrcp.pop %v1302
    %v1308 = vmul.f32 1.0, %v1307
    %v1309 = vtanh.pop %v1290
    %v1310 = vmul.f32 %v1306, %v1112
    %v1311 = vmul.f32 %v1304, %v1309
    %v1312 = vadd.f32 %v1310, %v1311
    %v1313 = vtanh.pop %v1312
    %v1314 = vmul.f32 %v1308, %v1313
    %v1315 = vpack.c.bf16 %v1314, %v1314
    %s1316 = scalar_lea.vmem [#allocation12], 4
    %1317 = vst [vmem:[%s1316] sm:$0x1] %v1315
    %s1318 = scalar_lea.vmem [#allocation4], 5
    %v1319 = vld [vmem:[%s1318] sm:$0x1]
    %v1321 = vsel %vm159, %v1319, 0
    %1323 = vmatprep.subr.bf16.mxu0 %v152
    %1324 = vmatpush1.bf16.msra.mxu0 %v151
    %1325 = vmatprep.subr.bf16.mxu0 0
    %1326 = vmatpush1.bf16.msra.mxu0 0
    %1327 = vmatprep.subr.bf16.mxu0 0
    %1328 = vmatpush1.bf16.msra.mxu0 0
    %1329 = vmatprep.subr.bf16.mxu0 0
    %1330 = vmatpush1.bf16.msra.mxu0 0
    %1331 = vmatprep.subr.bf16.mxu0 0
    %1332 = vmatpush1.bf16.msra.mxu0 0
    %1333 = vmatprep.subr.bf16.mxu0 0
    %1334 = vmatpush1.bf16.msra.mxu0 0
    %1335 = vmatprep.subr.bf16.mxu0 0
    %1336 = vmatpush1.bf16.msra.mxu0 0
    %1337 = vmatprep.subr.bf16.mxu0 0
    %1338 = vmatpush1.bf16.msra.mxu0 0
    %1339 = vmatprep.subr.bf16.mxu0 0
    %1340 = vmatpush1.bf16.msra.mxu0 0
    %1341 = vmatprep.subr.bf16.mxu0 0
    %1342 = vmatpush1.bf16.msra.mxu0 0
    %1343 = vmatprep.subr.bf16.mxu0 0
    %1344 = vmatpush1.bf16.msra.mxu0 0
    %1345 = vmatprep.subr.bf16.mxu0 0
    %1346 = vmatpush1.bf16.msra.mxu0 0
    %1347 = vmatprep.subr.bf16.mxu0 0
    %1348 = vmatpush1.bf16.msra.mxu0 0
    %1349 = vmatprep.subr.bf16.mxu0 0
    %1350 = vmatpush1.bf16.msra.mxu0 0
    %1351 = vmatprep.subr.bf16.mxu0 0
    %1352 = vmatpush1.bf16.msra.mxu0 0
    %1353 = vmatprep.subr.bf16.mxu0 0
    %1354 = vmatpush1.bf16.msra.mxu0 0
    %1355 = vmatprep.mubr.bf16.mxu0 0
    %1356 = vmatmul.mubr.bf16.gmra.mrb[0].mxu0 %v1321
    %v1357 = vpop.f32.mrb[0].mxu0
    %v1358 = vadd.f32 %v119, %v1357
    %v1359 = vpop.f32.mrb[0].mxu0
    %v1360 = vadd.f32 %v123, %v1359
    %v1361 = vpop.f32.mrb[0].mxu0
    %v1362 = vpop.f32.mrb[0].mxu0
    %1363 = vdwg.mxu0
    %1364 = vmatprep.subr.bf16.mxu0 %v154
    %1365 = vmatpush1.bf16.msra.mxu0 %v153
    %1366 = vmatprep.subr.bf16.mxu0 0
    %1367 = vmatpush1.bf16.msra.mxu0 0
    %1368 = vmatprep.subr.bf16.mxu0 0
    %1369 = vmatpush1.bf16.msra.mxu0 0
    %1370 = vmatprep.subr.bf16.mxu0 0
    %1371 = vmatpush1.bf16.msra.mxu0 0
    %1372 = vmatprep.subr.bf16.mxu0 0
    %1373 = vmatpush1.bf16.msra.mxu0 0
    %1374 = vmatprep.subr.bf16.mxu0 0
    %1375 = vmatpush1.bf16.msra.mxu0 0
    %1376 = vmatprep.subr.bf16.mxu0 0
    %1377 = vmatpush1.bf16.msra.mxu0 0
    %1378 = vmatprep.subr.bf16.mxu0 0
    %1379 = vmatpush1.bf16.msra.mxu0 0
    %1380 = vmatprep.subr.bf16.mxu0 0
    %1381 = vmatpush1.bf16.msra.mxu0 0
    %1382 = vmatprep.subr.bf16.mxu0 0
    %1383 = vmatpush1.bf16.msra.mxu0 0
    %1384 = vmatprep.subr.bf16.mxu0 0
    %1385 = vmatpush1.bf16.msra.mxu0 0
    %1386 = vmatprep.subr.bf16.mxu0 0
    %1387 = vmatpush1.bf16.msra.mxu0 0
    %1388 = vmatprep.subr.bf16.mxu0 0
    %1389 = vmatpush1.bf16.msra.mxu0 0
    %1390 = vmatprep.subr.bf16.mxu0 0
    %1391 = vmatpush1.bf16.msra.mxu0 0
    %1392 = vmatprep.subr.bf16.mxu0 0
    %1393 = vmatpush1.bf16.msra.mxu0 0
    %1394 = vmatprep.subr.bf16.mxu0 0
    %1395 = vmatpush1.bf16.msra.mxu0 0
    %1396 = vmatprep.mubr.bf16.mxu0 0
    %1397 = vmatmul.mubr.bf16.gmra.mrb[0].mxu0 %v1321
    %v1398 = vpop.f32.mrb[0].mxu0
    %v1399 = vadd.f32 %v127, %v1398
    %v1400 = vpop.f32.mrb[0].mxu0
    %v1401 = vadd.f32 %v131, %v1400
    %v1402 = vpop.f32.mrb[0].mxu0
    %v1403 = vpop.f32.mrb[0].mxu0
    %1404 = vdwg.mxu0
    %1405 = vmatprep.subr.bf16.mxu0 %v343
    %1406 = vmatpush1.bf16.msra.mxu0 %v342
    %1407 = vmatprep.subr.bf16.mxu0 %v347
    %1408 = vmatpush1.bf16.msra.mxu0 %v346
    %1409 = vmatprep.subr.bf16.mxu0 %v351
    %1410 = vmatpush1.bf16.msra.mxu0 %v350
    %1411 = vmatprep.subr.bf16.mxu0 %v355
    %1412 = vmatpush1.bf16.msra.mxu0 %v354
    %1413 = vmatprep.subr.bf16.mxu0 %v359
    %1414 = vmatpush1.bf16.msra.mxu0 %v358
    %1415 = vmatprep.subr.bf16.mxu0 %v363
    %1416 = vmatpush1.bf16.msra.mxu0 %v362
    %1417 = vmatprep.subr.bf16.mxu0 %v367
    %1418 = vmatpush1.bf16.msra.mxu0 %v366
    %1419 = vmatprep.subr.bf16.mxu0 %v371
    %1420 = vmatpush1.bf16.msra.mxu0 %v370
    %1421 = vmatprep.subr.bf16.mxu0 0
    %1422 = vmatpush1.bf16.msra.mxu0 0
    %1423 = vmatprep.subr.bf16.mxu0 0
    %1424 = vmatpush1.bf16.msra.mxu0 0
    %1425 = vmatprep.subr.bf16.mxu0 0
    %1426 = vmatpush1.bf16.msra.mxu0 0
    %1427 = vmatprep.subr.bf16.mxu0 0
    %1428 = vmatpush1.bf16.msra.mxu0 0
    %1429 = vmatprep.subr.bf16.mxu0 0
    %1430 = vmatpush1.bf16.msra.mxu0 0
    %1431 = vmatprep.subr.bf16.mxu0 0
    %1432 = vmatpush1.bf16.msra.mxu0 0
    %1433 = vmatprep.subr.bf16.mxu0 0
    %1434 = vmatpush1.bf16.msra.mxu0 0
    %1435 = vmatprep.subr.bf16.mxu0 0
    %1436 = vmatpush1.bf16.msra.mxu0 0
    %1437 = vmatprep.mubr.bf16.mxu0 0
    %1438 = vmatmul.mubr.bf16.gmra.mrb[0].mxu0 %v1315
    %v1439 = vpop.f32.mrb[0].mxu0
    %v1440 = vadd.f32 0.0, %v1439
    %v1441 = vpop.f32.mrb[0].mxu0
    %v1442 = vadd.f32 0.0, %v1441
    %v1443 = vpop.f32.mrb[0].mxu0
    %v1444 = vpop.f32.mrb[0].mxu0
    %1445 = vdwg.mxu0
    %1446 = vmatprep.subr.bf16.mxu0 %v345
    %1447 = vmatpush1.bf16.msra.mxu0 %v344
    %1448 = vmatprep.subr.bf16.mxu0 %v349
    %1449 = vmatpush1.bf16.msra.mxu0 %v348
    %1450 = vmatprep.subr.bf16.mxu0 %v353
    %1451 = vmatpush1.bf16.msra.mxu0 %v352
    %1452 = vmatprep.subr.bf16.mxu0 %v357
    %1453 = vmatpush1.bf16.msra.mxu0 %v356
    %1454 = vmatprep.subr.bf16.mxu0 %v361
    %1455 = vmatpush1.bf16.msra.mxu0 %v360
    %1456 = vmatprep.subr.bf16.mxu0 %v365
    %1457 = vmatpush1.bf16.msra.mxu0 %v364
    %1458 = vmatprep.subr.bf16.mxu0 %v369
    %1459 = vmatpush1.bf16.msra.mxu0 %v368
    %1460 = vmatprep.subr.bf16.mxu0 %v373
    %1461 = vmatpush1.bf16.msra.mxu0 %v372
    %1462 = vmatprep.subr.bf16.mxu0 0
    %1463 = vmatpush1.bf16.msra.mxu0 0
    %1464 = vmatprep.subr.bf16.mxu0 0
    %1465 = vmatpush1.bf16.msra.mxu0 0
    %1466 = vmatprep.subr.bf16.mxu0 0
    %1467 = vmatpush1.bf16.msra.mxu0 0
    %1468 = vmatprep.subr.bf16.mxu0 0
    %1469 = vmatpush1.bf16.msra.mxu0 0
    %1470 = vmatprep.subr.bf16.mxu0 0
    %1471 = vmatpush1.bf16.msra.mxu0 0
    %1472 = vmatprep.subr.bf16.mxu0 0
    %1473 = vmatpush1.bf16.msra.mxu0 0
    %1474 = vmatprep.subr.bf16.mxu0 0
    %1475 = vmatpush1.bf16.msra.mxu0 0
    %1476 = vmatprep.subr.bf16.mxu0 0
    %1477 = vmatpush1.bf16.msra.mxu0 0
    %1478 = vmatprep.mubr.bf16.mxu0 0
    %1479 = vmatmul.mubr.bf16.gmra.mrb[0].mxu0 %v1315
    %v1480 = vpop.f32.mrb[0].mxu0
    %v1481 = vadd.f32 0.0, %v1480
    %v1482 = vpop.f32.mrb[0].mxu0
    %v1483 = vadd.f32 0.0, %v1482
    %v1484 = vpop.f32.mrb[0].mxu0
    %v1485 = vpop.f32.mrb[0].mxu0
    %1486 = vdwg.mxu0
    %v1487 = vadd.f32 %v1358, %v1440
    %v1488 = vadd.f32 %v1360, %v1442
    %v1489 = vadd.f32 %v1399, %v1481
    %v1490 = vadd.f32 %v1401, %v1483
    %v1491 = vxor.u32 %v1487, 2147483648
    %v1492 = vxor.u32 %v1488, 2147483648
    %v1493 = vxor.u32 %v1489, 2147483648
    %v1494 = vmul.f32 %v1491, 1.442695
    %v1495 = vpow.pop %v1494
    %v1496 = vmul.f32 %v1492, 1.442695
    %v1497 = vpow.pop %v1496
    %v1498 = vmul.f32 %v1493, 1.442695
    %v1499 = vpow.pop %v1498
    %v1500 = vadd.f32 %v1495, 1.0
    %v1501 = vadd.f32 %v1497, 1.0
    %v1502 = vadd.f32 %v1499, 1.0
    %v1503 = vrcp.pop %v1500
    %v1504 = vmul.f32 1.0, %v1503
    %v1505 = vrcp.pop %v1501
    %v1506 = vmul.f32 1.0, %v1505
    %v1507 = vrcp.pop %v1502
    %v1508 = vmul.f32 1.0, %v1507
    %v1509 = vtanh.pop %v1490
    %v1510 = vmul.f32 %v1506, %v1312
    %v1511 = vmul.f32 %v1504, %v1509
    %v1512 = vadd.f32 %v1510, %v1511
    %v1513 = vtanh.pop %v1512
    %v1514 = vmul.f32 %v1508, %v1513
    %v1515 = vpack.c.bf16 %v1514, %v1514
    %s1516 = scalar_lea.vmem [#allocation12], 5
    %1517 = vst [vmem:[%s1516] sm:$0x1] %v1515
    %s1518 = scalar_lea.vmem [#allocation4], 6
    %v1519 = vld [vmem:[%s1518] sm:$0x1]
    %v1521 = vsel %vm159, %v1519, 0
    %1523 = vmatprep.subr.bf16.mxu0 %v152
    %1524 = vmatpush1.bf16.msra.mxu0 %v151
    %1525 = vmatprep.subr.bf16.mxu0 0
    %1526 = vmatpush1.bf16.msra.mxu0 0
    %1527 = vmatprep.subr.bf16.mxu0 0
    %1528 = vmatpush1.bf16.msra.mxu0 0
    %1529 = vmatprep.subr.bf16.mxu0 0
    %1530 = vmatpush1.bf16.msra.mxu0 0
    %1531 = vmatprep.subr.bf16.mxu0 0
    %1532 = vmatpush1.bf16.msra.mxu0 0
    %1533 = vmatprep.subr.bf16.mxu0 0
    %1534 = vmatpush1.bf16.msra.mxu0 0
    %1535 = vmatprep.subr.bf16.mxu0 0
    %1536 = vmatpush1.bf16.msra.mxu0 0
    %1537 = vmatprep.subr.bf16.mxu0 0
    %1538 = vmatpush1.bf16.msra.mxu0 0
    %1539 = vmatprep.subr.bf16.mxu0 0
    %1540 = vmatpush1.bf16.msra.mxu0 0
    %1541 = vmatprep.subr.bf16.mxu0 0
    %1542 = vmatpush1.bf16.msra.mxu0 0
    %1543 = vmatprep.subr.bf16.mxu0 0
    %1544 = vmatpush1.bf16.msra.mxu0 0
    %1545 = vmatprep.subr.bf16.mxu0 0
    %1546 = vmatpush1.bf16.msra.mxu0 0
    %1547 = vmatprep.subr.bf16.mxu0 0
    %1548 = vmatpush1.bf16.msra.mxu0 0
    %1549 = vmatprep.subr.bf16.mxu0 0
    %1550 = vmatpush1.bf16.msra.mxu0 0
    %1551 = vmatprep.subr.bf16.mxu0 0
    %1552 = vmatpush1.bf16.msra.mxu0 0
    %1553 = vmatprep.subr.bf16.mxu0 0
    %1554 = vmatpush1.bf16.msra.mxu0 0
    %1555 = vmatprep.mubr.bf16.mxu0 0
    %1556 = vmatmul.mubr.bf16.gmra.mrb[0].mxu0 %v1521
    %v1557 = vpop.f32.mrb[0].mxu0
    %v1558 = vadd.f32 %v119, %v1557
    %v1559 = vpop.f32.mrb[0].mxu0
    %v1560 = vadd.f32 %v123, %v1559
    %v1561 = vpop.f32.mrb[0].mxu0
    %v1562 = vpop.f32.mrb[0].mxu0
    %1563 = vdwg.mxu0
    %1564 = vmatprep.subr.bf16.mxu0 %v154
    %1565 = vmatpush1.bf16.msra.mxu0 %v153
    %1566 = vmatprep.subr.bf16.mxu0 0
    %1567 = vmatpush1.bf16.msra.mxu0 0
    %1568 = vmatprep.subr.bf16.mxu0 0
    %1569 = vmatpush1.bf16.msra.mxu0 0
    %1570 = vmatprep.subr.bf16.mxu0 0
    %1571 = vmatpush1.bf16.msra.mxu0 0
    %1572 = vmatprep.subr.bf16.mxu0 0
    %1573 = vmatpush1.bf16.msra.mxu0 0
    %1574 = vmatprep.subr.bf16.mxu0 0
    %1575 = vmatpush1.bf16.msra.mxu0 0
    %1576 = vmatprep.subr.bf16.mxu0 0
    %1577 = vmatpush1.bf16.msra.mxu0 0
    %1578 = vmatprep.subr.bf16.mxu0 0
    %1579 = vmatpush1.bf16.msra.mxu0 0
    %1580 = vmatprep.subr.bf16.mxu0 0
    %1581 = vmatpush1.bf16.msra.mxu0 0
    %1582 = vmatprep.subr.bf16.mxu0 0
    %1583 = vmatpush1.bf16.msra.mxu0 0
    %1584 = vmatprep.subr.bf16.mxu0 0
    %1585 = vmatpush1.bf16.msra.mxu0 0
    %1586 = vmatprep.subr.bf16.mxu0 0
    %1587 = vmatpush1.bf16.msra.mxu0 0
    %1588 = vmatprep.subr.bf16.mxu0 0
    %1589 = vmatpush1.bf16.msra.mxu0 0
    %1590 = vmatprep.subr.bf16.mxu0 0
    %1591 = vmatpush1.bf16.msra.mxu0 0
    %1592 = vmatprep.subr.bf16.mxu0 0
    %1593 = vmatpush1.bf16.msra.mxu0 0
    %1594 = vmatprep.subr.bf16.mxu0 0
    %1595 = vmatpush1.bf16.msra.mxu0 0
    %1596 = vmatprep.mubr.bf16.mxu0 0
    %1597 = vmatmul.mubr.bf16.gmra.mrb[0].mxu0 %v1521
    %v1598 = vpop.f32.mrb[0].mxu0
    %v1599 = vadd.f32 %v127, %v1598
    %v1600 = vpop.f32.mrb[0].mxu0
    %v1601 = vadd.f32 %v131, %v1600
    %v1602 = vpop.f32.mrb[0].mxu0
    %v1603 = vpop.f32.mrb[0].mxu0
    %1604 = vdwg.mxu0
    %1605 = vmatprep.subr.bf16.mxu0 %v343
    %1606 = vmatpush1.bf16.msra.mxu0 %v342
    %1607 = vmatprep.subr.bf16.mxu0 %v347
    %1608 = vmatpush1.bf16.msra.mxu0 %v346
    %1609 = vmatprep.subr.bf16.mxu0 %v351
    %1610 = vmatpush1.bf16.msra.mxu0 %v350
    %1611 = vmatprep.subr.bf16.mxu0 %v355
    %1612 = vmatpush1.bf16.msra.mxu0 %v354
    %1613 = vmatprep.subr.bf16.mxu0 %v359
    %1614 = vmatpush1.bf16.msra.mxu0 %v358
    %1615 = vmatprep.subr.bf16.mxu0 %v363
    %1616 = vmatpush1.bf16.msra.mxu0 %v362
    %1617 = vmatprep.subr.bf16.mxu0 %v367
    %1618 = vmatpush1.bf16.msra.mxu0 %v366
    %1619 = vmatprep.subr.bf16.mxu0 %v371
    %1620 = vmatpush1.bf16.msra.mxu0 %v370
    %1621 = vmatprep.subr.bf16.mxu0 0
    %1622 = vmatpush1.bf16.msra.mxu0 0
    %1623 = vmatprep.subr.bf16.mxu0 0
    %1624 = vmatpush1.bf16.msra.mxu0 0
    %1625 = vmatprep.subr.bf16.mxu0 0
    %1626 = vmatpush1.bf16.msra.mxu0 0
    %1627 = vmatprep.subr.bf16.mxu0 0
    %1628 = vmatpush1.bf16.msra.mxu0 0
    %1629 = vmatprep.subr.bf16.mxu0 0
    %1630 = vmatpush1.bf16.msra.mxu0 0
    %1631 = vmatprep.subr.bf16.mxu0 0
    %1632 = vmatpush1.bf16.msra.mxu0 0
    %1633 = vmatprep.subr.bf16.mxu0 0
    %1634 = vmatpush1.bf16.msra.mxu0 0
    %1635 = vmatprep.subr.bf16.mxu0 0
    %1636 = vmatpush1.bf16.msra.mxu0 0
    %1637 = vmatprep.mubr.bf16.mxu0 0
    %1638 = vmatmul.mubr.bf16.gmra.mrb[0].mxu0 %v1515
    %v1639 = vpop.f32.mrb[0].mxu0
    %v1640 = vadd.f32 0.0, %v1639
    %v1641 = vpop.f32.mrb[0].mxu0
    %v1642 = vadd.f32 0.0, %v1641
    %v1643 = vpop.f32.mrb[0].mxu0
    %v1644 = vpop.f32.mrb[0].mxu0
    %1645 = vdwg.mxu0
    %1646 = vmatprep.subr.bf16.mxu0 %v345
    %1647 = vmatpush1.bf16.msra.mxu0 %v344
    %1648 = vmatprep.subr.bf16.mxu0 %v349
    %1649 = vmatpush1.bf16.msra.mxu0 %v348
    %1650 = vmatprep.subr.bf16.mxu0 %v353
    %1651 = vmatpush1.bf16.msra.mxu0 %v352
    %1652 = vmatprep.subr.bf16.mxu0 %v357
    %1653 = vmatpush1.bf16.msra.mxu0 %v356
    %1654 = vmatprep.subr.bf16.mxu0 %v361
    %1655 = vmatpush1.bf16.msra.mxu0 %v360
    %1656 = vmatprep.subr.bf16.mxu0 %v365
    %1657 = vmatpush1.bf16.msra.mxu0 %v364
    %1658 = vmatprep.subr.bf16.mxu0 %v369
    %1659 = vmatpush1.bf16.msra.mxu0 %v368
    %1660 = vmatprep.subr.bf16.mxu0 %v373
    %1661 = vmatpush1.bf16.msra.mxu0 %v372
    %1662 = vmatprep.subr.bf16.mxu0 0
    %1663 = vmatpush1.bf16.msra.mxu0 0
    %1664 = vmatprep.subr.bf16.mxu0 0
    %1665 = vmatpush1.bf16.msra.mxu0 0
    %1666 = vmatprep.subr.bf16.mxu0 0
    %1667 = vmatpush1.bf16.msra.mxu0 0
    %1668 = vmatprep.subr.bf16.mxu0 0
    %1669 = vmatpush1.bf16.msra.mxu0 0
    %1670 = vmatprep.subr.bf16.mxu0 0
    %1671 = vmatpush1.bf16.msra.mxu0 0
    %1672 = vmatprep.subr.bf16.mxu0 0
    %1673 = vmatpush1.bf16.msra.mxu0 0
    %1674 = vmatprep.subr.bf16.mxu0 0
    %1675 = vmatpush1.bf16.msra.mxu0 0
    %1676 = vmatprep.subr.bf16.mxu0 0
    %1677 = vmatpush1.bf16.msra.mxu0 0
    %1678 = vmatprep.mubr.bf16.mxu0 0
    %1679 = vmatmul.mubr.bf16.gmra.mrb[0].mxu0 %v1515
    %v1680 = vpop.f32.mrb[0].mxu0
    %v1681 = vadd.f32 0.0, %v1680
    %v1682 = vpop.f32.mrb[0].mxu0
    %v1683 = vadd.f32 0.0, %v1682
    %v1684 = vpop.f32.mrb[0].mxu0
    %v1685 = vpop.f32.mrb[0].mxu0
    %1686 = vdwg.mxu0
    %v1687 = vadd.f32 %v1558, %v1640
    %v1688 = vadd.f32 %v1560, %v1642
    %v1689 = vadd.f32 %v1599, %v1681
    %v1690 = vadd.f32 %v1601, %v1683
    %v1691 = vxor.u32 %v1687, 2147483648
    %v1692 = vxor.u32 %v1688, 2147483648
    %v1693 = vxor.u32 %v1689, 2147483648
    %v1694 = vmul.f32 %v1691, 1.442695
    %v1695 = vpow.pop %v1694
    %v1696 = vmul.f32 %v1692, 1.442695
    %v1697 = vpow.pop %v1696
    %v1698 = vmul.f32 %v1693, 1.442695
    %v1699 = vpow.pop %v1698
    %v1700 = vadd.f32 %v1695, 1.0
    %v1701 = vadd.f32 %v1697, 1.0
    %v1702 = vadd.f32 %v1699, 1.0
    %v1703 = vrcp.pop %v1700
    %v1704 = vmul.f32 1.0, %v1703
    %v1705 = vrcp.pop %v1701
    %v1706 = vmul.f32 1.0, %v1705
    %v1707 = vrcp.pop %v1702
    %v1708 = vmul.f32 1.0, %v1707
    %v1709 = vtanh.pop %v1690
    %v1710 = vmul.f32 %v1706, %v1512
    %v1711 = vmul.f32 %v1704, %v1709
    %v1712 = vadd.f32 %v1710, %v1711
    %v1713 = vtanh.pop %v1712
    %v1714 = vmul.f32 %v1708, %v1713
    %v1715 = vpack.c.bf16 %v1714, %v1714
    %s1716 = scalar_lea.vmem [#allocation12], 6
    %1717 = vst [vmem:[%s1716] sm:$0x1] %v1715
    %s1718 = scalar_lea.vmem [#allocation4], 7
    %v1719 = vld [vmem:[%s1718] sm:$0x1]
    %v1721 = vsel %vm159, %v1719, 0
    %1723 = vmatprep.subr.bf16.mxu0 %v152
    %1724 = vmatpush1.bf16.msra.mxu0 %v151
    %1725 = vmatprep.subr.bf16.mxu0 0
    %1726 = vmatpush1.bf16.msra.mxu0 0
    %1727 = vmatprep.subr.bf16.mxu0 0
    %1728 = vmatpush1.bf16.msra.mxu0 0
    %1729 = vmatprep.subr.bf16.mxu0 0
    %1730 = vmatpush1.bf16.msra.mxu0 0
    %1731 = vmatprep.subr.bf16.mxu0 0
    %1732 = vmatpush1.bf16.msra.mxu0 0
    %1733 = vmatprep.subr.bf16.mxu0 0
    %1734 = vmatpush1.bf16.msra.mxu0 0
    %1735 = vmatprep.subr.bf16.mxu0 0
    %1736 = vmatpush1.bf16.msra.mxu0 0
    %1737 = vmatprep.subr.bf16.mxu0 0
    %1738 = vmatpush1.bf16.msra.mxu0 0
    %1739 = vmatprep.subr.bf16.mxu0 0
    %1740 = vmatpush1.bf16.msra.mxu0 0
    %1741 = vmatprep.subr.bf16.mxu0 0
    %1742 = vmatpush1.bf16.msra.mxu0 0
    %1743 = vmatprep.subr.bf16.mxu0 0
    %1744 = vmatpush1.bf16.msra.mxu0 0
    %1745 = vmatprep.subr.bf16.mxu0 0
    %1746 = vmatpush1.bf16.msra.mxu0 0
    %1747 = vmatprep.subr.bf16.mxu0 0
    %1748 = vmatpush1.bf16.msra.mxu0 0
    %1749 = vmatprep.subr.bf16.mxu0 0
    %1750 = vmatpush1.bf16.msra.mxu0 0
    %1751 = vmatprep.subr.bf16.mxu0 0
    %1752 = vmatpush1.bf16.msra.mxu0 0
    %1753 = vmatprep.subr.bf16.mxu0 0
    %1754 = vmatpush1.bf16.msra.mxu0 0
    %1755 = vmatprep.mubr.bf16.mxu0 0
    %1756 = vmatmul.mubr.bf16.gmra.mrb[0].mxu0 %v1721
    %v1757 = vpop.f32.mrb[0].mxu0
    %v1758 = vadd.f32 %v119, %v1757
    %v1759 = vpop.f32.mrb[0].mxu0
    %v1760 = vadd.f32 %v123, %v1759
    %v1761 = vpop.f32.mrb[0].mxu0
    %v1762 = vpop.f32.mrb[0].mxu0
    %1763 = vdwg.mxu0
    %1764 = vmatprep.subr.bf16.mxu0 %v154
    %1765 = vmatpush1.bf16.msra.mxu0 %v153
    %1766 = vmatprep.subr.bf16.mxu0 0
    %1767 = vmatpush1.bf16.msra.mxu0 0
    %1768 = vmatprep.subr.bf16.mxu0 0
    %1769 = vmatpush1.bf16.msra.mxu0 0
    %1770 = vmatprep.subr.bf16.mxu0 0
    %1771 = vmatpush1.bf16.msra.mxu0 0
    %1772 = vmatprep.subr.bf16.mxu0 0
    %1773 = vmatpush1.bf16.msra.mxu0 0
    %1774 = vmatprep.subr.bf16.mxu0 0
    %1775 = vmatpush1.bf16.msra.mxu0 0
    %1776 = vmatprep.subr.bf16.mxu0 0
    %1777 = vmatpush1.bf16.msra.mxu0 0
    %1778 = vmatprep.subr.bf16.mxu0 0
    %1779 = vmatpush1.bf16.msra.mxu0 0
    %1780 = vmatprep.subr.bf16.mxu0 0
    %1781 = vmatpush1.bf16.msra.mxu0 0
    %1782 = vmatprep.subr.bf16.mxu0 0
    %1783 = vmatpush1.bf16.msra.mxu0 0
    %1784 = vmatprep.subr.bf16.mxu0 0
    %1785 = vmatpush1.bf16.msra.mxu0 0
    %1786 = vmatprep.subr.bf16.mxu0 0
    %1787 = vmatpush1.bf16.msra.mxu0 0
    %1788 = vmatprep.subr.bf16.mxu0 0
    %1789 = vmatpush1.bf16.msra.mxu0 0
    %1790 = vmatprep.subr.bf16.mxu0 0
    %1791 = vmatpush1.bf16.msra.mxu0 0
    %1792 = vmatprep.subr.bf16.mxu0 0
    %1793 = vmatpush1.bf16.msra.mxu0 0
    %1794 = vmatprep.subr.bf16.mxu0 0
    %1795 = vmatpush1.bf16.msra.mxu0 0
    %1796 = vmatprep.mubr.bf16.mxu0 0
    %1797 = vmatmul.mubr.bf16.gmra.mrb[0].mxu0 %v1721
    %v1798 = vpop.f32.mrb[0].mxu0
    %v1799 = vadd.f32 %v127, %v1798
    %v1800 = vpop.f32.mrb[0].mxu0
    %v1801 = vadd.f32 %v131, %v1800
    %v1802 = vpop.f32.mrb[0].mxu0
    %v1803 = vpop.f32.mrb[0].mxu0
    %1804 = vdwg.mxu0
    %1805 = vmatprep.subr.bf16.mxu0 %v343
    %1806 = vmatpush1.bf16.msra.mxu0 %v342
    %1807 = vmatprep.subr.bf16.mxu0 %v347
    %1808 = vmatpush1.bf16.msra.mxu0 %v346
    %1809 = vmatprep.subr.bf16.mxu0 %v351
    %1810 = vmatpush1.bf16.msra.mxu0 %v350
    %1811 = vmatprep.subr.bf16.mxu0 %v355
    %1812 = vmatpush1.bf16.msra.mxu0 %v354
    %1813 = vmatprep.subr.bf16.mxu0 %v359
    %1814 = vmatpush1.bf16.msra.mxu0 %v358
    %1815 = vmatprep.subr.bf16.mxu0 %v363
    %1816 = vmatpush1.bf16.msra.mxu0 %v362
    %1817 = vmatprep.subr.bf16.mxu0 %v367
    %1818 = vmatpush1.bf16.msra.mxu0 %v366
    %1819 = vmatprep.subr.bf16.mxu0 %v371
    %1820 = vmatpush1.bf16.msra.mxu0 %v370
    %1821 = vmatprep.subr.bf16.mxu0 0
    %1822 = vmatpush1.bf16.msra.mxu0 0
    %1823 = vmatprep.subr.bf16.mxu0 0
    %1824 = vmatpush1.bf16.msra.mxu0 0
    %1825 = vmatprep.subr.bf16.mxu0 0
    %1826 = vmatpush1.bf16.msra.mxu0 0
    %1827 = vmatprep.subr.bf16.mxu0 0
    %1828 = vmatpush1.bf16.msra.mxu0 0
    %1829 = vmatprep.subr.bf16.mxu0 0
    %1830 = vmatpush1.bf16.msra.mxu0 0
    %1831 = vmatprep.subr.bf16.mxu0 0
    %1832 = vmatpush1.bf16.msra.mxu0 0
    %1833 = vmatprep.subr.bf16.mxu0 0
    %1834 = vmatpush1.bf16.msra.mxu0 0
    %1835 = vmatprep.subr.bf16.mxu0 0
    %1836 = vmatpush1.bf16.msra.mxu0 0
    %1837 = vmatprep.mubr.bf16.mxu0 0
    %1838 = vmatmul.mubr.bf16.gmra.mrb[0].mxu0 %v1715
    %v1839 = vpop.f32.mrb[0].mxu0
    %v1840 = vadd.f32 0.0, %v1839
    %v1841 = vpop.f32.mrb[0].mxu0
    %v1842 = vadd.f32 0.0, %v1841
    %v1843 = vpop.f32.mrb[0].mxu0
    %v1844 = vpop.f32.mrb[0].mxu0
    %1845 = vdwg.mxu0
    %1846 = vmatprep.subr.bf16.mxu0 %v345
    %1847 = vmatpush1.bf16.msra.mxu0 %v344
    %1848 = vmatprep.subr.bf16.mxu0 %v349
    %1849 = vmatpush1.bf16.msra.mxu0 %v348
    %1850 = vmatprep.subr.bf16.mxu0 %v353
    %1851 = vmatpush1.bf16.msra.mxu0 %v352
    %1852 = vmatprep.subr.bf16.mxu0 %v357
    %1853 = vmatpush1.bf16.msra.mxu0 %v356
    %1854 = vmatprep.subr.bf16.mxu0 %v361
    %1855 = vmatpush1.bf16.msra.mxu0 %v360
    %1856 = vmatprep.subr.bf16.mxu0 %v365
    %1857 = vmatpush1.bf16.msra.mxu0 %v364
    %1858 = vmatprep.subr.bf16.mxu0 %v369
    %1859 = vmatpush1.bf16.msra.mxu0 %v368
    %1860 = vmatprep.subr.bf16.mxu0 %v373
    %1861 = vmatpush1.bf16.msra.mxu0 %v372
    %1862 = vmatprep.subr.bf16.mxu0 0
    %1863 = vmatpush1.bf16.msra.mxu0 0
    %1864 = vmatprep.subr.bf16.mxu0 0
    %1865 = vmatpush1.bf16.msra.mxu0 0
    %1866 = vmatprep.subr.bf16.mxu0 0
    %1867 = vmatpush1.bf16.msra.mxu0 0
    %1868 = vmatprep.subr.bf16.mxu0 0
    %1869 = vmatpush1.bf16.msra.mxu0 0
    %1870 = vmatprep.subr.bf16.mxu0 0
    %1871 = vmatpush1.bf16.msra.mxu0 0
    %1872 = vmatprep.subr.bf16.mxu0 0
    %1873 = vmatpush1.bf16.msra.mxu0 0
    %1874 = vmatprep.subr.bf16.mxu0 0
    %1875 = vmatpush1.bf16.msra.mxu0 0
    %1876 = vmatprep.subr.bf16.mxu0 0
    %1877 = vmatpush1.bf16.msra.mxu0 0
    %1878 = vmatprep.mubr.bf16.mxu0 0
    %1879 = vmatmul.mubr.bf16.gmra.mrb[0].mxu0 %v1715
    %v1880 = vpop.f32.mrb[0].mxu0
    %v1881 = vadd.f32 0.0, %v1880
    %v1882 = vpop.f32.mrb[0].mxu0
    %v1883 = vadd.f32 0.0, %v1882
    %v1884 = vpop.f32.mrb[0].mxu0
    %v1885 = vpop.f32.mrb[0].mxu0
    %1886 = vdwg.mxu0
    %v1887 = vadd.f32 %v1758, %v1840
    %v1888 = vadd.f32 %v1760, %v1842
    %v1889 = vadd.f32 %v1799, %v1881
    %v1890 = vadd.f32 %v1801, %v1883
    %v1891 = vxor.u32 %v1887, 2147483648
    %v1892 = vxor.u32 %v1888, 2147483648
    %v1893 = vxor.u32 %v1889, 2147483648
    %v1894 = vmul.f32 %v1891, 1.442695
    %v1895 = vpow.pop %v1894
    %v1896 = vmul.f32 %v1892, 1.442695
    %v1897 = vpow.pop %v1896
    %v1898 = vmul.f32 %v1893, 1.442695
    %v1899 = vpow.pop %v1898
    %v1900 = vadd.f32 %v1895, 1.0
    %v1901 = vadd.f32 %v1897, 1.0
    %v1902 = vadd.f32 %v1899, 1.0
    %v1903 = vrcp.pop %v1900
    %v1904 = vmul.f32 1.0, %v1903
    %v1905 = vrcp.pop %v1901
    %v1906 = vmul.f32 1.0, %v1905
    %v1907 = vrcp.pop %v1902
    %v1908 = vmul.f32 1.0, %v1907
    %v1909 = vtanh.pop %v1890
    %v1910 = vmul.f32 %v1906, %v1712
    %v1911 = vmul.f32 %v1904, %v1909
    %v1912 = vadd.f32 %v1910, %v1911
    %v1913 = vtanh.pop %v1912
    %v1914 = vmul.f32 %v1908, %v1913
    %v1915 = vpack.c.bf16 %v1914, %v1914
    %s1916 = scalar_lea.vmem [#allocation12], 7
    %1917 = vst [vmem:[%s1916] sm:$0x1] %v1915
    %1918 = vst [vmem:[#allocation2] sm:$0x3] %v1914
    %1919 = vst [vmem:[#allocation3] sm:$0x3] %v1912
    // Predicated region
    $region38: #{rnn_model_forward.2} parent=1 // pred_check
      _
    $region39: #{rnn_model_forward.2} parent=1 // pred_check_branch
      %1921 = sbr.rel (0) target = $region41
    $region40: #{rnn_model_forward.2} parent=1 // pred_region
      %s1923 = ssub.s32 128, 128
      %1924 = vsyncadd [#allocation6], %s1923
      %s1925 = sshll.u32 [#allocation12], 4
      %s1926 = int_to_ptr.vmem [resolvable:$true] %s1925
      %1931 = dma.vmem_to_hbm [thread:$0]  %s1926, 128, %s4, [#allocation6], 16, 16, 1
    $region41: #{rnn_model_forward.2} parent=1 // pred_fallthru
      _
    // Predicated region
    $region42: #{rnn_model_forward.2} parent=1 // pred_check
      _
    $region43: #{rnn_model_forward.2} parent=1 // pred_check_branch
      %1933 = sbr.rel (0) target = $region45
    $region44: #{rnn_model_forward.2} parent=1 // pred_region
      %1934 = dma.done [#allocation6], 128
    $region45: #{rnn_model_forward.2} parent=1 // pred_fallthru
      _
    %1935 = vsyncpa [#allocation5], 1
    %1936 = vsyncpa [#allocation8], 1
    %1937 = vsyncpa [#allocation11], 1
    %1938 = vsyncpa [#allocation6], 1

// kernel: rnn_model_forward.3
$region0: #{rnn_model_forward.3}
  #allocation0 [shape = 'u32[]', space=smem, size = 0x4, offset = 0x4, fixed_abs, tag = 'smem constant byte address 0x4 - core index']
  #allocation1 [shape = 'u32[144,128]{1,0:T(1,128)}', space=vmem, size = 0x12000, scoped, tag = 'internal scratch']
  #allocation2 [shape = 'f32[2,128]{1,0:T(2,128)}', space=vmem, size = 0x400, scoped, tag = 'scratch operand']
  #allocation3 [shape = 'f32[2,128]{1,0:T(2,128)}', space=vmem, size = 0x400, scoped, tag = 'scratch operand']
  %s0 = inlined_call_operand.hbm [shape: bf16[8,2,128], index: 0, kind: input, shape index: {}]
  %s1 = inlined_call_operand.hbm [shape: bf16[128,512], index: 1, kind: input, shape index: {}]
  %s2 = inlined_call_operand.hbm [shape: f32[1,512], index: 2, kind: input, shape index: {}]
  %s3 = inlined_call_operand.hbm [shape: bf16[128,512], index: 3, kind: input, shape index: {}]
  %s4 = inlined_call_operand.hbm [shape: bf16[128,128], index: 4, kind: input, shape index: {}]
  %s5 = inlined_call_operand.hbm [shape: f32[1,128], index: 5, kind: input, shape index: {}]
  %s6 = inlined_call_operand.hbm [shape: f32[2,128], index: 6, kind: output, shape index: {}]
  %s7 = sld [smem:[#allocation0]]
  $region66: #{rnn_model_forward.3} parent=0
    _
  %s9 = ssub.s32 1, %s7
  %s10 = scalar_select 0, %s9, %s7
  $region1: #{rnn_model_forward.3} parent=0
    #allocation4 [shape = 'u8[4096]{0}', space=vmem, size = 0x1000, scoped, tag = 'input window, operand 0, single buffered']
    #allocation5 [shape = 's32[1]{0}', space=sflag, size = 0x4, scoped, tag = 'scoped memory for rnn_model_forward.3']
    #allocation6 [shape = 's32[1]{0}', space=sflag, size = 0x4, scoped, tag = 'scoped memory for rnn_model_forward.3']
    #allocation7 [shape = 'u8[131072]{0}', space=vmem, size = 0x20000, scoped, tag = 'input window, operand 1, single buffered']
    #allocation8 [shape = 's32[1]{0}', space=sflag, size = 0x4, scoped, tag = 'scoped memory for rnn_model_forward.3']
    #allocation9 [shape = 'u8[2048]{0}', space=vmem, size = 0x800, scoped, tag = 'input window, operand 2, single buffered']
    #allocation10 [shape = 'u8[131072]{0}', space=vmem, size = 0x20000, scoped, tag = 'input window, operand 3, single buffered']
    #allocation11 [shape = 's32[1]{0}', space=sflag, size = 0x4, scoped, tag = 'scoped memory for rnn_model_forward.3']
    #allocation12 [shape = 'u8[32768]{0}', space=vmem, size = 0x8000, scoped, tag = 'input window, operand 4, single buffered']
    #allocation13 [shape = 'u8[512]{0}', space=vmem, size = 0x400, scoped, tag = 'input window, operand 5, single buffered']
    #allocation14 [shape = 's32[1]{0}', space=sflag, size = 0x4, scoped, tag = 'scoped memory for rnn_model_forward.3']
    #allocation15 [shape = 'u8[1024]{0}', space=vmem, size = 0x400, scoped, tag = 'output window, operand 0, single buffered']
    %11 = vsyncpa [#allocation5], 0
    %12 = vsyncpa [#allocation8], 0
    %13 = vsyncpa [#allocation11], 0
    %14 = vsyncpa [#allocation14], 0
    %15 = vsyncpa [#allocation6], 0
    // Predicated region
    $region2: #{rnn_model_forward.3} parent=1 // pred_check
      _
    $region3: #{rnn_model_forward.3} parent=1 // pred_check_branch
      %17 = sbr.rel (0) target = $region5
    $region4: #{rnn_model_forward.3} parent=1 // pred_region
      %s19 = ssub.s32 128, 128
      %20 = vsyncadd [#allocation5], %s19
      %s21 = sshll.u32 [#allocation4], 4
      %s22 = int_to_ptr.vmem [resolvable:$true] %s21
      %27 = dma.hbm_to_vmem [thread:$0]  %s0, 128, %s22, [#allocation5], 16, 16, 1
    $region5: #{rnn_model_forward.3} parent=1 // pred_fallthru
      _
    // Predicated region
    $region6: #{rnn_model_forward.3} parent=1 // pred_check
      _
    $region7: #{rnn_model_forward.3} parent=1 // pred_check_branch
      %29 = sbr.rel (0) target = $region9
    $region8: #{rnn_model_forward.3} parent=1 // pred_region
      %s31 = ssub.s32 4096, 4096
      %32 = vsyncadd [#allocation8], %s31
      %s33 = sshll.u32 [#allocation7], 4
      %s34 = int_to_ptr.vmem [resolvable:$true] %s33
      %39 = dma.hbm_to_vmem [thread:$0]  %s1, 4096, %s34, [#allocation8], 256, 256, 16
    $region9: #{rnn_model_forward.3} parent=1 // pred_fallthru
      _
    // Predicated region
    $region10: #{rnn_model_forward.3} parent=1 // pred_check
      _
    $region11: #{rnn_model_forward.3} parent=1 // pred_check_branch
      %41 = sbr.rel (0) target = $region13
    $region12: #{rnn_model_forward.3} parent=1 // pred_region
      %s43 = ssub.s32 64, 64
      %44 = vsyncadd [#allocation8], %s43
      %s46 = sshll.u32 [#allocation9], 4
      %s47 = int_to_ptr.vmem [resolvable:$true] %s46
      %49 = dma.hbm_to_vmem [thread:$0]  %s2, 64, %s47, [#allocation8]
    $region13: #{rnn_model_forward.3} parent=1 // pred_fallthru
      _
    // Predicated region
    $region14: #{rnn_model_forward.3} parent=1 // pred_check
      _
    $region15: #{rnn_model_forward.3} parent=1 // pred_check_branch
      %51 = sbr.rel (0) target = $region17
    $region16: #{rnn_model_forward.3} parent=1 // pred_region
      %s53 = ssub.s32 4096, 4096
      %54 = vsyncadd [#allocation11], %s53
      %s55 = sshll.u32 [#allocation10], 4
      %s56 = int_to_ptr.vmem [resolvable:$true] %s55
      %61 = dma.hbm_to_vmem [thread:$0]  %s3, 4096, %s56, [#allocation11], 256, 256, 16
    $region17: #{rnn_model_forward.3} parent=1 // pred_fallthru
      _
    // Predicated region
    $region18: #{rnn_model_forward.3} parent=1 // pred_check
      _
    $region19: #{rnn_model_forward.3} parent=1 // pred_check_branch
      %63 = sbr.rel (0) target = $region21
    $region20: #{rnn_model_forward.3} parent=1 // pred_region
      %s65 = ssub.s32 1024, 1024
      %66 = vsyncadd [#allocation11], %s65
      %s67 = sshll.u32 [#allocation12], 4
      %s68 = int_to_ptr.vmem [resolvable:$true] %s67
      %73 = dma.hbm_to_vmem [thread:$0]  %s4, 1024, %s68, [#allocation11], 64, 64, 4
    $region21: #{rnn_model_forward.3} parent=1 // pred_fallthru
      _
    // Predicated region
    $region22: #{rnn_model_forward.3} parent=1 // pred_check
      _
    $region23: #{rnn_model_forward.3} parent=1 // pred_check_branch
      %75 = sbr.rel (0) target = $region25
    $region24: #{rnn_model_forward.3} parent=1 // pred_region
      %s77 = ssub.s32 16, 16
      %78 = vsyncadd [#allocation14], %s77
      %s80 = sshll.u32 [#allocation13], 4
      %s81 = int_to_ptr.vmem [resolvable:$true] %s80
      %83 = dma.hbm_to_vmem [thread:$0]  %s5, 16, %s81, [#allocation14]
    $region25: #{rnn_model_forward.3} parent=1 // pred_fallthru
      _
    // Predicated region
    $region26: #{rnn_model_forward.3} parent=1 // pred_check
      _
    $region27: #{rnn_model_forward.3} parent=1 // pred_check_branch
      %85 = sbr.rel (0) target = $region29
    $region28: #{rnn_model_forward.3} parent=1 // pred_region
      %86 = dma.done [#allocation5], 128
    $region29: #{rnn_model_forward.3} parent=1 // pred_fallthru
      _
    // Predicated region
    $region30: #{rnn_model_forward.3} parent=1 // pred_check
      _
    $region31: #{rnn_model_forward.3} parent=1 // pred_check_branch
      %88 = sbr.rel (0) target = $region33
    $region32: #{rnn_model_forward.3} parent=1 // pred_region
      %89 = dma.done [#allocation8], 4096
    $region33: #{rnn_model_forward.3} parent=1 // pred_fallthru
      _
    // Predicated region
    $region34: #{rnn_model_forward.3} parent=1 // pred_check
      _
    $region35: #{rnn_model_forward.3} parent=1 // pred_check_branch
      %91 = sbr.rel (0) target = $region37
    $region36: #{rnn_model_forward.3} parent=1 // pred_region
      %92 = dma.done [#allocation8], 64
    $region37: #{rnn_model_forward.3} parent=1 // pred_fallthru
      _
    // Predicated region
    $region38: #{rnn_model_forward.3} parent=1 // pred_check
      _
    $region39: #{rnn_model_forward.3} parent=1 // pred_check_branch
      %94 = sbr.rel (0) target = $region41
    $region40: #{rnn_model_forward.3} parent=1 // pred_region
      %95 = dma.done [#allocation11], 4096
    $region41: #{rnn_model_forward.3} parent=1 // pred_fallthru
      _
    // Predicated region
    $region42: #{rnn_model_forward.3} parent=1 // pred_check
      _
    $region43: #{rnn_model_forward.3} parent=1 // pred_check_branch
      %97 = sbr.rel (0) target = $region45
    $region44: #{rnn_model_forward.3} parent=1 // pred_region
      %98 = dma.done [#allocation11], 1024
    $region45: #{rnn_model_forward.3} parent=1 // pred_fallthru
      _
    // Predicated region
    $region46: #{rnn_model_forward.3} parent=1 // pred_check
      _
    $region47: #{rnn_model_forward.3} parent=1 // pred_check_branch
      %100 = sbr.rel (0) target = $region49
    $region48: #{rnn_model_forward.3} parent=1 // pred_region
      %101 = dma.done [#allocation14], 16
    $region49: #{rnn_model_forward.3} parent=1 // pred_fallthru
      _
    %p103 = scmp.eq.s32.totalorder 0, 0
    // Predicated region
    $region50: #{rnn_model_forward.3} parent=1 // pred_check
      %p104 = pneg %p103
    $region51: #{rnn_model_forward.3} parent=1 // pred_check_branch
      %106 = sbr.rel (%p104) target = $region53
    $region52: #{rnn_model_forward.3} parent=1 // pred_region
      %107 = vst [vmem:[#allocation2] sm:$0x3] 0.0
      %108 = vst [vmem:[#allocation3] sm:$0x3] 0.0
    $region53: #{rnn_model_forward.3} parent=1 // pred_fallthru
      _
    %v109 = vld [vmem:[#allocation7] sm:$0xff]
    %v110 = vld [vmem:[#allocation7 + $0x8] sm:$0xff]
    %v111 = vld [vmem:[#allocation7 + $0x10] sm:$0xff]
    %v112 = vld [vmem:[#allocation7 + $0x18] sm:$0xff]
    %v113 = vld [vmem:[#allocation7 + $0x20] sm:$0xff]
    %v114 = vld [vmem:[#allocation7 + $0x28] sm:$0xff]
    %v115 = vld [vmem:[#allocation7 + $0x30] sm:$0xff]
    %v116 = vld [vmem:[#allocation7 + $0x38] sm:$0xff]
    %v117 = vld [vmem:[#allocation7 + $0x40] sm:$0xff]
    %v118 = vld [vmem:[#allocation7 + $0x48] sm:$0xff]
    %v119 = vld [vmem:[#allocation7 + $0x50] sm:$0xff]
    %v120 = vld [vmem:[#allocation7 + $0x58] sm:$0xff]
    %v121 = vld [vmem:[#allocation7 + $0x60] sm:$0xff]
    %v122 = vld [vmem:[#allocation7 + $0x68] sm:$0xff]
    %v123 = vld [vmem:[#allocation7 + $0x70] sm:$0xff]
    %v124 = vld [vmem:[#allocation7 + $0x78] sm:$0xff]
    %v125 = vld [vmem:[#allocation7 + $0x80] sm:$0xff]
    %v126 = vld [vmem:[#allocation7 + $0x88] sm:$0xff]
    %v127 = vld [vmem:[#allocation7 + $0x90] sm:$0xff]
    %v128 = vld [vmem:[#allocation7 + $0x98] sm:$0xff]
    %v129 = vld [vmem:[#allocation7 + $0xa0] sm:$0xff]
    %v130 = vld [vmem:[#allocation7 + $0xa8] sm:$0xff]
    %v131 = vld [vmem:[#allocation7 + $0xb0] sm:$0xff]
    %v132 = vld [vmem:[#allocation7 + $0xb8] sm:$0xff]
    %v133 = vld [vmem:[#allocation7 + $0xc0] sm:$0xff]
    %v134 = vld [vmem:[#allocation7 + $0xc8] sm:$0xff]
    %v135 = vld [vmem:[#allocation7 + $0xd0] sm:$0xff]
    %v136 = vld [vmem:[#allocation7 + $0xd8] sm:$0xff]
    %v137 = vld [vmem:[#allocation7 + $0xe0] sm:$0xff]
    %v138 = vld [vmem:[#allocation7 + $0xe8] sm:$0xff]
    %v139 = vld [vmem:[#allocation7 + $0xf0] sm:$0xff]
    %v140 = vld [vmem:[#allocation7 + $0xf8] sm:$0xff]
    %v141 = vld [vmem:[#allocation10] sm:$0xff]
    %v142 = vld [vmem:[#allocation10 + $0x8] sm:$0xff]
    %v143 = vld [vmem:[#allocation10 + $0x10] sm:$0xff]
    %v144 = vld [vmem:[#allocation10 + $0x18] sm:$0xff]
    %v145 = vld [vmem:[#allocation10 + $0x20] sm:$0xff]
    %v146 = vld [vmem:[#allocation10 + $0x28] sm:$0xff]
    %v147 = vld [vmem:[#allocation10 + $0x30] sm:$0xff]
    %v148 = vld [vmem:[#allocation10 + $0x38] sm:$0xff]
    %v149 = vld [vmem:[#allocation10 + $0x40] sm:$0xff]
    %v150 = vld [vmem:[#allocation10 + $0x48] sm:$0xff]
    %v151 = vld [vmem:[#allocation10 + $0x50] sm:$0xff]
    %v152 = vld [vmem:[#allocation10 + $0x58] sm:$0xff]
    %v153 = vld [vmem:[#allocation10 + $0x60] sm:$0xff]
    %v154 = vld [vmem:[#allocation10 + $0x68] sm:$0xff]
    %v155 = vld [vmem:[#allocation10 + $0x70] sm:$0xff]
    %v156 = vld [vmem:[#allocation10 + $0x78] sm:$0xff]
    %v157 = vld [vmem:[#allocation10 + $0x80] sm:$0xff]
    %v158 = vld [vmem:[#allocation10 + $0x88] sm:$0xff]
    %v159 = vld [vmem:[#allocation10 + $0x90] sm:$0xff]
    %v160 = vld [vmem:[#allocation10 + $0x98] sm:$0xff]
    %v161 = vld [vmem:[#allocation10 + $0xa0] sm:$0xff]
    %v162 = vld [vmem:[#allocation10 + $0xa8] sm:$0xff]
    %v163 = vld [vmem:[#allocation10 + $0xb0] sm:$0xff]
    %v164 = vld [vmem:[#allocation10 + $0xb8] sm:$0xff]
    %v165 = vld [vmem:[#allocation10 + $0xc0] sm:$0xff]
    %v166 = vld [vmem:[#allocation10 + $0xc8] sm:$0xff]
    %v167 = vld [vmem:[#allocation10 + $0xd0] sm:$0xff]
    %v168 = vld [vmem:[#allocation10 + $0xd8] sm:$0xff]
    %v169 = vld [vmem:[#allocation10 + $0xe0] sm:$0xff]
    %v170 = vld [vmem:[#allocation10 + $0xe8] sm:$0xff]
    %v171 = vld [vmem:[#allocation10 + $0xf0] sm:$0xff]
    %v172 = vld [vmem:[#allocation10 + $0xf8] sm:$0xff]
    %v173 = vld [vmem:[#allocation9] sm:$0xf]
    %v175 = vlaneseq
    %v176 = vshrl.u32 %v175, 7
    %v177 = vsub.s32 0, %v176
    %v178 = vrot.slane %v173, %v177
    %v179 = vlaneseq
    %v180 = vshrl.u32 %v179, 7
    %v181 = vsub.s32 1, %v180
    %v182 = vrot.slane %v173, %v181
    %v183 = vlaneseq
    %v184 = vshrl.u32 %v183, 7
    %v185 = vsub.s32 2, %v184
    %v186 = vrot.slane %v173, %v185
    %v187 = vlaneseq
    %v188 = vshrl.u32 %v187, 7
    %v189 = vsub.s32 3, %v188
    %v190 = vrot.slane %v173, %v189
    %v195 = vld [vmem:[#allocation2] sm:$0x3]
    %v196 = vld [vmem:[#allocation3] sm:$0x3]
    %v197 = vld [vmem:[#allocation4] sm:$0x1]
    %v230 = vunpack.c.l.b16 %v109
    %v231 = vunpack.c.h.b16 %v109
    %v232 = vunpack.c.l.b16 %v110
    %v233 = vunpack.c.h.b16 %v110
    %v234 = vunpack.c.l.b16 %v111
    %v235 = vunpack.c.h.b16 %v111
    %v236 = vunpack.c.l.b16 %v112
    %v237 = vunpack.c.h.b16 %v112
    %v238 = vunpack.c.l.b16 %v113
    %v239 = vunpack.c.h.b16 %v113
    %v240 = vunpack.c.l.b16 %v114
    %v241 = vunpack.c.h.b16 %v114
    %v242 = vunpack.c.l.b16 %v115
    %v243 = vunpack.c.h.b16 %v115
    %v244 = vunpack.c.l.b16 %v116
    %v245 = vunpack.c.h.b16 %v116
    %v246 = vunpack.c.l.b16 %v117
    %v247 = vunpack.c.h.b16 %v117
    %v248 = vunpack.c.l.b16 %v118
    %v249 = vunpack.c.h.b16 %v118
    %v250 = vunpack.c.l.b16 %v119
    %v251 = vunpack.c.h.b16 %v119
    %v252 = vunpack.c.l.b16 %v120
    %v253 = vunpack.c.h.b16 %v120
    %v254 = vunpack.c.l.b16 %v121
    %v255 = vunpack.c.h.b16 %v121
    %v256 = vunpack.c.l.b16 %v122
    %v257 = vunpack.c.h.b16 %v122
    %v258 = vunpack.c.l.b16 %v123
    %v259 = vunpack.c.h.b16 %v123
    %v260 = vunpack.c.l.b16 %v124
    %v261 = vunpack.c.h.b16 %v124
    %v262 = vunpack.c.l.b16 %v125
    %v263 = vunpack.c.h.b16 %v125
    %v264 = vunpack.c.l.b16 %v126
    %v265 = vunpack.c.h.b16 %v126
    %v266 = vunpack.c.l.b16 %v127
    %v267 = vunpack.c.h.b16 %v127
    %v268 = vunpack.c.l.b16 %v128
    %v269 = vunpack.c.h.b16 %v128
    %v270 = vunpack.c.l.b16 %v129
    %v271 = vunpack.c.h.b16 %v129
    %v272 = vunpack.c.l.b16 %v130
    %v273 = vunpack.c.h.b16 %v130
    %v274 = vunpack.c.l.b16 %v131
    %v275 = vunpack.c.h.b16 %v131
    %v276 = vunpack.c.l.b16 %v132
    %v277 = vunpack.c.h.b16 %v132
    %v278 = vunpack.c.l.b16 %v133
    %v279 = vunpack.c.h.b16 %v133
    %v280 = vunpack.c.l.b16 %v134
    %v281 = vunpack.c.h.b16 %v134
    %v282 = vunpack.c.l.b16 %v135
    %v283 = vunpack.c.h.b16 %v135
    %v284 = vunpack.c.l.b16 %v136
    %v285 = vunpack.c.h.b16 %v136
    %v286 = vunpack.c.l.b16 %v137
    %v287 = vunpack.c.h.b16 %v137
    %v288 = vunpack.c.l.b16 %v138
    %v289 = vunpack.c.h.b16 %v138
    %v290 = vunpack.c.l.b16 %v139
    %v291 = vunpack.c.h.b16 %v139
    %v292 = vunpack.c.l.b16 %v140
    %v293 = vunpack.c.h.b16 %v140
    %v294 = vpack.c.b16 %v234, %v230
    %v295 = vpack.c.b16 %v235, %v231
    %v296 = vpack.c.b16 %v236, %v232
    %v297 = vpack.c.b16 %v237, %v233
    %v298 = vpack.c.b16 %v242, %v238
    %v299 = vpack.c.b16 %v243, %v239
    %v300 = vpack.c.b16 %v244, %v240
    %v301 = vpack.c.b16 %v245, %v241
    %v302 = vpack.c.b16 %v250, %v246
    %v303 = vpack.c.b16 %v251, %v247
    %v304 = vpack.c.b16 %v252, %v248
    %v305 = vpack.c.b16 %v253, %v249
    %v306 = vpack.c.b16 %v258, %v254
    %v307 = vpack.c.b16 %v259, %v255
    %v308 = vpack.c.b16 %v260, %v256
    %v309 = vpack.c.b16 %v261, %v257
    %v310 = vpack.c.b16 %v266, %v262
    %v311 = vpack.c.b16 %v267, %v263
    %v312 = vpack.c.b16 %v268, %v264
    %v313 = vpack.c.b16 %v269, %v265
    %v314 = vpack.c.b16 %v274, %v270
    %v315 = vpack.c.b16 %v275, %v271
    %v316 = vpack.c.b16 %v276, %v272
    %v317 = vpack.c.b16 %v277, %v273
    %v318 = vpack.c.b16 %v282, %v278
    %v319 = vpack.c.b16 %v283, %v279
    %v320 = vpack.c.b16 %v284, %v280
    %v321 = vpack.c.b16 %v285, %v281
    %v322 = vpack.c.b16 %v290, %v286
    %v323 = vpack.c.b16 %v291, %v287
    %v324 = vpack.c.b16 %v292, %v288
    %v325 = vpack.c.b16 %v293, %v289
    %358 = vmatprep.subr.bf16.mxu0 %v295
    %359 = vmatpush1.bf16.msra.mxu0 %v294
    %360 = vmatprep.subr.bf16.mxu0 %v299
    %361 = vmatpush1.bf16.msra.mxu0 %v298
    %362 = vmatprep.subr.bf16.mxu0 %v303
    %363 = vmatpush1.bf16.msra.mxu0 %v302
    %364 = vmatprep.subr.bf16.mxu0 %v307
    %365 = vmatpush1.bf16.msra.mxu0 %v306
    %366 = vmatprep.subr.bf16.mxu0 %v311
    %367 = vmatpush1.bf16.msra.mxu0 %v310
    %368 = vmatprep.subr.bf16.mxu0 %v315
    %369 = vmatpush1.bf16.msra.mxu0 %v314
    %370 = vmatprep.subr.bf16.mxu0 %v319
    %371 = vmatpush1.bf16.msra.mxu0 %v318
    %372 = vmatprep.subr.bf16.mxu0 %v323
    %373 = vmatpush1.bf16.msra.mxu0 %v322
    %374 = vmatprep.subr.bf16.mxu0 0
    %375 = vmatpush1.bf16.msra.mxu0 0
    %376 = vmatprep.subr.bf16.mxu0 0
    %377 = vmatpush1.bf16.msra.mxu0 0
    %378 = vmatprep.subr.bf16.mxu0 0
    %379 = vmatpush1.bf16.msra.mxu0 0
    %380 = vmatprep.subr.bf16.mxu0 0
    %381 = vmatpush1.bf16.msra.mxu0 0
    %382 = vmatprep.subr.bf16.mxu0 0
    %383 = vmatpush1.bf16.msra.mxu0 0
    %384 = vmatprep.subr.bf16.mxu0 0
    %385 = vmatpush1.bf16.msra.mxu0 0
    %386 = vmatprep.subr.bf16.mxu0 0
    %387 = vmatpush1.bf16.msra.mxu0 0
    %388 = vmatprep.subr.bf16.mxu0 0
    %389 = vmatpush1.bf16.msra.mxu0 0
    %390 = vmatprep.mubr.bf16.mxu0 0
    %391 = vmatmul.mubr.bf16.gmra.mrb[0].mxu0 %v197
    %v392 = vpop.f32.mrb[0].mxu0
    %v393 = vadd.f32 %v178, %v392
    %v394 = vpop.f32.mrb[0].mxu0
    %v395 = vadd.f32 %v182, %v394
    %v396 = vpop.f32.mrb[0].mxu0
    %v397 = vpop.f32.mrb[0].mxu0
    %398 = vdwg.mxu0
    %399 = vmatprep.subr.bf16.mxu0 %v297
    %400 = vmatpush1.bf16.msra.mxu0 %v296
    %401 = vmatprep.subr.bf16.mxu0 %v301
    %402 = vmatpush1.bf16.msra.mxu0 %v300
    %403 = vmatprep.subr.bf16.mxu0 %v305
    %404 = vmatpush1.bf16.msra.mxu0 %v304
    %405 = vmatprep.subr.bf16.mxu0 %v309
    %406 = vmatpush1.bf16.msra.mxu0 %v308
    %407 = vmatprep.subr.bf16.mxu0 %v313
    %408 = vmatpush1.bf16.msra.mxu0 %v312
    %409 = vmatprep.subr.bf16.mxu0 %v317
    %410 = vmatpush1.bf16.msra.mxu0 %v316
    %411 = vmatprep.subr.bf16.mxu0 %v321
    %412 = vmatpush1.bf16.msra.mxu0 %v320
    %413 = vmatprep.subr.bf16.mxu0 %v325
    %414 = vmatpush1.bf16.msra.mxu0 %v324
    %415 = vmatprep.subr.bf16.mxu0 0
    %416 = vmatpush1.bf16.msra.mxu0 0
    %417 = vmatprep.subr.bf16.mxu0 0
    %418 = vmatpush1.bf16.msra.mxu0 0
    %419 = vmatprep.subr.bf16.mxu0 0
    %420 = vmatpush1.bf16.msra.mxu0 0
    %421 = vmatprep.subr.bf16.mxu0 0
    %422 = vmatpush1.bf16.msra.mxu0 0
    %423 = vmatprep.subr.bf16.mxu0 0
    %424 = vmatpush1.bf16.msra.mxu0 0
    %425 = vmatprep.subr.bf16.mxu0 0
    %426 = vmatpush1.bf16.msra.mxu0 0
    %427 = vmatprep.subr.bf16.mxu0 0
    %428 = vmatpush1.bf16.msra.mxu0 0
    %429 = vmatprep.subr.bf16.mxu0 0
    %430 = vmatpush1.bf16.msra.mxu0 0
    %431 = vmatprep.mubr.bf16.mxu0 0
    %432 = vmatmul.mubr.bf16.gmra.mrb[0].mxu0 %v197
    %v433 = vpop.f32.mrb[0].mxu0
    %v434 = vadd.f32 %v186, %v433
    %v435 = vpop.f32.mrb[0].mxu0
    %v436 = vadd.f32 %v190, %v435
    %v437 = vpop.f32.mrb[0].mxu0
    %v438 = vpop.f32.mrb[0].mxu0
    %439 = vdwg.mxu0
    %v440 = vpack.c.bf16 %v195, %v195
    %v473 = vunpack.c.l.b16 %v141
    %v474 = vunpack.c.h.b16 %v141
    %v475 = vunpack.c.l.b16 %v142
    %v476 = vunpack.c.h.b16 %v142
    %v477 = vunpack.c.l.b16 %v143
    %v478 = vunpack.c.h.b16 %v143
    %v479 = vunpack.c.l.b16 %v144
    %v480 = vunpack.c.h.b16 %v144
    %v481 = vunpack.c.l.b16 %v145
    %v482 = vunpack.c.h.b16 %v145
    %v483 = vunpack.c.l.b16 %v146
    %v484 = vunpack.c.h.b16 %v146
    %v485 = vunpack.c.l.b16 %v147
    %v486 = vunpack.c.h.b16 %v147
    %v487 = vunpack.c.l.b16 %v148
    %v488 = vunpack.c.h.b16 %v148
    %v489 = vunpack.c.l.b16 %v149
    %v490 = vunpack.c.h.b16 %v149
    %v491 = vunpack.c.l.b16 %v150
    %v492 = vunpack.c.h.b16 %v150
    %v493 = vunpack.c.l.b16 %v151
    %v494 = vunpack.c.h.b16 %v151
    %v495 = vunpack.c.l.b16 %v152
    %v496 = vunpack.c.h.b16 %v152
    %v497 = vunpack.c.l.b16 %v153
    %v498 = vunpack.c.h.b16 %v153
    %v499 = vunpack.c.l.b16 %v154
    %v500 = vunpack.c.h.b16 %v154
    %v501 = vunpack.c.l.b16 %v155
    %v502 = vunpack.c.h.b16 %v155
    %v503 = vunpack.c.l.b16 %v156
    %v504 = vunpack.c.h.b16 %v156
    %v505 = vunpack.c.l.b16 %v157
    %v506 = vunpack.c.h.b16 %v157
    %v507 = vunpack.c.l.b16 %v158
    %v508 = vunpack.c.h.b16 %v158
    %v509 = vunpack.c.l.b16 %v159
    %v510 = vunpack.c.h.b16 %v159
    %v511 = vunpack.c.l.b16 %v160
    %v512 = vunpack.c.h.b16 %v160
    %v513 = vunpack.c.l.b16 %v161
    %v514 = vunpack.c.h.b16 %v161
    %v515 = vunpack.c.l.b16 %v162
    %v516 = vunpack.c.h.b16 %v162
    %v517 = vunpack.c.l.b16 %v163
    %v518 = vunpack.c.h.b16 %v163
    %v519 = vunpack.c.l.b16 %v164
    %v520 = vunpack.c.h.b16 %v164
    %v521 = vunpack.c.l.b16 %v165
    %v522 = vunpack.c.h.b16 %v165
    %v523 = vunpack.c.l.b16 %v166
    %v524 = vunpack.c.h.b16 %v166
    %v525 = vunpack.c.l.b16 %v167
    %v526 = vunpack.c.h.b16 %v167
    %v527 = vunpack.c.l.b16 %v168
    %v528 = vunpack.c.h.b16 %v168
    %v529 = vunpack.c.l.b16 %v169
    %v530 = vunpack.c.h.b16 %v169
    %v531 = vunpack.c.l.b16 %v170
    %v532 = vunpack.c.h.b16 %v170
    %v533 = vunpack.c.l.b16 %v171
    %v534 = vunpack.c.h.b16 %v171
    %v535 = vunpack.c.l.b16 %v172
    %v536 = vunpack.c.h.b16 %v172
    %v537 = vpack.c.b16 %v477, %v473
    %v538 = vpack.c.b16 %v478, %v474
    %v539 = vpack.c.b16 %v479, %v475
    %v540 = vpack.c.b16 %v480, %v476
    %v541 = vpack.c.b16 %v485, %v481
    %v542 = vpack.c.b16 %v486, %v482
    %v543 = vpack.c.b16 %v487, %v483
    %v544 = vpack.c.b16 %v488, %v484
    %v545 = vpack.c.b16 %v493, %v489
    %v546 = vpack.c.b16 %v494, %v490
    %v547 = vpack.c.b16 %v495, %v491
    %v548 = vpack.c.b16 %v496, %v492
    %v549 = vpack.c.b16 %v501, %v497
    %v550 = vpack.c.b16 %v502, %v498
    %v551 = vpack.c.b16 %v503, %v499
    %v552 = vpack.c.b16 %v504, %v500
    %v553 = vpack.c.b16 %v509, %v505
    %v554 = vpack.c.b16 %v510, %v506
    %v555 = vpack.c.b16 %v511, %v507
    %v556 = vpack.c.b16 %v512, %v508
    %v557 = vpack.c.b16 %v517, %v513
    %v558 = vpack.c.b16 %v518, %v514
    %v559 = vpack.c.b16 %v519, %v515
    %v560 = vpack.c.b16 %v520, %v516
    %v561 = vpack.c.b16 %v525, %v521
    %v562 = vpack.c.b16 %v526, %v522
    %v563 = vpack.c.b16 %v527, %v523
    %v564 = vpack.c.b16 %v528, %v524
    %v565 = vpack.c.b16 %v533, %v529
    %v566 = vpack.c.b16 %v534, %v530
    %v567 = vpack.c.b16 %v535, %v531
    %v568 = vpack.c.b16 %v536, %v532
    %601 = vmatprep.subr.bf16.mxu0 %v538
    %602 = vmatpush1.bf16.msra.mxu0 %v537
    %603 = vmatprep.subr.bf16.mxu0 %v542
    %604 = vmatpush1.bf16.msra.mxu0 %v541
    %605 = vmatprep.subr.bf16.mxu0 %v546
    %606 = vmatpush1.bf16.msra.mxu0 %v545
    %607 = vmatprep.subr.bf16.mxu0 %v550
    %608 = vmatpush1.bf16.msra.mxu0 %v549
    %609 = vmatprep.subr.bf16.mxu0 %v554
    %610 = vmatpush1.bf16.msra.mxu0 %v553
    %611 = vmatprep.subr.bf16.mxu0 %v558
    %612 = vmatpush1.bf16.msra.mxu0 %v557
    %613 = vmatprep.subr.bf16.mxu0 %v562
    %614 = vmatpush1.bf16.msra.mxu0 %v561
    %615 = vmatprep.subr.bf16.mxu0 %v566
    %616 = vmatpush1.bf16.msra.mxu0 %v565
    %617 = vmatprep.subr.bf16.mxu0 0
    %618 = vmatpush1.bf16.msra.mxu0 0
    %619 = vmatprep.subr.bf16.mxu0 0
    %620 = vmatpush1.bf16.msra.mxu0 0
    %621 = vmatprep.subr.bf16.mxu0 0
    %622 = vmatpush1.bf16.msra.mxu0 0
    %623 = vmatprep.subr.bf16.mxu0 0
    %624 = vmatpush1.bf16.msra.mxu0 0
    %625 = vmatprep.subr.bf16.mxu0 0
    %626 = vmatpush1.bf16.msra.mxu0 0
    %627 = vmatprep.subr.bf16.mxu0 0
    %628 = vmatpush1.bf16.msra.mxu0 0
    %629 = vmatprep.subr.bf16.mxu0 0
    %630 = vmatpush1.bf16.msra.mxu0 0
    %631 = vmatprep.subr.bf16.mxu0 0
    %632 = vmatpush1.bf16.msra.mxu0 0
    %633 = vmatprep.mubr.bf16.mxu0 0
    %634 = vmatmul.mubr.bf16.gmra.mrb[0].mxu0 %v440
    %v635 = vpop.f32.mrb[0].mxu0
    %v636 = vadd.f32 0.0, %v635
    %v637 = vpop.f32.mrb[0].mxu0
    %v638 = vadd.f32 0.0, %v637
    %v639 = vpop.f32.mrb[0].mxu0
    %v640 = vpop.f32.mrb[0].mxu0
    %641 = vdwg.mxu0
    %642 = vmatprep.subr.bf16.mxu0 %v540
    %643 = vmatpush1.bf16.msra.mxu0 %v539
    %644 = vmatprep.subr.bf16.mxu0 %v544
    %645 = vmatpush1.bf16.msra.mxu0 %v543
    %646 = vmatprep.subr.bf16.mxu0 %v548
    %647 = vmatpush1.bf16.msra.mxu0 %v547
    %648 = vmatprep.subr.bf16.mxu0 %v552
    %649 = vmatpush1.bf16.msra.mxu0 %v551
    %650 = vmatprep.subr.bf16.mxu0 %v556
    %651 = vmatpush1.bf16.msra.mxu0 %v555
    %652 = vmatprep.subr.bf16.mxu0 %v560
    %653 = vmatpush1.bf16.msra.mxu0 %v559
    %654 = vmatprep.subr.bf16.mxu0 %v564
    %655 = vmatpush1.bf16.msra.mxu0 %v563
    %656 = vmatprep.subr.bf16.mxu0 %v568
    %657 = vmatpush1.bf16.msra.mxu0 %v567
    %658 = vmatprep.subr.bf16.mxu0 0
    %659 = vmatpush1.bf16.msra.mxu0 0
    %660 = vmatprep.subr.bf16.mxu0 0
    %661 = vmatpush1.bf16.msra.mxu0 0
    %662 = vmatprep.subr.bf16.mxu0 0
    %663 = vmatpush1.bf16.msra.mxu0 0
    %664 = vmatprep.subr.bf16.mxu0 0
    %665 = vmatpush1.bf16.msra.mxu0 0
    %666 = vmatprep.subr.bf16.mxu0 0
    %667 = vmatpush1.bf16.msra.mxu0 0
    %668 = vmatprep.subr.bf16.mxu0 0
    %669 = vmatpush1.bf16.msra.mxu0 0
    %670 = vmatprep.subr.bf16.mxu0 0
    %671 = vmatpush1.bf16.msra.mxu0 0
    %672 = vmatprep.subr.bf16.mxu0 0
    %673 = vmatpush1.bf16.msra.mxu0 0
    %674 = vmatprep.mubr.bf16.mxu0 0
    %675 = vmatmul.mubr.bf16.gmra.mrb[0].mxu0 %v440
    %v676 = vpop.f32.mrb[0].mxu0
    %v677 = vadd.f32 0.0, %v676
    %v678 = vpop.f32.mrb[0].mxu0
    %v679 = vadd.f32 0.0, %v678
    %v680 = vpop.f32.mrb[0].mxu0
    %v681 = vpop.f32.mrb[0].mxu0
    %682 = vdwg.mxu0
    %v683 = vadd.f32 %v393, %v636
    %v684 = vadd.f32 %v395, %v638
    %v685 = vadd.f32 %v434, %v677
    %v686 = vadd.f32 %v436, %v679
    %v687 = vxor.u32 %v683, 2147483648
    %v688 = vxor.u32 %v684, 2147483648
    %v689 = vxor.u32 %v685, 2147483648
    %v690 = vmul.f32 %v687, 1.442695
    %v691 = vpow.pop %v690
    %v692 = vmul.f32 %v688, 1.442695
    %v693 = vpow.pop %v692
    %v694 = vmul.f32 %v689, 1.442695
    %v695 = vpow.pop %v694
    %v696 = vadd.f32 %v691, 1.0
    %v697 = vadd.f32 %v693, 1.0
    %v698 = vadd.f32 %v695, 1.0
    %v699 = vrcp.pop %v696
    %v700 = vmul.f32 1.0, %v699
    %v701 = vrcp.pop %v697
    %v702 = vmul.f32 1.0, %v701
    %v703 = vrcp.pop %v698
    %v704 = vmul.f32 1.0, %v703
    %v705 = vtanh.pop %v686
    %v706 = vmul.f32 %v702, %v196
    %v707 = vmul.f32 %v700, %v705
    %v708 = vadd.f32 %v706, %v707
    %v709 = vtanh.pop %v708
    %v710 = vmul.f32 %v704, %v709
    %s711 = scalar_lea.vmem [#allocation4], 1
    %v712 = vld [vmem:[%s711] sm:$0x1]
    %713 = vmatprep.subr.bf16.mxu0 %v295
    %714 = vmatpush1.bf16.msra.mxu0 %v294
    %715 = vmatprep.subr.bf16.mxu0 %v299
    %716 = vmatpush1.bf16.msra.mxu0 %v298
    %717 = vmatprep.subr.bf16.mxu0 %v303
    %718 = vmatpush1.bf16.msra.mxu0 %v302
    %719 = vmatprep.subr.bf16.mxu0 %v307
    %720 = vmatpush1.bf16.msra.mxu0 %v306
    %721 = vmatprep.subr.bf16.mxu0 %v311
    %722 = vmatpush1.bf16.msra.mxu0 %v310
    %723 = vmatprep.subr.bf16.mxu0 %v315
    %724 = vmatpush1.bf16.msra.mxu0 %v314
    %725 = vmatprep.subr.bf16.mxu0 %v319
    %726 = vmatpush1.bf16.msra.mxu0 %v318
    %727 = vmatprep.subr.bf16.mxu0 %v323
    %728 = vmatpush1.bf16.msra.mxu0 %v322
    %729 = vmatprep.subr.bf16.mxu0 0
    %730 = vmatpush1.bf16.msra.mxu0 0
    %731 = vmatprep.subr.bf16.mxu0 0
    %732 = vmatpush1.bf16.msra.mxu0 0
    %733 = vmatprep.subr.bf16.mxu0 0
    %734 = vmatpush1.bf16.msra.mxu0 0
    %735 = vmatprep.subr.bf16.mxu0 0
    %736 = vmatpush1.bf16.msra.mxu0 0
    %737 = vmatprep.subr.bf16.mxu0 0
    %738 = vmatpush1.bf16.msra.mxu0 0
    %739 = vmatprep.subr.bf16.mxu0 0
    %740 = vmatpush1.bf16.msra.mxu0 0
    %741 = vmatprep.subr.bf16.mxu0 0
    %742 = vmatpush1.bf16.msra.mxu0 0
    %743 = vmatprep.subr.bf16.mxu0 0
    %744 = vmatpush1.bf16.msra.mxu0 0
    %745 = vmatprep.mubr.bf16.mxu0 0
    %746 = vmatmul.mubr.bf16.gmra.mrb[0].mxu0 %v712
    %v747 = vpop.f32.mrb[0].mxu0
    %v748 = vadd.f32 %v178, %v747
    %v749 = vpop.f32.mrb[0].mxu0
    %v750 = vadd.f32 %v182, %v749
    %v751 = vpop.f32.mrb[0].mxu0
    %v752 = vpop.f32.mrb[0].mxu0
    %753 = vdwg.mxu0
    %754 = vmatprep.subr.bf16.mxu0 %v297
    %755 = vmatpush1.bf16.msra.mxu0 %v296
    %756 = vmatprep.subr.bf16.mxu0 %v301
    %757 = vmatpush1.bf16.msra.mxu0 %v300
    %758 = vmatprep.subr.bf16.mxu0 %v305
    %759 = vmatpush1.bf16.msra.mxu0 %v304
    %760 = vmatprep.subr.bf16.mxu0 %v309
    %761 = vmatpush1.bf16.msra.mxu0 %v308
    %762 = vmatprep.subr.bf16.mxu0 %v313
    %763 = vmatpush1.bf16.msra.mxu0 %v312
    %764 = vmatprep.subr.bf16.mxu0 %v317
    %765 = vmatpush1.bf16.msra.mxu0 %v316
    %766 = vmatprep.subr.bf16.mxu0 %v321
    %767 = vmatpush1.bf16.msra.mxu0 %v320
    %768 = vmatprep.subr.bf16.mxu0 %v325
    %769 = vmatpush1.bf16.msra.mxu0 %v324
    %770 = vmatprep.subr.bf16.mxu0 0
    %771 = vmatpush1.bf16.msra.mxu0 0
    %772 = vmatprep.subr.bf16.mxu0 0
    %773 = vmatpush1.bf16.msra.mxu0 0
    %774 = vmatprep.subr.bf16.mxu0 0
    %775 = vmatpush1.bf16.msra.mxu0 0
    %776 = vmatprep.subr.bf16.mxu0 0
    %777 = vmatpush1.bf16.msra.mxu0 0
    %778 = vmatprep.subr.bf16.mxu0 0
    %779 = vmatpush1.bf16.msra.mxu0 0
    %780 = vmatprep.subr.bf16.mxu0 0
    %781 = vmatpush1.bf16.msra.mxu0 0
    %782 = vmatprep.subr.bf16.mxu0 0
    %783 = vmatpush1.bf16.msra.mxu0 0
    %784 = vmatprep.subr.bf16.mxu0 0
    %785 = vmatpush1.bf16.msra.mxu0 0
    %786 = vmatprep.mubr.bf16.mxu0 0
    %787 = vmatmul.mubr.bf16.gmra.mrb[0].mxu0 %v712
    %v788 = vpop.f32.mrb[0].mxu0
    %v789 = vadd.f32 %v186, %v788
    %v790 = vpop.f32.mrb[0].mxu0
    %v791 = vadd.f32 %v190, %v790
    %v792 = vpop.f32.mrb[0].mxu0
    %v793 = vpop.f32.mrb[0].mxu0
    %794 = vdwg.mxu0
    %v795 = vpack.c.bf16 %v710, %v710
    %796 = vmatprep.subr.bf16.mxu0 %v538
    %797 = vmatpush1.bf16.msra.mxu0 %v537
    %798 = vmatprep.subr.bf16.mxu0 %v542
    %799 = vmatpush1.bf16.msra.mxu0 %v541
    %800 = vmatprep.subr.bf16.mxu0 %v546
    %801 = vmatpush1.bf16.msra.mxu0 %v545
    %802 = vmatprep.subr.bf16.mxu0 %v550
    %803 = vmatpush1.bf16.msra.mxu0 %v549
    %804 = vmatprep.subr.bf16.mxu0 %v554
    %805 = vmatpush1.bf16.msra.mxu0 %v553
    %806 = vmatprep.subr.bf16.mxu0 %v558
    %807 = vmatpush1.bf16.msra.mxu0 %v557
    %808 = vmatprep.subr.bf16.mxu0 %v562
    %809 = vmatpush1.bf16.msra.mxu0 %v561
    %810 = vmatprep.subr.bf16.mxu0 %v566
    %811 = vmatpush1.bf16.msra.mxu0 %v565
    %812 = vmatprep.subr.bf16.mxu0 0
    %813 = vmatpush1.bf16.msra.mxu0 0
    %814 = vmatprep.subr.bf16.mxu0 0
    %815 = vmatpush1.bf16.msra.mxu0 0
    %816 = vmatprep.subr.bf16.mxu0 0
    %817 = vmatpush1.bf16.msra.mxu0 0
    %818 = vmatprep.subr.bf16.mxu0 0
    %819 = vmatpush1.bf16.msra.mxu0 0
    %820 = vmatprep.subr.bf16.mxu0 0
    %821 = vmatpush1.bf16.msra.mxu0 0
    %822 = vmatprep.subr.bf16.mxu0 0
    %823 = vmatpush1.bf16.msra.mxu0 0
    %824 = vmatprep.subr.bf16.mxu0 0
    %825 = vmatpush1.bf16.msra.mxu0 0
    %826 = vmatprep.subr.bf16.mxu0 0
    %827 = vmatpush1.bf16.msra.mxu0 0
    %828 = vmatprep.mubr.bf16.mxu0 0
    %829 = vmatmul.mubr.bf16.gmra.mrb[0].mxu0 %v795
    %v830 = vpop.f32.mrb[0].mxu0
    %v831 = vadd.f32 0.0, %v830
    %v832 = vpop.f32.mrb[0].mxu0
    %v833 = vadd.f32 0.0, %v832
    %v834 = vpop.f32.mrb[0].mxu0
    %v835 = vpop.f32.mrb[0].mxu0
    %836 = vdwg.mxu0
    %837 = vmatprep.subr.bf16.mxu0 %v540
    %838 = vmatpush1.bf16.msra.mxu0 %v539
    %839 = vmatprep.subr.bf16.mxu0 %v544
    %840 = vmatpush1.bf16.msra.mxu0 %v543
    %841 = vmatprep.subr.bf16.mxu0 %v548
    %842 = vmatpush1.bf16.msra.mxu0 %v547
    %843 = vmatprep.subr.bf16.mxu0 %v552
    %844 = vmatpush1.bf16.msra.mxu0 %v551
    %845 = vmatprep.subr.bf16.mxu0 %v556
    %846 = vmatpush1.bf16.msra.mxu0 %v555
    %847 = vmatprep.subr.bf16.mxu0 %v560
    %848 = vmatpush1.bf16.msra.mxu0 %v559
    %849 = vmatprep.subr.bf16.mxu0 %v564
    %850 = vmatpush1.bf16.msra.mxu0 %v563
    %851 = vmatprep.subr.bf16.mxu0 %v568
    %852 = vmatpush1.bf16.msra.mxu0 %v567
    %853 = vmatprep.subr.bf16.mxu0 0
    %854 = vmatpush1.bf16.msra.mxu0 0
    %855 = vmatprep.subr.bf16.mxu0 0
    %856 = vmatpush1.bf16.msra.mxu0 0
    %857 = vmatprep.subr.bf16.mxu0 0
    %858 = vmatpush1.bf16.msra.mxu0 0
    %859 = vmatprep.subr.bf16.mxu0 0
    %860 = vmatpush1.bf16.msra.mxu0 0
    %861 = vmatprep.subr.bf16.mxu0 0
    %862 = vmatpush1.bf16.msra.mxu0 0
    %863 = vmatprep.subr.bf16.mxu0 0
    %864 = vmatpush1.bf16.msra.mxu0 0
    %865 = vmatprep.subr.bf16.mxu0 0
    %866 = vmatpush1.bf16.msra.mxu0 0
    %867 = vmatprep.subr.bf16.mxu0 0
    %868 = vmatpush1.bf16.msra.mxu0 0
    %869 = vmatprep.mubr.bf16.mxu0 0
    %870 = vmatmul.mubr.bf16.gmra.mrb[0].mxu0 %v795
    %v871 = vpop.f32.mrb[0].mxu0
    %v872 = vadd.f32 0.0, %v871
    %v873 = vpop.f32.mrb[0].mxu0
    %v874 = vadd.f32 0.0, %v873
    %v875 = vpop.f32.mrb[0].mxu0
    %v876 = vpop.f32.mrb[0].mxu0
    %877 = vdwg.mxu0
    %v878 = vadd.f32 %v748, %v831
    %v879 = vadd.f32 %v750, %v833
    %v880 = vadd.f32 %v789, %v872
    %v881 = vadd.f32 %v791, %v874
    %v882 = vxor.u32 %v878, 2147483648
    %v883 = vxor.u32 %v879, 2147483648
    %v884 = vxor.u32 %v880, 2147483648
    %v885 = vmul.f32 %v882, 1.442695
    %v886 = vpow.pop %v885
    %v887 = vmul.f32 %v883, 1.442695
    %v888 = vpow.pop %v887
    %v889 = vmul.f32 %v884, 1.442695
    %v890 = vpow.pop %v889
    %v891 = vadd.f32 %v886, 1.0
    %v892 = vadd.f32 %v888, 1.0
    %v893 = vadd.f32 %v890, 1.0
    %v894 = vrcp.pop %v891
    %v895 = vmul.f32 1.0, %v894
    %v896 = vrcp.pop %v892
    %v897 = vmul.f32 1.0, %v896
    %v898 = vrcp.pop %v893
    %v899 = vmul.f32 1.0, %v898
    %v900 = vtanh.pop %v881
    %v901 = vmul.f32 %v897, %v708
    %v902 = vmul.f32 %v895, %v900
    %v903 = vadd.f32 %v901, %v902
    %v904 = vtanh.pop %v903
    %v905 = vmul.f32 %v899, %v904
    %s906 = scalar_lea.vmem [#allocation4], 2
    %v907 = vld [vmem:[%s906] sm:$0x1]
    %908 = vmatprep.subr.bf16.mxu0 %v295
    %909 = vmatpush1.bf16.msra.mxu0 %v294
    %910 = vmatprep.subr.bf16.mxu0 %v299
    %911 = vmatpush1.bf16.msra.mxu0 %v298
    %912 = vmatprep.subr.bf16.mxu0 %v303
    %913 = vmatpush1.bf16.msra.mxu0 %v302
    %914 = vmatprep.subr.bf16.mxu0 %v307
    %915 = vmatpush1.bf16.msra.mxu0 %v306
    %916 = vmatprep.subr.bf16.mxu0 %v311
    %917 = vmatpush1.bf16.msra.mxu0 %v310
    %918 = vmatprep.subr.bf16.mxu0 %v315
    %919 = vmatpush1.bf16.msra.mxu0 %v314
    %920 = vmatprep.subr.bf16.mxu0 %v319
    %921 = vmatpush1.bf16.msra.mxu0 %v318
    %922 = vmatprep.subr.bf16.mxu0 %v323
    %923 = vmatpush1.bf16.msra.mxu0 %v322
    %924 = vmatprep.subr.bf16.mxu0 0
    %925 = vmatpush1.bf16.msra.mxu0 0
    %926 = vmatprep.subr.bf16.mxu0 0
    %927 = vmatpush1.bf16.msra.mxu0 0
    %928 = vmatprep.subr.bf16.mxu0 0
    %929 = vmatpush1.bf16.msra.mxu0 0
    %930 = vmatprep.subr.bf16.mxu0 0
    %931 = vmatpush1.bf16.msra.mxu0 0
    %932 = vmatprep.subr.bf16.mxu0 0
    %933 = vmatpush1.bf16.msra.mxu0 0
    %934 = vmatprep.subr.bf16.mxu0 0
    %935 = vmatpush1.bf16.msra.mxu0 0
    %936 = vmatprep.subr.bf16.mxu0 0
    %937 = vmatpush1.bf16.msra.mxu0 0
    %938 = vmatprep.subr.bf16.mxu0 0
    %939 = vmatpush1.bf16.msra.mxu0 0
    %940 = vmatprep.mubr.bf16.mxu0 0
    %941 = vmatmul.mubr.bf16.gmra.mrb[0].mxu0 %v907
    %v942 = vpop.f32.mrb[0].mxu0
    %v943 = vadd.f32 %v178, %v942
    %v944 = vpop.f32.mrb[0].mxu0
    %v945 = vadd.f32 %v182, %v944
    %v946 = vpop.f32.mrb[0].mxu0
    %v947 = vpop.f32.mrb[0].mxu0
    %948 = vdwg.mxu0
    %949 = vmatprep.subr.bf16.mxu0 %v297
    %950 = vmatpush1.bf16.msra.mxu0 %v296
    %951 = vmatprep.subr.bf16.mxu0 %v301
    %952 = vmatpush1.bf16.msra.mxu0 %v300
    %953 = vmatprep.subr.bf16.mxu0 %v305
    %954 = vmatpush1.bf16.msra.mxu0 %v304
    %955 = vmatprep.subr.bf16.mxu0 %v309
    %956 = vmatpush1.bf16.msra.mxu0 %v308
    %957 = vmatprep.subr.bf16.mxu0 %v313
    %958 = vmatpush1.bf16.msra.mxu0 %v312
    %959 = vmatprep.subr.bf16.mxu0 %v317
    %960 = vmatpush1.bf16.msra.mxu0 %v316
    %961 = vmatprep.subr.bf16.mxu0 %v321
    %962 = vmatpush1.bf16.msra.mxu0 %v320
    %963 = vmatprep.subr.bf16.mxu0 %v325
    %964 = vmatpush1.bf16.msra.mxu0 %v324
    %965 = vmatprep.subr.bf16.mxu0 0
    %966 = vmatpush1.bf16.msra.mxu0 0
    %967 = vmatprep.subr.bf16.mxu0 0
    %968 = vmatpush1.bf16.msra.mxu0 0
    %969 = vmatprep.subr.bf16.mxu0 0
    %970 = vmatpush1.bf16.msra.mxu0 0
    %971 = vmatprep.subr.bf16.mxu0 0
    %972 = vmatpush1.bf16.msra.mxu0 0
    %973 = vmatprep.subr.bf16.mxu0 0
    %974 = vmatpush1.bf16.msra.mxu0 0
    %975 = vmatprep.subr.bf16.mxu0 0
    %976 = vmatpush1.bf16.msra.mxu0 0
    %977 = vmatprep.subr.bf16.mxu0 0
    %978 = vmatpush1.bf16.msra.mxu0 0
    %979 = vmatprep.subr.bf16.mxu0 0
    %980 = vmatpush1.bf16.msra.mxu0 0
    %981 = vmatprep.mubr.bf16.mxu0 0
    %982 = vmatmul.mubr.bf16.gmra.mrb[0].mxu0 %v907
    %v983 = vpop.f32.mrb[0].mxu0
    %v984 = vadd.f32 %v186, %v983
    %v985 = vpop.f32.mrb[0].mxu0
    %v986 = vadd.f32 %v190, %v985
    %v987 = vpop.f32.mrb[0].mxu0
    %v988 = vpop.f32.mrb[0].mxu0
    %989 = vdwg.mxu0
    %v990 = vpack.c.bf16 %v905, %v905
    %991 = vmatprep.subr.bf16.mxu0 %v538
    %992 = vmatpush1.bf16.msra.mxu0 %v537
    %993 = vmatprep.subr.bf16.mxu0 %v542
    %994 = vmatpush1.bf16.msra.mxu0 %v541
    %995 = vmatprep.subr.bf16.mxu0 %v546
    %996 = vmatpush1.bf16.msra.mxu0 %v545
    %997 = vmatprep.subr.bf16.mxu0 %v550
    %998 = vmatpush1.bf16.msra.mxu0 %v549
    %999 = vmatprep.subr.bf16.mxu0 %v554
    %1000 = vmatpush1.bf16.msra.mxu0 %v553
    %1001 = vmatprep.subr.bf16.mxu0 %v558
    %1002 = vmatpush1.bf16.msra.mxu0 %v557
    %1003 = vmatprep.subr.bf16.mxu0 %v562
    %1004 = vmatpush1.bf16.msra.mxu0 %v561
    %1005 = vmatprep.subr.bf16.mxu0 %v566
    %1006 = vmatpush1.bf16.msra.mxu0 %v565
    %1007 = vmatprep.subr.bf16.mxu0 0
    %1008 = vmatpush1.bf16.msra.mxu0 0
    %1009 = vmatprep.subr.bf16.mxu0 0
    %1010 = vmatpush1.bf16.msra.mxu0 0
    %1011 = vmatprep.subr.bf16.mxu0 0
    %1012 = vmatpush1.bf16.msra.mxu0 0
    %1013 = vmatprep.subr.bf16.mxu0 0
    %1014 = vmatpush1.bf16.msra.mxu0 0
    %1015 = vmatprep.subr.bf16.mxu0 0
    %1016 = vmatpush1.bf16.msra.mxu0 0
    %1017 = vmatprep.subr.bf16.mxu0 0
    %1018 = vmatpush1.bf16.msra.mxu0 0
    %1019 = vmatprep.subr.bf16.mxu0 0
    %1020 = vmatpush1.bf16.msra.mxu0 0
    %1021 = vmatprep.subr.bf16.mxu0 0
    %1022 = vmatpush1.bf16.msra.mxu0 0
    %1023 = vmatprep.mubr.bf16.mxu0 0
    %1024 = vmatmul.mubr.bf16.gmra.mrb[0].mxu0 %v990
    %v1025 = vpop.f32.mrb[0].mxu0
    %v1026 = vadd.f32 0.0, %v1025
    %v1027 = vpop.f32.mrb[0].mxu0
    %v1028 = vadd.f32 0.0, %v1027
    %v1029 = vpop.f32.mrb[0].mxu0
    %v1030 = vpop.f32.mrb[0].mxu0
    %1031 = vdwg.mxu0
    %1032 = vmatprep.subr.bf16.mxu0 %v540
    %1033 = vmatpush1.bf16.msra.mxu0 %v539
    %1034 = vmatprep.subr.bf16.mxu0 %v544
    %1035 = vmatpush1.bf16.msra.mxu0 %v543
    %1036 = vmatprep.subr.bf16.mxu0 %v548
    %1037 = vmatpush1.bf16.msra.mxu0 %v547
    %1038 = vmatprep.subr.bf16.mxu0 %v552
    %1039 = vmatpush1.bf16.msra.mxu0 %v551
    %1040 = vmatprep.subr.bf16.mxu0 %v556
    %1041 = vmatpush1.bf16.msra.mxu0 %v555
    %1042 = vmatprep.subr.bf16.mxu0 %v560
    %1043 = vmatpush1.bf16.msra.mxu0 %v559
    %1044 = vmatprep.subr.bf16.mxu0 %v564
    %1045 = vmatpush1.bf16.msra.mxu0 %v563
    %1046 = vmatprep.subr.bf16.mxu0 %v568
    %1047 = vmatpush1.bf16.msra.mxu0 %v567
    %1048 = vmatprep.subr.bf16.mxu0 0
    %1049 = vmatpush1.bf16.msra.mxu0 0
    %1050 = vmatprep.subr.bf16.mxu0 0
    %1051 = vmatpush1.bf16.msra.mxu0 0
    %1052 = vmatprep.subr.bf16.mxu0 0
    %1053 = vmatpush1.bf16.msra.mxu0 0
    %1054 = vmatprep.subr.bf16.mxu0 0
    %1055 = vmatpush1.bf16.msra.mxu0 0
    %1056 = vmatprep.subr.bf16.mxu0 0
    %1057 = vmatpush1.bf16.msra.mxu0 0
    %1058 = vmatprep.subr.bf16.mxu0 0
    %1059 = vmatpush1.bf16.msra.mxu0 0
    %1060 = vmatprep.subr.bf16.mxu0 0
    %1061 = vmatpush1.bf16.msra.mxu0 0
    %1062 = vmatprep.subr.bf16.mxu0 0
    %1063 = vmatpush1.bf16.msra.mxu0 0
    %1064 = vmatprep.mubr.bf16.mxu0 0
    %1065 = vmatmul.mubr.bf16.gmra.mrb[0].mxu0 %v990
    %v1066 = vpop.f32.mrb[0].mxu0
    %v1067 = vadd.f32 0.0, %v1066
    %v1068 = vpop.f32.mrb[0].mxu0
    %v1069 = vadd.f32 0.0, %v1068
    %v1070 = vpop.f32.mrb[0].mxu0
    %v1071 = vpop.f32.mrb[0].mxu0
    %1072 = vdwg.mxu0
    %v1073 = vadd.f32 %v943, %v1026
    %v1074 = vadd.f32 %v945, %v1028
    %v1075 = vadd.f32 %v984, %v1067
    %v1076 = vadd.f32 %v986, %v1069
    %v1077 = vxor.u32 %v1073, 2147483648
    %v1078 = vxor.u32 %v1074, 2147483648
    %v1079 = vxor.u32 %v1075, 2147483648
    %v1080 = vmul.f32 %v1077, 1.442695
    %v1081 = vpow.pop %v1080
    %v1082 = vmul.f32 %v1078, 1.442695
    %v1083 = vpow.pop %v1082
    %v1084 = vmul.f32 %v1079, 1.442695
    %v1085 = vpow.pop %v1084
    %v1086 = vadd.f32 %v1081, 1.0
    %v1087 = vadd.f32 %v1083, 1.0
    %v1088 = vadd.f32 %v1085, 1.0
    %v1089 = vrcp.pop %v1086
    %v1090 = vmul.f32 1.0, %v1089
    %v1091 = vrcp.pop %v1087
    %v1092 = vmul.f32 1.0, %v1091
    %v1093 = vrcp.pop %v1088
    %v1094 = vmul.f32 1.0, %v1093
    %v1095 = vtanh.pop %v1076
    %v1096 = vmul.f32 %v1092, %v903
    %v1097 = vmul.f32 %v1090, %v1095
    %v1098 = vadd.f32 %v1096, %v1097
    %v1099 = vtanh.pop %v1098
    %v1100 = vmul.f32 %v1094, %v1099
    %s1101 = scalar_lea.vmem [#allocation4], 3
    %v1102 = vld [vmem:[%s1101] sm:$0x1]
    %1103 = vmatprep.subr.bf16.mxu0 %v295
    %1104 = vmatpush1.bf16.msra.mxu0 %v294
    %1105 = vmatprep.subr.bf16.mxu0 %v299
    %1106 = vmatpush1.bf16.msra.mxu0 %v298
    %1107 = vmatprep.subr.bf16.mxu0 %v303
    %1108 = vmatpush1.bf16.msra.mxu0 %v302
    %1109 = vmatprep.subr.bf16.mxu0 %v307
    %1110 = vmatpush1.bf16.msra.mxu0 %v306
    %1111 = vmatprep.subr.bf16.mxu0 %v311
    %1112 = vmatpush1.bf16.msra.mxu0 %v310
    %1113 = vmatprep.subr.bf16.mxu0 %v315
    %1114 = vmatpush1.bf16.msra.mxu0 %v314
    %1115 = vmatprep.subr.bf16.mxu0 %v319
    %1116 = vmatpush1.bf16.msra.mxu0 %v318
    %1117 = vmatprep.subr.bf16.mxu0 %v323
    %1118 = vmatpush1.bf16.msra.mxu0 %v322
    %1119 = vmatprep.subr.bf16.mxu0 0
    %1120 = vmatpush1.bf16.msra.mxu0 0
    %1121 = vmatprep.subr.bf16.mxu0 0
    %1122 = vmatpush1.bf16.msra.mxu0 0
    %1123 = vmatprep.subr.bf16.mxu0 0
    %1124 = vmatpush1.bf16.msra.mxu0 0
    %1125 = vmatprep.subr.bf16.mxu0 0
    %1126 = vmatpush1.bf16.msra.mxu0 0
    %1127 = vmatprep.subr.bf16.mxu0 0
    %1128 = vmatpush1.bf16.msra.mxu0 0
    %1129 = vmatprep.subr.bf16.mxu0 0
    %1130 = vmatpush1.bf16.msra.mxu0 0
    %1131 = vmatprep.subr.bf16.mxu0 0
    %1132 = vmatpush1.bf16.msra.mxu0 0
    %1133 = vmatprep.subr.bf16.mxu0 0
    %1134 = vmatpush1.bf16.msra.mxu0 0
    %1135 = vmatprep.mubr.bf16.mxu0 0
    %1136 = vmatmul.mubr.bf16.gmra.mrb[0].mxu0 %v1102
    %v1137 = vpop.f32.mrb[0].mxu0
    %v1138 = vadd.f32 %v178, %v1137
    %v1139 = vpop.f32.mrb[0].mxu0
    %v1140 = vadd.f32 %v182, %v1139
    %v1141 = vpop.f32.mrb[0].mxu0
    %v1142 = vpop.f32.mrb[0].mxu0
    %1143 = vdwg.mxu0
    %1144 = vmatprep.subr.bf16.mxu0 %v297
    %1145 = vmatpush1.bf16.msra.mxu0 %v296
    %1146 = vmatprep.subr.bf16.mxu0 %v301
    %1147 = vmatpush1.bf16.msra.mxu0 %v300
    %1148 = vmatprep.subr.bf16.mxu0 %v305
    %1149 = vmatpush1.bf16.msra.mxu0 %v304
    %1150 = vmatprep.subr.bf16.mxu0 %v309
    %1151 = vmatpush1.bf16.msra.mxu0 %v308
    %1152 = vmatprep.subr.bf16.mxu0 %v313
    %1153 = vmatpush1.bf16.msra.mxu0 %v312
    %1154 = vmatprep.subr.bf16.mxu0 %v317
    %1155 = vmatpush1.bf16.msra.mxu0 %v316
    %1156 = vmatprep.subr.bf16.mxu0 %v321
    %1157 = vmatpush1.bf16.msra.mxu0 %v320
    %1158 = vmatprep.subr.bf16.mxu0 %v325
    %1159 = vmatpush1.bf16.msra.mxu0 %v324
    %1160 = vmatprep.subr.bf16.mxu0 0
    %1161 = vmatpush1.bf16.msra.mxu0 0
    %1162 = vmatprep.subr.bf16.mxu0 0
    %1163 = vmatpush1.bf16.msra.mxu0 0
    %1164 = vmatprep.subr.bf16.mxu0 0
    %1165 = vmatpush1.bf16.msra.mxu0 0
    %1166 = vmatprep.subr.bf16.mxu0 0
    %1167 = vmatpush1.bf16.msra.mxu0 0
    %1168 = vmatprep.subr.bf16.mxu0 0
    %1169 = vmatpush1.bf16.msra.mxu0 0
    %1170 = vmatprep.subr.bf16.mxu0 0
    %1171 = vmatpush1.bf16.msra.mxu0 0
    %1172 = vmatprep.subr.bf16.mxu0 0
    %1173 = vmatpush1.bf16.msra.mxu0 0
    %1174 = vmatprep.subr.bf16.mxu0 0
    %1175 = vmatpush1.bf16.msra.mxu0 0
    %1176 = vmatprep.mubr.bf16.mxu0 0
    %1177 = vmatmul.mubr.bf16.gmra.mrb[0].mxu0 %v1102
    %v1178 = vpop.f32.mrb[0].mxu0
    %v1179 = vadd.f32 %v186, %v1178
    %v1180 = vpop.f32.mrb[0].mxu0
    %v1181 = vadd.f32 %v190, %v1180
    %v1182 = vpop.f32.mrb[0].mxu0
    %v1183 = vpop.f32.mrb[0].mxu0
    %1184 = vdwg.mxu0
    %v1185 = vpack.c.bf16 %v1100, %v1100
    %1186 = vmatprep.subr.bf16.mxu0 %v538
    %1187 = vmatpush1.bf16.msra.mxu0 %v537
    %1188 = vmatprep.subr.bf16.mxu0 %v542
    %1189 = vmatpush1.bf16.msra.mxu0 %v541
    %1190 = vmatprep.subr.bf16.mxu0 %v546
    %1191 = vmatpush1.bf16.msra.mxu0 %v545
    %1192 = vmatprep.subr.bf16.mxu0 %v550
    %1193 = vmatpush1.bf16.msra.mxu0 %v549
    %1194 = vmatprep.subr.bf16.mxu0 %v554
    %1195 = vmatpush1.bf16.msra.mxu0 %v553
    %1196 = vmatprep.subr.bf16.mxu0 %v558
    %1197 = vmatpush1.bf16.msra.mxu0 %v557
    %1198 = vmatprep.subr.bf16.mxu0 %v562
    %1199 = vmatpush1.bf16.msra.mxu0 %v561
    %1200 = vmatprep.subr.bf16.mxu0 %v566
    %1201 = vmatpush1.bf16.msra.mxu0 %v565
    %1202 = vmatprep.subr.bf16.mxu0 0
    %1203 = vmatpush1.bf16.msra.mxu0 0
    %1204 = vmatprep.subr.bf16.mxu0 0
    %1205 = vmatpush1.bf16.msra.mxu0 0
    %1206 = vmatprep.subr.bf16.mxu0 0
    %1207 = vmatpush1.bf16.msra.mxu0 0
    %1208 = vmatprep.subr.bf16.mxu0 0
    %1209 = vmatpush1.bf16.msra.mxu0 0
    %1210 = vmatprep.subr.bf16.mxu0 0
    %1211 = vmatpush1.bf16.msra.mxu0 0
    %1212 = vmatprep.subr.bf16.mxu0 0
    %1213 = vmatpush1.bf16.msra.mxu0 0
    %1214 = vmatprep.subr.bf16.mxu0 0
    %1215 = vmatpush1.bf16.msra.mxu0 0
    %1216 = vmatprep.subr.bf16.mxu0 0
    %1217 = vmatpush1.bf16.msra.mxu0 0
    %1218 = vmatprep.mubr.bf16.mxu0 0
    %1219 = vmatmul.mubr.bf16.gmra.mrb[0].mxu0 %v1185
    %v1220 = vpop.f32.mrb[0].mxu0
    %v1221 = vadd.f32 0.0, %v1220
    %v1222 = vpop.f32.mrb[0].mxu0
    %v1223 = vadd.f32 0.0, %v1222
    %v1224 = vpop.f32.mrb[0].mxu0
    %v1225 = vpop.f32.mrb[0].mxu0
    %1226 = vdwg.mxu0
    %1227 = vmatprep.subr.bf16.mxu0 %v540
    %1228 = vmatpush1.bf16.msra.mxu0 %v539
    %1229 = vmatprep.subr.bf16.mxu0 %v544
    %1230 = vmatpush1.bf16.msra.mxu0 %v543
    %1231 = vmatprep.subr.bf16.mxu0 %v548
    %1232 = vmatpush1.bf16.msra.mxu0 %v547
    %1233 = vmatprep.subr.bf16.mxu0 %v552
    %1234 = vmatpush1.bf16.msra.mxu0 %v551
    %1235 = vmatprep.subr.bf16.mxu0 %v556
    %1236 = vmatpush1.bf16.msra.mxu0 %v555
    %1237 = vmatprep.subr.bf16.mxu0 %v560
    %1238 = vmatpush1.bf16.msra.mxu0 %v559
    %1239 = vmatprep.subr.bf16.mxu0 %v564
    %1240 = vmatpush1.bf16.msra.mxu0 %v563
    %1241 = vmatprep.subr.bf16.mxu0 %v568
    %1242 = vmatpush1.bf16.msra.mxu0 %v567
    %1243 = vmatprep.subr.bf16.mxu0 0
    %1244 = vmatpush1.bf16.msra.mxu0 0
    %1245 = vmatprep.subr.bf16.mxu0 0
    %1246 = vmatpush1.bf16.msra.mxu0 0
    %1247 = vmatprep.subr.bf16.mxu0 0
    %1248 = vmatpush1.bf16.msra.mxu0 0
    %1249 = vmatprep.subr.bf16.mxu0 0
    %1250 = vmatpush1.bf16.msra.mxu0 0
    %1251 = vmatprep.subr.bf16.mxu0 0
    %1252 = vmatpush1.bf16.msra.mxu0 0
    %1253 = vmatprep.subr.bf16.mxu0 0
    %1254 = vmatpush1.bf16.msra.mxu0 0
    %1255 = vmatprep.subr.bf16.mxu0 0
    %1256 = vmatpush1.bf16.msra.mxu0 0
    %1257 = vmatprep.subr.bf16.mxu0 0
    %1258 = vmatpush1.bf16.msra.mxu0 0
    %1259 = vmatprep.mubr.bf16.mxu0 0
    %1260 = vmatmul.mubr.bf16.gmra.mrb[0].mxu0 %v1185
    %v1261 = vpop.f32.mrb[0].mxu0
    %v1262 = vadd.f32 0.0, %v1261
    %v1263 = vpop.f32.mrb[0].mxu0
    %v1264 = vadd.f32 0.0, %v1263
    %v1265 = vpop.f32.mrb[0].mxu0
    %v1266 = vpop.f32.mrb[0].mxu0
    %1267 = vdwg.mxu0
    %v1268 = vadd.f32 %v1138, %v1221
    %v1269 = vadd.f32 %v1140, %v1223
    %v1270 = vadd.f32 %v1179, %v1262
    %v1271 = vadd.f32 %v1181, %v1264
    %v1272 = vxor.u32 %v1268, 2147483648
    %v1273 = vxor.u32 %v1269, 2147483648
    %v1274 = vxor.u32 %v1270, 2147483648
    %v1275 = vmul.f32 %v1272, 1.442695
    %v1276 = vpow.pop %v1275
    %v1277 = vmul.f32 %v1273, 1.442695
    %v1278 = vpow.pop %v1277
    %v1279 = vmul.f32 %v1274, 1.442695
    %v1280 = vpow.pop %v1279
    %v1281 = vadd.f32 %v1276, 1.0
    %v1282 = vadd.f32 %v1278, 1.0
    %v1283 = vadd.f32 %v1280, 1.0
    %v1284 = vrcp.pop %v1281
    %v1285 = vmul.f32 1.0, %v1284
    %v1286 = vrcp.pop %v1282
    %v1287 = vmul.f32 1.0, %v1286
    %v1288 = vrcp.pop %v1283
    %v1289 = vmul.f32 1.0, %v1288
    %v1290 = vtanh.pop %v1271
    %v1291 = vmul.f32 %v1287, %v1098
    %v1292 = vmul.f32 %v1285, %v1290
    %v1293 = vadd.f32 %v1291, %v1292
    %v1294 = vtanh.pop %v1293
    %v1295 = vmul.f32 %v1289, %v1294
    %s1296 = scalar_lea.vmem [#allocation4], 4
    %v1297 = vld [vmem:[%s1296] sm:$0x1]
    %1298 = vmatprep.subr.bf16.mxu0 %v295
    %1299 = vmatpush1.bf16.msra.mxu0 %v294
    %1300 = vmatprep.subr.bf16.mxu0 %v299
    %1301 = vmatpush1.bf16.msra.mxu0 %v298
    %1302 = vmatprep.subr.bf16.mxu0 %v303
    %1303 = vmatpush1.bf16.msra.mxu0 %v302
    %1304 = vmatprep.subr.bf16.mxu0 %v307
    %1305 = vmatpush1.bf16.msra.mxu0 %v306
    %1306 = vmatprep.subr.bf16.mxu0 %v311
    %1307 = vmatpush1.bf16.msra.mxu0 %v310
    %1308 = vmatprep.subr.bf16.mxu0 %v315
    %1309 = vmatpush1.bf16.msra.mxu0 %v314
    %1310 = vmatprep.subr.bf16.mxu0 %v319
    %1311 = vmatpush1.bf16.msra.mxu0 %v318
    %1312 = vmatprep.subr.bf16.mxu0 %v323
    %1313 = vmatpush1.bf16.msra.mxu0 %v322
    %1314 = vmatprep.subr.bf16.mxu0 0
    %1315 = vmatpush1.bf16.msra.mxu0 0
    %1316 = vmatprep.subr.bf16.mxu0 0
    %1317 = vmatpush1.bf16.msra.mxu0 0
    %1318 = vmatprep.subr.bf16.mxu0 0
    %1319 = vmatpush1.bf16.msra.mxu0 0
    %1320 = vmatprep.subr.bf16.mxu0 0
    %1321 = vmatpush1.bf16.msra.mxu0 0
    %1322 = vmatprep.subr.bf16.mxu0 0
    %1323 = vmatpush1.bf16.msra.mxu0 0
    %1324 = vmatprep.subr.bf16.mxu0 0
    %1325 = vmatpush1.bf16.msra.mxu0 0
    %1326 = vmatprep.subr.bf16.mxu0 0
    %1327 = vmatpush1.bf16.msra.mxu0 0
    %1328 = vmatprep.subr.bf16.mxu0 0
    %1329 = vmatpush1.bf16.msra.mxu0 0
    %1330 = vmatprep.mubr.bf16.mxu0 0
    %1331 = vmatmul.mubr.bf16.gmra.mrb[0].mxu0 %v1297
    %v1332 = vpop.f32.mrb[0].mxu0
    %v1333 = vadd.f32 %v178, %v1332
    %v1334 = vpop.f32.mrb[0].mxu0
    %v1335 = vadd.f32 %v182, %v1334
    %v1336 = vpop.f32.mrb[0].mxu0
    %v1337 = vpop.f32.mrb[0].mxu0
    %1338 = vdwg.mxu0
    %1339 = vmatprep.subr.bf16.mxu0 %v297
    %1340 = vmatpush1.bf16.msra.mxu0 %v296
    %1341 = vmatprep.subr.bf16.mxu0 %v301
    %1342 = vmatpush1.bf16.msra.mxu0 %v300
    %1343 = vmatprep.subr.bf16.mxu0 %v305
    %1344 = vmatpush1.bf16.msra.mxu0 %v304
    %1345 = vmatprep.subr.bf16.mxu0 %v309
    %1346 = vmatpush1.bf16.msra.mxu0 %v308
    %1347 = vmatprep.subr.bf16.mxu0 %v313
    %1348 = vmatpush1.bf16.msra.mxu0 %v312
    %1349 = vmatprep.subr.bf16.mxu0 %v317
    %1350 = vmatpush1.bf16.msra.mxu0 %v316
    %1351 = vmatprep.subr.bf16.mxu0 %v321
    %1352 = vmatpush1.bf16.msra.mxu0 %v320
    %1353 = vmatprep.subr.bf16.mxu0 %v325
    %1354 = vmatpush1.bf16.msra.mxu0 %v324
    %1355 = vmatprep.subr.bf16.mxu0 0
    %1356 = vmatpush1.bf16.msra.mxu0 0
    %1357 = vmatprep.subr.bf16.mxu0 0
    %1358 = vmatpush1.bf16.msra.mxu0 0
    %1359 = vmatprep.subr.bf16.mxu0 0
    %1360 = vmatpush1.bf16.msra.mxu0 0
    %1361 = vmatprep.subr.bf16.mxu0 0
    %1362 = vmatpush1.bf16.msra.mxu0 0
    %1363 = vmatprep.subr.bf16.mxu0 0
    %1364 = vmatpush1.bf16.msra.mxu0 0
    %1365 = vmatprep.subr.bf16.mxu0 0
    %1366 = vmatpush1.bf16.msra.mxu0 0
    %1367 = vmatprep.subr.bf16.mxu0 0
    %1368 = vmatpush1.bf16.msra.mxu0 0
    %1369 = vmatprep.subr.bf16.mxu0 0
    %1370 = vmatpush1.bf16.msra.mxu0 0
    %1371 = vmatprep.mubr.bf16.mxu0 0
    %1372 = vmatmul.mubr.bf16.gmra.mrb[0].mxu0 %v1297
    %v1373 = vpop.f32.mrb[0].mxu0
    %v1374 = vadd.f32 %v186, %v1373
    %v1375 = vpop.f32.mrb[0].mxu0
    %v1376 = vadd.f32 %v190, %v1375
    %v1377 = vpop.f32.mrb[0].mxu0
    %v1378 = vpop.f32.mrb[0].mxu0
    %1379 = vdwg.mxu0
    %v1380 = vpack.c.bf16 %v1295, %v1295
    %1381 = vmatprep.subr.bf16.mxu0 %v538
    %1382 = vmatpush1.bf16.msra.mxu0 %v537
    %1383 = vmatprep.subr.bf16.mxu0 %v542
    %1384 = vmatpush1.bf16.msra.mxu0 %v541
    %1385 = vmatprep.subr.bf16.mxu0 %v546
    %1386 = vmatpush1.bf16.msra.mxu0 %v545
    %1387 = vmatprep.subr.bf16.mxu0 %v550
    %1388 = vmatpush1.bf16.msra.mxu0 %v549
    %1389 = vmatprep.subr.bf16.mxu0 %v554
    %1390 = vmatpush1.bf16.msra.mxu0 %v553
    %1391 = vmatprep.subr.bf16.mxu0 %v558
    %1392 = vmatpush1.bf16.msra.mxu0 %v557
    %1393 = vmatprep.subr.bf16.mxu0 %v562
    %1394 = vmatpush1.bf16.msra.mxu0 %v561
    %1395 = vmatprep.subr.bf16.mxu0 %v566
    %1396 = vmatpush1.bf16.msra.mxu0 %v565
    %1397 = vmatprep.subr.bf16.mxu0 0
    %1398 = vmatpush1.bf16.msra.mxu0 0
    %1399 = vmatprep.subr.bf16.mxu0 0
    %1400 = vmatpush1.bf16.msra.mxu0 0
    %1401 = vmatprep.subr.bf16.mxu0 0
    %1402 = vmatpush1.bf16.msra.mxu0 0
    %1403 = vmatprep.subr.bf16.mxu0 0
    %1404 = vmatpush1.bf16.msra.mxu0 0
    %1405 = vmatprep.subr.bf16.mxu0 0
    %1406 = vmatpush1.bf16.msra.mxu0 0
    %1407 = vmatprep.subr.bf16.mxu0 0
    %1408 = vmatpush1.bf16.msra.mxu0 0
    %1409 = vmatprep.subr.bf16.mxu0 0
    %1410 = vmatpush1.bf16.msra.mxu0 0
    %1411 = vmatprep.subr.bf16.mxu0 0
    %1412 = vmatpush1.bf16.msra.mxu0 0
    %1413 = vmatprep.mubr.bf16.mxu0 0
    %1414 = vmatmul.mubr.bf16.gmra.mrb[0].mxu0 %v1380
    %v1415 = vpop.f32.mrb[0].mxu0
    %v1416 = vadd.f32 0.0, %v1415
    %v1417 = vpop.f32.mrb[0].mxu0
    %v1418 = vadd.f32 0.0, %v1417
    %v1419 = vpop.f32.mrb[0].mxu0
    %v1420 = vpop.f32.mrb[0].mxu0
    %1421 = vdwg.mxu0
    %1422 = vmatprep.subr.bf16.mxu0 %v540
    %1423 = vmatpush1.bf16.msra.mxu0 %v539
    %1424 = vmatprep.subr.bf16.mxu0 %v544
    %1425 = vmatpush1.bf16.msra.mxu0 %v543
    %1426 = vmatprep.subr.bf16.mxu0 %v548
    %1427 = vmatpush1.bf16.msra.mxu0 %v547
    %1428 = vmatprep.subr.bf16.mxu0 %v552
    %1429 = vmatpush1.bf16.msra.mxu0 %v551
    %1430 = vmatprep.subr.bf16.mxu0 %v556
    %1431 = vmatpush1.bf16.msra.mxu0 %v555
    %1432 = vmatprep.subr.bf16.mxu0 %v560
    %1433 = vmatpush1.bf16.msra.mxu0 %v559
    %1434 = vmatprep.subr.bf16.mxu0 %v564
    %1435 = vmatpush1.bf16.msra.mxu0 %v563
    %1436 = vmatprep.subr.bf16.mxu0 %v568
    %1437 = vmatpush1.bf16.msra.mxu0 %v567
    %1438 = vmatprep.subr.bf16.mxu0 0
    %1439 = vmatpush1.bf16.msra.mxu0 0
    %1440 = vmatprep.subr.bf16.mxu0 0
    %1441 = vmatpush1.bf16.msra.mxu0 0
    %1442 = vmatprep.subr.bf16.mxu0 0
    %1443 = vmatpush1.bf16.msra.mxu0 0
    %1444 = vmatprep.subr.bf16.mxu0 0
    %1445 = vmatpush1.bf16.msra.mxu0 0
    %1446 = vmatprep.subr.bf16.mxu0 0
    %1447 = vmatpush1.bf16.msra.mxu0 0
    %1448 = vmatprep.subr.bf16.mxu0 0
    %1449 = vmatpush1.bf16.msra.mxu0 0
    %1450 = vmatprep.subr.bf16.mxu0 0
    %1451 = vmatpush1.bf16.msra.mxu0 0
    %1452 = vmatprep.subr.bf16.mxu0 0
    %1453 = vmatpush1.bf16.msra.mxu0 0
    %1454 = vmatprep.mubr.bf16.mxu0 0
    %1455 = vmatmul.mubr.bf16.gmra.mrb[0].mxu0 %v1380
    %v1456 = vpop.f32.mrb[0].mxu0
    %v1457 = vadd.f32 0.0, %v1456
    %v1458 = vpop.f32.mrb[0].mxu0
    %v1459 = vadd.f32 0.0, %v1458
    %v1460 = vpop.f32.mrb[0].mxu0
    %v1461 = vpop.f32.mrb[0].mxu0
    %1462 = vdwg.mxu0
    %v1463 = vadd.f32 %v1333, %v1416
    %v1464 = vadd.f32 %v1335, %v1418
    %v1465 = vadd.f32 %v1374, %v1457
    %v1466 = vadd.f32 %v1376, %v1459
    %v1467 = vxor.u32 %v1463, 2147483648
    %v1468 = vxor.u32 %v1464, 2147483648
    %v1469 = vxor.u32 %v1465, 2147483648
    %v1470 = vmul.f32 %v1467, 1.442695
    %v1471 = vpow.pop %v1470
    %v1472 = vmul.f32 %v1468, 1.442695
    %v1473 = vpow.pop %v1472
    %v1474 = vmul.f32 %v1469, 1.442695
    %v1475 = vpow.pop %v1474
    %v1476 = vadd.f32 %v1471, 1.0
    %v1477 = vadd.f32 %v1473, 1.0
    %v1478 = vadd.f32 %v1475, 1.0
    %v1479 = vrcp.pop %v1476
    %v1480 = vmul.f32 1.0, %v1479
    %v1481 = vrcp.pop %v1477
    %v1482 = vmul.f32 1.0, %v1481
    %v1483 = vrcp.pop %v1478
    %v1484 = vmul.f32 1.0, %v1483
    %v1485 = vtanh.pop %v1466
    %v1486 = vmul.f32 %v1482, %v1293
    %v1487 = vmul.f32 %v1480, %v1485
    %v1488 = vadd.f32 %v1486, %v1487
    %v1489 = vtanh.pop %v1488
    %v1490 = vmul.f32 %v1484, %v1489
    %s1491 = scalar_lea.vmem [#allocation4], 5
    %v1492 = vld [vmem:[%s1491] sm:$0x1]
    %1493 = vmatprep.subr.bf16.mxu0 %v295
    %1494 = vmatpush1.bf16.msra.mxu0 %v294
    %1495 = vmatprep.subr.bf16.mxu0 %v299
    %1496 = vmatpush1.bf16.msra.mxu0 %v298
    %1497 = vmatprep.subr.bf16.mxu0 %v303
    %1498 = vmatpush1.bf16.msra.mxu0 %v302
    %1499 = vmatprep.subr.bf16.mxu0 %v307
    %1500 = vmatpush1.bf16.msra.mxu0 %v306
    %1501 = vmatprep.subr.bf16.mxu0 %v311
    %1502 = vmatpush1.bf16.msra.mxu0 %v310
    %1503 = vmatprep.subr.bf16.mxu0 %v315
    %1504 = vmatpush1.bf16.msra.mxu0 %v314
    %1505 = vmatprep.subr.bf16.mxu0 %v319
    %1506 = vmatpush1.bf16.msra.mxu0 %v318
    %1507 = vmatprep.subr.bf16.mxu0 %v323
    %1508 = vmatpush1.bf16.msra.mxu0 %v322
    %1509 = vmatprep.subr.bf16.mxu0 0
    %1510 = vmatpush1.bf16.msra.mxu0 0
    %1511 = vmatprep.subr.bf16.mxu0 0
    %1512 = vmatpush1.bf16.msra.mxu0 0
    %1513 = vmatprep.subr.bf16.mxu0 0
    %1514 = vmatpush1.bf16.msra.mxu0 0
    %1515 = vmatprep.subr.bf16.mxu0 0
    %1516 = vmatpush1.bf16.msra.mxu0 0
    %1517 = vmatprep.subr.bf16.mxu0 0
    %1518 = vmatpush1.bf16.msra.mxu0 0
    %1519 = vmatprep.subr.bf16.mxu0 0
    %1520 = vmatpush1.bf16.msra.mxu0 0
    %1521 = vmatprep.subr.bf16.mxu0 0
    %1522 = vmatpush1.bf16.msra.mxu0 0
    %1523 = vmatprep.subr.bf16.mxu0 0
    %1524 = vmatpush1.bf16.msra.mxu0 0
    %1525 = vmatprep.mubr.bf16.mxu0 0
    %1526 = vmatmul.mubr.bf16.gmra.mrb[0].mxu0 %v1492
    %v1527 = vpop.f32.mrb[0].mxu0
    %v1528 = vadd.f32 %v178, %v1527
    %v1529 = vpop.f32.mrb[0].mxu0
    %v1530 = vadd.f32 %v182, %v1529
    %v1531 = vpop.f32.mrb[0].mxu0
    %v1532 = vpop.f32.mrb[0].mxu0
    %1533 = vdwg.mxu0
    %1534 = vmatprep.subr.bf16.mxu0 %v297
    %1535 = vmatpush1.bf16.msra.mxu0 %v296
    %1536 = vmatprep.subr.bf16.mxu0 %v301
    %1537 = vmatpush1.bf16.msra.mxu0 %v300
    %1538 = vmatprep.subr.bf16.mxu0 %v305
    %1539 = vmatpush1.bf16.msra.mxu0 %v304
    %1540 = vmatprep.subr.bf16.mxu0 %v309
    %1541 = vmatpush1.bf16.msra.mxu0 %v308
    %1542 = vmatprep.subr.bf16.mxu0 %v313
    %1543 = vmatpush1.bf16.msra.mxu0 %v312
    %1544 = vmatprep.subr.bf16.mxu0 %v317
    %1545 = vmatpush1.bf16.msra.mxu0 %v316
    %1546 = vmatprep.subr.bf16.mxu0 %v321
    %1547 = vmatpush1.bf16.msra.mxu0 %v320
    %1548 = vmatprep.subr.bf16.mxu0 %v325
    %1549 = vmatpush1.bf16.msra.mxu0 %v324
    %1550 = vmatprep.subr.bf16.mxu0 0
    %1551 = vmatpush1.bf16.msra.mxu0 0
    %1552 = vmatprep.subr.bf16.mxu0 0
    %1553 = vmatpush1.bf16.msra.mxu0 0
    %1554 = vmatprep.subr.bf16.mxu0 0
    %1555 = vmatpush1.bf16.msra.mxu0 0
    %1556 = vmatprep.subr.bf16.mxu0 0
    %1557 = vmatpush1.bf16.msra.mxu0 0
    %1558 = vmatprep.subr.bf16.mxu0 0
    %1559 = vmatpush1.bf16.msra.mxu0 0
    %1560 = vmatprep.subr.bf16.mxu0 0
    %1561 = vmatpush1.bf16.msra.mxu0 0
    %1562 = vmatprep.subr.bf16.mxu0 0
    %1563 = vmatpush1.bf16.msra.mxu0 0
    %1564 = vmatprep.subr.bf16.mxu0 0
    %1565 = vmatpush1.bf16.msra.mxu0 0
    %1566 = vmatprep.mubr.bf16.mxu0 0
    %1567 = vmatmul.mubr.bf16.gmra.mrb[0].mxu0 %v1492
    %v1568 = vpop.f32.mrb[0].mxu0
    %v1569 = vadd.f32 %v186, %v1568
    %v1570 = vpop.f32.mrb[0].mxu0
    %v1571 = vadd.f32 %v190, %v1570
    %v1572 = vpop.f32.mrb[0].mxu0
    %v1573 = vpop.f32.mrb[0].mxu0
    %1574 = vdwg.mxu0
    %v1575 = vpack.c.bf16 %v1490, %v1490
    %1576 = vmatprep.subr.bf16.mxu0 %v538
    %1577 = vmatpush1.bf16.msra.mxu0 %v537
    %1578 = vmatprep.subr.bf16.mxu0 %v542
    %1579 = vmatpush1.bf16.msra.mxu0 %v541
    %1580 = vmatprep.subr.bf16.mxu0 %v546
    %1581 = vmatpush1.bf16.msra.mxu0 %v545
    %1582 = vmatprep.subr.bf16.mxu0 %v550
    %1583 = vmatpush1.bf16.msra.mxu0 %v549
    %1584 = vmatprep.subr.bf16.mxu0 %v554
    %1585 = vmatpush1.bf16.msra.mxu0 %v553
    %1586 = vmatprep.subr.bf16.mxu0 %v558
    %1587 = vmatpush1.bf16.msra.mxu0 %v557
    %1588 = vmatprep.subr.bf16.mxu0 %v562
    %1589 = vmatpush1.bf16.msra.mxu0 %v561
    %1590 = vmatprep.subr.bf16.mxu0 %v566
    %1591 = vmatpush1.bf16.msra.mxu0 %v565
    %1592 = vmatprep.subr.bf16.mxu0 0
    %1593 = vmatpush1.bf16.msra.mxu0 0
    %1594 = vmatprep.subr.bf16.mxu0 0
    %1595 = vmatpush1.bf16.msra.mxu0 0
    %1596 = vmatprep.subr.bf16.mxu0 0
    %1597 = vmatpush1.bf16.msra.mxu0 0
    %1598 = vmatprep.subr.bf16.mxu0 0
    %1599 = vmatpush1.bf16.msra.mxu0 0
    %1600 = vmatprep.subr.bf16.mxu0 0
    %1601 = vmatpush1.bf16.msra.mxu0 0
    %1602 = vmatprep.subr.bf16.mxu0 0
    %1603 = vmatpush1.bf16.msra.mxu0 0
    %1604 = vmatprep.subr.bf16.mxu0 0
    %1605 = vmatpush1.bf16.msra.mxu0 0
    %1606 = vmatprep.subr.bf16.mxu0 0
    %1607 = vmatpush1.bf16.msra.mxu0 0
    %1608 = vmatprep.mubr.bf16.mxu0 0
    %1609 = vmatmul.mubr.bf16.gmra.mrb[0].mxu0 %v1575
    %v1610 = vpop.f32.mrb[0].mxu0
    %v1611 = vadd.f32 0.0, %v1610
    %v1612 = vpop.f32.mrb[0].mxu0
    %v1613 = vadd.f32 0.0, %v1612
    %v1614 = vpop.f32.mrb[0].mxu0
    %v1615 = vpop.f32.mrb[0].mxu0
    %1616 = vdwg.mxu0
    %1617 = vmatprep.subr.bf16.mxu0 %v540
    %1618 = vmatpush1.bf16.msra.mxu0 %v539
    %1619 = vmatprep.subr.bf16.mxu0 %v544
    %1620 = vmatpush1.bf16.msra.mxu0 %v543
    %1621 = vmatprep.subr.bf16.mxu0 %v548
    %1622 = vmatpush1.bf16.msra.mxu0 %v547
    %1623 = vmatprep.subr.bf16.mxu0 %v552
    %1624 = vmatpush1.bf16.msra.mxu0 %v551
    %1625 = vmatprep.subr.bf16.mxu0 %v556
    %1626 = vmatpush1.bf16.msra.mxu0 %v555
    %1627 = vmatprep.subr.bf16.mxu0 %v560
    %1628 = vmatpush1.bf16.msra.mxu0 %v559
    %1629 = vmatprep.subr.bf16.mxu0 %v564
    %1630 = vmatpush1.bf16.msra.mxu0 %v563
    %1631 = vmatprep.subr.bf16.mxu0 %v568
    %1632 = vmatpush1.bf16.msra.mxu0 %v567
    %1633 = vmatprep.subr.bf16.mxu0 0
    %1634 = vmatpush1.bf16.msra.mxu0 0
    %1635 = vmatprep.subr.bf16.mxu0 0
    %1636 = vmatpush1.bf16.msra.mxu0 0
    %1637 = vmatprep.subr.bf16.mxu0 0
    %1638 = vmatpush1.bf16.msra.mxu0 0
    %1639 = vmatprep.subr.bf16.mxu0 0
    %1640 = vmatpush1.bf16.msra.mxu0 0
    %1641 = vmatprep.subr.bf16.mxu0 0
    %1642 = vmatpush1.bf16.msra.mxu0 0
    %1643 = vmatprep.subr.bf16.mxu0 0
    %1644 = vmatpush1.bf16.msra.mxu0 0
    %1645 = vmatprep.subr.bf16.mxu0 0
    %1646 = vmatpush1.bf16.msra.mxu0 0
    %1647 = vmatprep.subr.bf16.mxu0 0
    %1648 = vmatpush1.bf16.msra.mxu0 0
    %1649 = vmatprep.mubr.bf16.mxu0 0
    %1650 = vmatmul.mubr.bf16.gmra.mrb[0].mxu0 %v1575
    %v1651 = vpop.f32.mrb[0].mxu0
    %v1652 = vadd.f32 0.0, %v1651
    %v1653 = vpop.f32.mrb[0].mxu0
    %v1654 = vadd.f32 0.0, %v1653
    %v1655 = vpop.f32.mrb[0].mxu0
    %v1656 = vpop.f32.mrb[0].mxu0
    %1657 = vdwg.mxu0
    %v1658 = vadd.f32 %v1528, %v1611
    %v1659 = vadd.f32 %v1530, %v1613
    %v1660 = vadd.f32 %v1569, %v1652
    %v1661 = vadd.f32 %v1571, %v1654
    %v1662 = vxor.u32 %v1658, 2147483648
    %v1663 = vxor.u32 %v1659, 2147483648
    %v1664 = vxor.u32 %v1660, 2147483648
    %v1665 = vmul.f32 %v1662, 1.442695
    %v1666 = vpow.pop %v1665
    %v1667 = vmul.f32 %v1663, 1.442695
    %v1668 = vpow.pop %v1667
    %v1669 = vmul.f32 %v1664, 1.442695
    %v1670 = vpow.pop %v1669
    %v1671 = vadd.f32 %v1666, 1.0
    %v1672 = vadd.f32 %v1668, 1.0
    %v1673 = vadd.f32 %v1670, 1.0
    %v1674 = vrcp.pop %v1671
    %v1675 = vmul.f32 1.0, %v1674
    %v1676 = vrcp.pop %v1672
    %v1677 = vmul.f32 1.0, %v1676
    %v1678 = vrcp.pop %v1673
    %v1679 = vmul.f32 1.0, %v1678
    %v1680 = vtanh.pop %v1661
    %v1681 = vmul.f32 %v1677, %v1488
    %v1682 = vmul.f32 %v1675, %v1680
    %v1683 = vadd.f32 %v1681, %v1682
    %v1684 = vtanh.pop %v1683
    %v1685 = vmul.f32 %v1679, %v1684
    %s1686 = scalar_lea.vmem [#allocation4], 6
    %v1687 = vld [vmem:[%s1686] sm:$0x1]
    %1688 = vmatprep.subr.bf16.mxu0 %v295
    %1689 = vmatpush1.bf16.msra.mxu0 %v294
    %1690 = vmatprep.subr.bf16.mxu0 %v299
    %1691 = vmatpush1.bf16.msra.mxu0 %v298
    %1692 = vmatprep.subr.bf16.mxu0 %v303
    %1693 = vmatpush1.bf16.msra.mxu0 %v302
    %1694 = vmatprep.subr.bf16.mxu0 %v307
    %1695 = vmatpush1.bf16.msra.mxu0 %v306
    %1696 = vmatprep.subr.bf16.mxu0 %v311
    %1697 = vmatpush1.bf16.msra.mxu0 %v310
    %1698 = vmatprep.subr.bf16.mxu0 %v315
    %1699 = vmatpush1.bf16.msra.mxu0 %v314
    %1700 = vmatprep.subr.bf16.mxu0 %v319
    %1701 = vmatpush1.bf16.msra.mxu0 %v318
    %1702 = vmatprep.subr.bf16.mxu0 %v323
    %1703 = vmatpush1.bf16.msra.mxu0 %v322
    %1704 = vmatprep.subr.bf16.mxu0 0
    %1705 = vmatpush1.bf16.msra.mxu0 0
    %1706 = vmatprep.subr.bf16.mxu0 0
    %1707 = vmatpush1.bf16.msra.mxu0 0
    %1708 = vmatprep.subr.bf16.mxu0 0
    %1709 = vmatpush1.bf16.msra.mxu0 0
    %1710 = vmatprep.subr.bf16.mxu0 0
    %1711 = vmatpush1.bf16.msra.mxu0 0
    %1712 = vmatprep.subr.bf16.mxu0 0
    %1713 = vmatpush1.bf16.msra.mxu0 0
    %1714 = vmatprep.subr.bf16.mxu0 0
    %1715 = vmatpush1.bf16.msra.mxu0 0
    %1716 = vmatprep.subr.bf16.mxu0 0
    %1717 = vmatpush1.bf16.msra.mxu0 0
    %1718 = vmatprep.subr.bf16.mxu0 0
    %1719 = vmatpush1.bf16.msra.mxu0 0
    %1720 = vmatprep.mubr.bf16.mxu0 0
    %1721 = vmatmul.mubr.bf16.gmra.mrb[0].mxu0 %v1687
    %v1722 = vpop.f32.mrb[0].mxu0
    %v1723 = vadd.f32 %v178, %v1722
    %v1724 = vpop.f32.mrb[0].mxu0
    %v1725 = vadd.f32 %v182, %v1724
    %v1726 = vpop.f32.mrb[0].mxu0
    %v1727 = vpop.f32.mrb[0].mxu0
    %1728 = vdwg.mxu0
    %1729 = vmatprep.subr.bf16.mxu0 %v297
    %1730 = vmatpush1.bf16.msra.mxu0 %v296
    %1731 = vmatprep.subr.bf16.mxu0 %v301
    %1732 = vmatpush1.bf16.msra.mxu0 %v300
    %1733 = vmatprep.subr.bf16.mxu0 %v305
    %1734 = vmatpush1.bf16.msra.mxu0 %v304
    %1735 = vmatprep.subr.bf16.mxu0 %v309
    %1736 = vmatpush1.bf16.msra.mxu0 %v308
    %1737 = vmatprep.subr.bf16.mxu0 %v313
    %1738 = vmatpush1.bf16.msra.mxu0 %v312
    %1739 = vmatprep.subr.bf16.mxu0 %v317
    %1740 = vmatpush1.bf16.msra.mxu0 %v316
    %1741 = vmatprep.subr.bf16.mxu0 %v321
    %1742 = vmatpush1.bf16.msra.mxu0 %v320
    %1743 = vmatprep.subr.bf16.mxu0 %v325
    %1744 = vmatpush1.bf16.msra.mxu0 %v324
    %1745 = vmatprep.subr.bf16.mxu0 0
    %1746 = vmatpush1.bf16.msra.mxu0 0
    %1747 = vmatprep.subr.bf16.mxu0 0
    %1748 = vmatpush1.bf16.msra.mxu0 0
    %1749 = vmatprep.subr.bf16.mxu0 0
    %1750 = vmatpush1.bf16.msra.mxu0 0
    %1751 = vmatprep.subr.bf16.mxu0 0
    %1752 = vmatpush1.bf16.msra.mxu0 0
    %1753 = vmatprep.subr.bf16.mxu0 0
    %1754 = vmatpush1.bf16.msra.mxu0 0
    %1755 = vmatprep.subr.bf16.mxu0 0
    %1756 = vmatpush1.bf16.msra.mxu0 0
    %1757 = vmatprep.subr.bf16.mxu0 0
    %1758 = vmatpush1.bf16.msra.mxu0 0
    %1759 = vmatprep.subr.bf16.mxu0 0
    %1760 = vmatpush1.bf16.msra.mxu0 0
    %1761 = vmatprep.mubr.bf16.mxu0 0
    %1762 = vmatmul.mubr.bf16.gmra.mrb[0].mxu0 %v1687
    %v1763 = vpop.f32.mrb[0].mxu0
    %v1764 = vadd.f32 %v186, %v1763
    %v1765 = vpop.f32.mrb[0].mxu0
    %v1766 = vadd.f32 %v190, %v1765
    %v1767 = vpop.f32.mrb[0].mxu0
    %v1768 = vpop.f32.mrb[0].mxu0
    %1769 = vdwg.mxu0
    %v1770 = vpack.c.bf16 %v1685, %v1685
    %1771 = vmatprep.subr.bf16.mxu0 %v538
    %1772 = vmatpush1.bf16.msra.mxu0 %v537
    %1773 = vmatprep.subr.bf16.mxu0 %v542
    %1774 = vmatpush1.bf16.msra.mxu0 %v541
    %1775 = vmatprep.subr.bf16.mxu0 %v546
    %1776 = vmatpush1.bf16.msra.mxu0 %v545
    %1777 = vmatprep.subr.bf16.mxu0 %v550
    %1778 = vmatpush1.bf16.msra.mxu0 %v549
    %1779 = vmatprep.subr.bf16.mxu0 %v554
    %1780 = vmatpush1.bf16.msra.mxu0 %v553
    %1781 = vmatprep.subr.bf16.mxu0 %v558
    %1782 = vmatpush1.bf16.msra.mxu0 %v557
    %1783 = vmatprep.subr.bf16.mxu0 %v562
    %1784 = vmatpush1.bf16.msra.mxu0 %v561
    %1785 = vmatprep.subr.bf16.mxu0 %v566
    %1786 = vmatpush1.bf16.msra.mxu0 %v565
    %1787 = vmatprep.subr.bf16.mxu0 0
    %1788 = vmatpush1.bf16.msra.mxu0 0
    %1789 = vmatprep.subr.bf16.mxu0 0
    %1790 = vmatpush1.bf16.msra.mxu0 0
    %1791 = vmatprep.subr.bf16.mxu0 0
    %1792 = vmatpush1.bf16.msra.mxu0 0
    %1793 = vmatprep.subr.bf16.mxu0 0
    %1794 = vmatpush1.bf16.msra.mxu0 0
    %1795 = vmatprep.subr.bf16.mxu0 0
    %1796 = vmatpush1.bf16.msra.mxu0 0
    %1797 = vmatprep.subr.bf16.mxu0 0
    %1798 = vmatpush1.bf16.msra.mxu0 0
    %1799 = vmatprep.subr.bf16.mxu0 0
    %1800 = vmatpush1.bf16.msra.mxu0 0
    %1801 = vmatprep.subr.bf16.mxu0 0
    %1802 = vmatpush1.bf16.msra.mxu0 0
    %1803 = vmatprep.mubr.bf16.mxu0 0
    %1804 = vmatmul.mubr.bf16.gmra.mrb[0].mxu0 %v1770
    %v1805 = vpop.f32.mrb[0].mxu0
    %v1806 = vadd.f32 0.0, %v1805
    %v1807 = vpop.f32.mrb[0].mxu0
    %v1808 = vadd.f32 0.0, %v1807
    %v1809 = vpop.f32.mrb[0].mxu0
    %v1810 = vpop.f32.mrb[0].mxu0
    %1811 = vdwg.mxu0
    %1812 = vmatprep.subr.bf16.mxu0 %v540
    %1813 = vmatpush1.bf16.msra.mxu0 %v539
    %1814 = vmatprep.subr.bf16.mxu0 %v544
    %1815 = vmatpush1.bf16.msra.mxu0 %v543
    %1816 = vmatprep.subr.bf16.mxu0 %v548
    %1817 = vmatpush1.bf16.msra.mxu0 %v547
    %1818 = vmatprep.subr.bf16.mxu0 %v552
    %1819 = vmatpush1.bf16.msra.mxu0 %v551
    %1820 = vmatprep.subr.bf16.mxu0 %v556
    %1821 = vmatpush1.bf16.msra.mxu0 %v555
    %1822 = vmatprep.subr.bf16.mxu0 %v560
    %1823 = vmatpush1.bf16.msra.mxu0 %v559
    %1824 = vmatprep.subr.bf16.mxu0 %v564
    %1825 = vmatpush1.bf16.msra.mxu0 %v563
    %1826 = vmatprep.subr.bf16.mxu0 %v568
    %1827 = vmatpush1.bf16.msra.mxu0 %v567
    %1828 = vmatprep.subr.bf16.mxu0 0
    %1829 = vmatpush1.bf16.msra.mxu0 0
    %1830 = vmatprep.subr.bf16.mxu0 0
    %1831 = vmatpush1.bf16.msra.mxu0 0
    %1832 = vmatprep.subr.bf16.mxu0 0
    %1833 = vmatpush1.bf16.msra.mxu0 0
    %1834 = vmatprep.subr.bf16.mxu0 0
    %1835 = vmatpush1.bf16.msra.mxu0 0
    %1836 = vmatprep.subr.bf16.mxu0 0
    %1837 = vmatpush1.bf16.msra.mxu0 0
    %1838 = vmatprep.subr.bf16.mxu0 0
    %1839 = vmatpush1.bf16.msra.mxu0 0
    %1840 = vmatprep.subr.bf16.mxu0 0
    %1841 = vmatpush1.bf16.msra.mxu0 0
    %1842 = vmatprep.subr.bf16.mxu0 0
    %1843 = vmatpush1.bf16.msra.mxu0 0
    %1844 = vmatprep.mubr.bf16.mxu0 0
    %1845 = vmatmul.mubr.bf16.gmra.mrb[0].mxu0 %v1770
    %v1846 = vpop.f32.mrb[0].mxu0
    %v1847 = vadd.f32 0.0, %v1846
    %v1848 = vpop.f32.mrb[0].mxu0
    %v1849 = vadd.f32 0.0, %v1848
    %v1850 = vpop.f32.mrb[0].mxu0
    %v1851 = vpop.f32.mrb[0].mxu0
    %1852 = vdwg.mxu0
    %v1853 = vadd.f32 %v1723, %v1806
    %v1854 = vadd.f32 %v1725, %v1808
    %v1855 = vadd.f32 %v1764, %v1847
    %v1856 = vadd.f32 %v1766, %v1849
    %v1857 = vxor.u32 %v1853, 2147483648
    %v1858 = vxor.u32 %v1854, 2147483648
    %v1859 = vxor.u32 %v1855, 2147483648
    %v1860 = vmul.f32 %v1857, 1.442695
    %v1861 = vpow.pop %v1860
    %v1862 = vmul.f32 %v1858, 1.442695
    %v1863 = vpow.pop %v1862
    %v1864 = vmul.f32 %v1859, 1.442695
    %v1865 = vpow.pop %v1864
    %v1866 = vadd.f32 %v1861, 1.0
    %v1867 = vadd.f32 %v1863, 1.0
    %v1868 = vadd.f32 %v1865, 1.0
    %v1869 = vrcp.pop %v1866
    %v1870 = vmul.f32 1.0, %v1869
    %v1871 = vrcp.pop %v1867
    %v1872 = vmul.f32 1.0, %v1871
    %v1873 = vrcp.pop %v1868
    %v1874 = vmul.f32 1.0, %v1873
    %v1875 = vtanh.pop %v1856
    %v1876 = vmul.f32 %v1872, %v1683
    %v1877 = vmul.f32 %v1870, %v1875
    %v1878 = vadd.f32 %v1876, %v1877
    %v1879 = vtanh.pop %v1878
    %v1880 = vmul.f32 %v1874, %v1879
    %s1881 = scalar_lea.vmem [#allocation4], 7
    %v1882 = vld [vmem:[%s1881] sm:$0x1]
    %1883 = vmatprep.subr.bf16.mxu0 %v295
    %1884 = vmatpush1.bf16.msra.mxu0 %v294
    %1885 = vmatprep.subr.bf16.mxu0 %v299
    %1886 = vmatpush1.bf16.msra.mxu0 %v298
    %1887 = vmatprep.subr.bf16.mxu0 %v303
    %1888 = vmatpush1.bf16.msra.mxu0 %v302
    %1889 = vmatprep.subr.bf16.mxu0 %v307
    %1890 = vmatpush1.bf16.msra.mxu0 %v306
    %1891 = vmatprep.subr.bf16.mxu0 %v311
    %1892 = vmatpush1.bf16.msra.mxu0 %v310
    %1893 = vmatprep.subr.bf16.mxu0 %v315
    %1894 = vmatpush1.bf16.msra.mxu0 %v314
    %1895 = vmatprep.subr.bf16.mxu0 %v319
    %1896 = vmatpush1.bf16.msra.mxu0 %v318
    %1897 = vmatprep.subr.bf16.mxu0 %v323
    %1898 = vmatpush1.bf16.msra.mxu0 %v322
    %1899 = vmatprep.subr.bf16.mxu0 0
    %1900 = vmatpush1.bf16.msra.mxu0 0
    %1901 = vmatprep.subr.bf16.mxu0 0
    %1902 = vmatpush1.bf16.msra.mxu0 0
    %1903 = vmatprep.subr.bf16.mxu0 0
    %1904 = vmatpush1.bf16.msra.mxu0 0
    %1905 = vmatprep.subr.bf16.mxu0 0
    %1906 = vmatpush1.bf16.msra.mxu0 0
    %1907 = vmatprep.subr.bf16.mxu0 0
    %1908 = vmatpush1.bf16.msra.mxu0 0
    %1909 = vmatprep.subr.bf16.mxu0 0
    %1910 = vmatpush1.bf16.msra.mxu0 0
    %1911 = vmatprep.subr.bf16.mxu0 0
    %1912 = vmatpush1.bf16.msra.mxu0 0
    %1913 = vmatprep.subr.bf16.mxu0 0
    %1914 = vmatpush1.bf16.msra.mxu0 0
    %1915 = vmatprep.mubr.bf16.mxu0 0
    %1916 = vmatmul.mubr.bf16.gmra.mrb[0].mxu0 %v1882
    %v1917 = vpop.f32.mrb[0].mxu0
    %v1918 = vadd.f32 %v178, %v1917
    %v1919 = vpop.f32.mrb[0].mxu0
    %v1920 = vadd.f32 %v182, %v1919
    %v1921 = vpop.f32.mrb[0].mxu0
    %v1922 = vpop.f32.mrb[0].mxu0
    %1923 = vdwg.mxu0
    %1924 = vmatprep.subr.bf16.mxu0 %v297
    %1925 = vmatpush1.bf16.msra.mxu0 %v296
    %1926 = vmatprep.subr.bf16.mxu0 %v301
    %1927 = vmatpush1.bf16.msra.mxu0 %v300
    %1928 = vmatprep.subr.bf16.mxu0 %v305
    %1929 = vmatpush1.bf16.msra.mxu0 %v304
    %1930 = vmatprep.subr.bf16.mxu0 %v309
    %1931 = vmatpush1.bf16.msra.mxu0 %v308
    %1932 = vmatprep.subr.bf16.mxu0 %v313
    %1933 = vmatpush1.bf16.msra.mxu0 %v312
    %1934 = vmatprep.subr.bf16.mxu0 %v317
    %1935 = vmatpush1.bf16.msra.mxu0 %v316
    %1936 = vmatprep.subr.bf16.mxu0 %v321
    %1937 = vmatpush1.bf16.msra.mxu0 %v320
    %1938 = vmatprep.subr.bf16.mxu0 %v325
    %1939 = vmatpush1.bf16.msra.mxu0 %v324
    %1940 = vmatprep.subr.bf16.mxu0 0
    %1941 = vmatpush1.bf16.msra.mxu0 0
    %1942 = vmatprep.subr.bf16.mxu0 0
    %1943 = vmatpush1.bf16.msra.mxu0 0
    %1944 = vmatprep.subr.bf16.mxu0 0
    %1945 = vmatpush1.bf16.msra.mxu0 0
    %1946 = vmatprep.subr.bf16.mxu0 0
    %1947 = vmatpush1.bf16.msra.mxu0 0
    %1948 = vmatprep.subr.bf16.mxu0 0
    %1949 = vmatpush1.bf16.msra.mxu0 0
    %1950 = vmatprep.subr.bf16.mxu0 0
    %1951 = vmatpush1.bf16.msra.mxu0 0
    %1952 = vmatprep.subr.bf16.mxu0 0
    %1953 = vmatpush1.bf16.msra.mxu0 0
    %1954 = vmatprep.subr.bf16.mxu0 0
    %1955 = vmatpush1.bf16.msra.mxu0 0
    %1956 = vmatprep.mubr.bf16.mxu0 0
    %1957 = vmatmul.mubr.bf16.gmra.mrb[0].mxu0 %v1882
    %v1958 = vpop.f32.mrb[0].mxu0
    %v1959 = vadd.f32 %v186, %v1958
    %v1960 = vpop.f32.mrb[0].mxu0
    %v1961 = vadd.f32 %v190, %v1960
    %v1962 = vpop.f32.mrb[0].mxu0
    %v1963 = vpop.f32.mrb[0].mxu0
    %1964 = vdwg.mxu0
    %v1965 = vpack.c.bf16 %v1880, %v1880
    %1966 = vmatprep.subr.bf16.mxu0 %v538
    %1967 = vmatpush1.bf16.msra.mxu0 %v537
    %1968 = vmatprep.subr.bf16.mxu0 %v542
    %1969 = vmatpush1.bf16.msra.mxu0 %v541
    %1970 = vmatprep.subr.bf16.mxu0 %v546
    %1971 = vmatpush1.bf16.msra.mxu0 %v545
    %1972 = vmatprep.subr.bf16.mxu0 %v550
    %1973 = vmatpush1.bf16.msra.mxu0 %v549
    %1974 = vmatprep.subr.bf16.mxu0 %v554
    %1975 = vmatpush1.bf16.msra.mxu0 %v553
    %1976 = vmatprep.subr.bf16.mxu0 %v558
    %1977 = vmatpush1.bf16.msra.mxu0 %v557
    %1978 = vmatprep.subr.bf16.mxu0 %v562
    %1979 = vmatpush1.bf16.msra.mxu0 %v561
    %1980 = vmatprep.subr.bf16.mxu0 %v566
    %1981 = vmatpush1.bf16.msra.mxu0 %v565
    %1982 = vmatprep.subr.bf16.mxu0 0
    %1983 = vmatpush1.bf16.msra.mxu0 0
    %1984 = vmatprep.subr.bf16.mxu0 0
    %1985 = vmatpush1.bf16.msra.mxu0 0
    %1986 = vmatprep.subr.bf16.mxu0 0
    %1987 = vmatpush1.bf16.msra.mxu0 0
    %1988 = vmatprep.subr.bf16.mxu0 0
    %1989 = vmatpush1.bf16.msra.mxu0 0
    %1990 = vmatprep.subr.bf16.mxu0 0
    %1991 = vmatpush1.bf16.msra.mxu0 0
    %1992 = vmatprep.subr.bf16.mxu0 0
    %1993 = vmatpush1.bf16.msra.mxu0 0
    %1994 = vmatprep.subr.bf16.mxu0 0
    %1995 = vmatpush1.bf16.msra.mxu0 0
    %1996 = vmatprep.subr.bf16.mxu0 0
    %1997 = vmatpush1.bf16.msra.mxu0 0
    %1998 = vmatprep.mubr.bf16.mxu0 0
    %1999 = vmatmul.mubr.bf16.gmra.mrb[0].mxu0 %v1965
    %v2000 = vpop.f32.mrb[0].mxu0
    %v2001 = vadd.f32 0.0, %v2000
    %v2002 = vpop.f32.mrb[0].mxu0
    %v2003 = vadd.f32 0.0, %v2002
    %v2004 = vpop.f32.mrb[0].mxu0
    %v2005 = vpop.f32.mrb[0].mxu0
    %2006 = vdwg.mxu0
    %2007 = vmatprep.subr.bf16.mxu0 %v540
    %2008 = vmatpush1.bf16.msra.mxu0 %v539
    %2009 = vmatprep.subr.bf16.mxu0 %v544
    %2010 = vmatpush1.bf16.msra.mxu0 %v543
    %2011 = vmatprep.subr.bf16.mxu0 %v548
    %2012 = vmatpush1.bf16.msra.mxu0 %v547
    %2013 = vmatprep.subr.bf16.mxu0 %v552
    %2014 = vmatpush1.bf16.msra.mxu0 %v551
    %2015 = vmatprep.subr.bf16.mxu0 %v556
    %2016 = vmatpush1.bf16.msra.mxu0 %v555
    %2017 = vmatprep.subr.bf16.mxu0 %v560
    %2018 = vmatpush1.bf16.msra.mxu0 %v559
    %2019 = vmatprep.subr.bf16.mxu0 %v564
    %2020 = vmatpush1.bf16.msra.mxu0 %v563
    %2021 = vmatprep.subr.bf16.mxu0 %v568
    %2022 = vmatpush1.bf16.msra.mxu0 %v567
    %2023 = vmatprep.subr.bf16.mxu0 0
    %2024 = vmatpush1.bf16.msra.mxu0 0
    %2025 = vmatprep.subr.bf16.mxu0 0
    %2026 = vmatpush1.bf16.msra.mxu0 0
    %2027 = vmatprep.subr.bf16.mxu0 0
    %2028 = vmatpush1.bf16.msra.mxu0 0
    %2029 = vmatprep.subr.bf16.mxu0 0
    %2030 = vmatpush1.bf16.msra.mxu0 0
    %2031 = vmatprep.subr.bf16.mxu0 0
    %2032 = vmatpush1.bf16.msra.mxu0 0
    %2033 = vmatprep.subr.bf16.mxu0 0
    %2034 = vmatpush1.bf16.msra.mxu0 0
    %2035 = vmatprep.subr.bf16.mxu0 0
    %2036 = vmatpush1.bf16.msra.mxu0 0
    %2037 = vmatprep.subr.bf16.mxu0 0
    %2038 = vmatpush1.bf16.msra.mxu0 0
    %2039 = vmatprep.mubr.bf16.mxu0 0
    %2040 = vmatmul.mubr.bf16.gmra.mrb[0].mxu0 %v1965
    %v2041 = vpop.f32.mrb[0].mxu0
    %v2042 = vadd.f32 0.0, %v2041
    %v2043 = vpop.f32.mrb[0].mxu0
    %v2044 = vadd.f32 0.0, %v2043
    %v2045 = vpop.f32.mrb[0].mxu0
    %v2046 = vpop.f32.mrb[0].mxu0
    %2047 = vdwg.mxu0
    %v2048 = vadd.f32 %v1918, %v2001
    %v2049 = vadd.f32 %v1920, %v2003
    %v2050 = vadd.f32 %v1959, %v2042
    %v2051 = vadd.f32 %v1961, %v2044
    %v2052 = vxor.u32 %v2048, 2147483648
    %v2053 = vxor.u32 %v2049, 2147483648
    %v2054 = vxor.u32 %v2050, 2147483648
    %v2055 = vmul.f32 %v2052, 1.442695
    %v2056 = vpow.pop %v2055
    %v2057 = vmul.f32 %v2053, 1.442695
    %v2058 = vpow.pop %v2057
    %v2059 = vmul.f32 %v2054, 1.442695
    %v2060 = vpow.pop %v2059
    %v2061 = vadd.f32 %v2056, 1.0
    %v2062 = vadd.f32 %v2058, 1.0
    %v2063 = vadd.f32 %v2060, 1.0
    %v2064 = vrcp.pop %v2061
    %v2065 = vmul.f32 1.0, %v2064
    %v2066 = vrcp.pop %v2062
    %v2067 = vmul.f32 1.0, %v2066
    %v2068 = vrcp.pop %v2063
    %v2069 = vmul.f32 1.0, %v2068
    %v2070 = vtanh.pop %v2051
    %v2071 = vmul.f32 %v2067, %v1878
    %v2072 = vmul.f32 %v2065, %v2070
    %v2073 = vadd.f32 %v2071, %v2072
    %v2074 = vtanh.pop %v2073
    %v2075 = vmul.f32 %v2069, %v2074
    %2076 = vst [vmem:[#allocation2] sm:$0x3] %v2075
    %2077 = vst [vmem:[#allocation3] sm:$0x3] %v2073
    // Predicated region
    $region54: #{rnn_model_forward.3} parent=1 // pred_check
      %p2078 = pneg %p103
    $region55: #{rnn_model_forward.3} parent=1 // pred_check_branch
      %2080 = sbr.rel (%p2078) target = $region57
    $region56: #{rnn_model_forward.3} parent=1 // pred_region
      %v2081 = vpack.c.bf16 %v2075, %v2075
      %v2082 = vld [vmem:[#allocation12] sm:$0xf]
      %v2083 = vld [vmem:[#allocation12 + $0x4] sm:$0xf]
      %v2084 = vld [vmem:[#allocation12 + $0x8] sm:$0xf]
      %v2085 = vld [vmem:[#allocation12 + $0xc] sm:$0xf]
      %v2086 = vld [vmem:[#allocation12 + $0x10] sm:$0xf]
      %v2087 = vld [vmem:[#allocation12 + $0x14] sm:$0xf]
      %v2088 = vld [vmem:[#allocation12 + $0x18] sm:$0xf]
      %v2089 = vld [vmem:[#allocation12 + $0x1c] sm:$0xf]
      %v2090 = vld [vmem:[#allocation12 + $0x20] sm:$0xf]
      %v2091 = vld [vmem:[#allocation12 + $0x24] sm:$0xf]
      %v2092 = vld [vmem:[#allocation12 + $0x28] sm:$0xf]
      %v2093 = vld [vmem:[#allocation12 + $0x2c] sm:$0xf]
      %v2094 = vld [vmem:[#allocation12 + $0x30] sm:$0xf]
      %v2095 = vld [vmem:[#allocation12 + $0x34] sm:$0xf]
      %v2096 = vld [vmem:[#allocation12 + $0x38] sm:$0xf]
      %v2097 = vld [vmem:[#allocation12 + $0x3c] sm:$0xf]
      %v2098 = vld [vmem:[#allocation13] sm:$0x1]
      %v2100 = vlaneseq
      %v2101 = vshrl.u32 %v2100, 7
      %v2102 = vsub.s32 0, %v2101
      %v2103 = vrot.slane %v2098, %v2102
      %v2121 = vunpack.c.l.b16 %v2082
      %v2122 = vunpack.c.l.b16 %v2083
      %v2123 = vunpack.c.l.b16 %v2084
      %v2124 = vunpack.c.l.b16 %v2085
      %v2125 = vunpack.c.l.b16 %v2086
      %v2126 = vunpack.c.l.b16 %v2087
      %v2127 = vunpack.c.l.b16 %v2088
      %v2128 = vunpack.c.l.b16 %v2089
      %v2129 = vunpack.c.l.b16 %v2090
      %v2130 = vunpack.c.l.b16 %v2091
      %v2131 = vunpack.c.l.b16 %v2092
      %v2132 = vunpack.c.l.b16 %v2093
      %v2133 = vunpack.c.l.b16 %v2094
      %v2134 = vunpack.c.l.b16 %v2095
      %v2135 = vunpack.c.l.b16 %v2096
      %v2136 = vunpack.c.l.b16 %v2097
      %v2137 = vpack.c.b16 %v2122, %v2121
      %v2138 = vpack.c.b16 %v2124, %v2123
      %v2139 = vpack.c.b16 %v2126, %v2125
      %v2140 = vpack.c.b16 %v2128, %v2127
      %v2141 = vpack.c.b16 %v2130, %v2129
      %v2142 = vpack.c.b16 %v2132, %v2131
      %v2143 = vpack.c.b16 %v2134, %v2133
      %v2144 = vpack.c.b16 %v2136, %v2135
      %2153 = vmatprep.subr.bf16.mxu0 0
      %2154 = vmatpush1.bf16.msra.mxu0 %v2137
      %2155 = vmatprep.subr.bf16.mxu0 0
      %2156 = vmatpush1.bf16.msra.mxu0 %v2138
      %2157 = vmatprep.subr.bf16.mxu0 0
      %2158 = vmatpush1.bf16.msra.mxu0 %v2139
      %2159 = vmatprep.subr.bf16.mxu0 0
      %2160 = vmatpush1.bf16.msra.mxu0 %v2140
      %2161 = vmatprep.subr.bf16.mxu0 0
      %2162 = vmatpush1.bf16.msra.mxu0 %v2141
      %2163 = vmatprep.subr.bf16.mxu0 0
      %2164 = vmatpush1.bf16.msra.mxu0 %v2142
      %2165 = vmatprep.subr.bf16.mxu0 0
      %2166 = vmatpush1.bf16.msra.mxu0 %v2143
      %2167 = vmatprep.subr.bf16.mxu0 0
      %2168 = vmatpush1.bf16.msra.mxu0 %v2144
      %2169 = vmatprep.subr.bf16.mxu0 0
      %2170 = vmatpush1.bf16.msra.mxu0 0
      %2171 = vmatprep.subr.bf16.mxu0 0
      %2172 = vmatpush1.bf16.msra.mxu0 0
      %2173 = vmatprep.subr.bf16.mxu0 0
      %2174 = vmatpush1.bf16.msra.mxu0 0
      %2175 = vmatprep.subr.bf16.mxu0 0
      %2176 = vmatpush1.bf16.msra.mxu0 0
      %2177 = vmatprep.subr.bf16.mxu0 0
      %2178 = vmatpush1.bf16.msra.mxu0 0
      %2179 = vmatprep.subr.bf16.mxu0 0
      %2180 = vmatpush1.bf16.msra.mxu0 0
      %2181 = vmatprep.subr.bf16.mxu0 0
      %2182 = vmatpush1.bf16.msra.mxu0 0
      %2183 = vmatprep.subr.bf16.mxu0 0
      %2184 = vmatpush1.bf16.msra.mxu0 0
      %2185 = vmatprep.mubr.bf16.mxu0 0
      %2186 = vmatmul.mubr.bf16.gmra.mrb[0].mxu0 %v2081
      %v2187 = vpop.f32.mrb[0].mxu0
      %v2188 = vadd.f32 %v2103, %v2187
      %v2189 = vpop.f32.mrb[0].mxu0
      %v2190 = vpop.f32.mrb[0].mxu0
      %v2191 = vpop.f32.mrb[0].mxu0
      %2192 = vdwg.mxu0
      %2193 = vst [vmem:[#allocation15] sm:$0x3] %v2188
    $region57: #{rnn_model_forward.3} parent=1 // pred_fallthru
      _
    // Predicated region
    $region58: #{rnn_model_forward.3} parent=1 // pred_check
      _
    $region59: #{rnn_model_forward.3} parent=1 // pred_check_branch
      %2195 = sbr.rel (0) target = $region61
    $region60: #{rnn_model_forward.3} parent=1 // pred_region
      %s2197 = ssub.s32 32, 32
      %2198 = vsyncadd [#allocation6], %s2197
      %s2200 = sshll.u32 [#allocation15], 4
      %s2201 = int_to_ptr.vmem [resolvable:$true] %s2200
      %2203 = dma.vmem_to_hbm [thread:$0]  %s2201, 32, %s6, [#allocation6]
    $region61: #{rnn_model_forward.3} parent=1 // pred_fallthru
      _
    // Predicated region
    $region62: #{rnn_model_forward.3} parent=1 // pred_check
      _
    $region63: #{rnn_model_forward.3} parent=1 // pred_check_branch
      %2205 = sbr.rel (0) target = $region65
    $region64: #{rnn_model_forward.3} parent=1 // pred_region
      %2206 = dma.done [#allocation6], 32
    $region65: #{rnn_model_forward.3} parent=1 // pred_fallthru
      _
    %2207 = vsyncpa [#allocation5], 1
    %2208 = vsyncpa [#allocation8], 1
    %2209 = vsyncpa [#allocation11], 1
    %2210 = vsyncpa [#allocation14], 1
    %2211 = vsyncpa [#allocation6], 1

</llo_original>
